<compile_context>
chip_gen: v7x
topology: tpu7x:2x2x1
jax: 0.10.0
libtpu: 0.0.40
codegen_flags: <defaults>
</compile_context>

<pallas_src>
import functools

import jax
import jax.numpy as jnp
from jax.experimental import pallas as pl
from jax.experimental.pallas import tpu as pltpu

EPS_INNER = 1e-3   # BasicConv1d BatchNorm1d eps
EPS_OUTER = 1e-5   # outer BatchNorm1d default eps
_NEG = -1e30       # stand-in for -inf padding of the maxpool
_GROUP = 8         # conv taps fused per MXU contraction (K = _GROUP * Cb = 256)


def _conv1x1(x_tile, w_ref):
    """1x1 conv: (R, C_in) @ (C_in, C_out) -> (R, C_out) f32.

    Small C_in -> VPU broadcast-FMAs (the MXU slot is the saturated one); otherwise a
    bf16 MXU matmul with f32 accumulation.
    """
    c_in = w_ref.shape[0]
    if c_in <= 8:
        w = w_ref[...]
        acc = x_tile[:, 0:1] * w[0:1, :]
        for ci in range(1, c_in):
            acc = acc + x_tile[:, ci:ci + 1] * w[ci:ci + 1, :]
        return acc
    return jnp.dot(x_tile.astype(jnp.bfloat16), w_ref[...].astype(jnp.bfloat16),
                   preferred_element_type=jnp.float32)


def _branch_tile(xp_ref, xm_ref, wb_ref, wg_ref, wm_ref, t, *, tl, taps_pad, group):
    """Pre-BN branch outputs for one (sample, L-tile): (tl, C) f32.

    cols [0, n_conv*Cf)  : 'same' convolutions of the bottleneck output
    cols [n_conv*Cf, C)  : conv1x1(maxpool3(x))   (wm is zero elsewhere)
    """
    win = tl + taps_pad
    n_groups = wg_ref.shape[0]
    start = pl.multiple_of(t * tl, 8)

    # Bottleneck 1x1 conv over the halo window.  Zero-padded x => zero-padded y0, which is
    # exactly the 'same' zero padding the branch convolutions need.
    xw = xp_ref[pl.ds(start, win), :]
    y0 = _conv1x1(xw, wb_ref)                                   # (win, Cb) f32

    # Fold `group` shifted copies of y0 onto the channel axis ONCE, cast to bf16 once, then
    # run the 'same' convolutions as a few full-depth (K = group*Cb) MXU contractions whose
    # LHS operands are sublane-aligned row slices of the folded tensor.
    rf = win - group
    yf = jnp.concatenate([y0[j:j + rf, :] for j in range(group)],
                         axis=1).astype(jnp.bfloat16)           # (rf, group*Cb) bf16
    acc = jnp.dot(yf[0:tl, :], wg_ref[0], preferred_element_type=jnp.float32)
    for g in range(1, n_groups):
        acc = acc + jnp.dot(yf[g * group:g * group + tl, :], wg_ref[g],
                            preferred_element_type=jnp.float32)

    # MaxPool1d(k=3, s=1, p=1) on the original input (-inf padding), then 1x1 conv.  The
    # maxpool weight is already laid out on the full C lanes (zeros outside the last Cf),
    # so its contribution is a plain add into the accumulator.
    xmw = xm_ref[pl.ds(start, tl + 8), :]
    m = jnp.maximum(jnp.maximum(xmw[0:tl, :], xmw[1:tl + 1, :]), xmw[2:tl + 2, :])
    return acc + _conv1x1(m, wm_ref)


def _stats_kernel(xp_ref, xm_ref, wb_ref, wg_ref, wm_ref, z_ref, stats_ref,
                  *, tl, taps_pad, group, seq_len):
    """Phase 1: pre-BN tile to HBM + per-sample per-channel sum / sum-of-squares."""
    t = pl.program_id(1)

    @pl.when(t == 0)
    def _init():
        stats_ref[...] = jnp.zeros_like(stats_ref)

    z = _branch_tile(xp_ref, xm_ref, wb_ref, wg_ref, wm_ref, t,
                     tl=tl, taps_pad=taps_pad, group=group)
    # Mask rows past the true sequence length: exact batch statistics AND no -1e30 garbage
    # from the maxpool padding ever reaches HBM.
    row = t * tl + jax.lax.broadcasted_iota(jnp.int32, (tl, 1), 0)
    z = jnp.where(row < seq_len, z, 0.0)

    z_ref[...] = z
    stats_ref[...] += jnp.concatenate(
        [jnp.sum(z, axis=0, keepdims=True),
         jnp.sum(z * z, axis=0, keepdims=True)], axis=0)


def _apply_kernel(z_ref, scale_ref, offset_ref, out_ref):
    """Phase 2: folded BN affine + ReLU + fused NLC->NCL transpose (XLU slot)."""
    y = jnp.maximum(z_ref[...] * scale_ref[...] + offset_ref[...], 0.0)
    out_ref[...] = y.T


@functools.partial(jax.jit, static_argnames=("block_l",))
def inception_forward(x, w_bottleneck, w_convs, w_mpconv,
                      bn1_gammas, bn2_gamma, bn2_beta, *, block_l=512):
    """Inception forward.

    x:            (N, C_in, L) f32            -- PyTorch NCL layout
    w_bottleneck: (Cb, C_in, 1) f32
    w_convs:      tuple of (Cf, Cb, K_i) f32  -- odd K_i, padding='same'
    w_mpconv:     (Cf, C_in, 1) f32
    bn1_gammas:   tuple of (Cf,) f32          -- BasicConv1d BN weights (betas cancel exactly)
    bn2_gamma/bn2_beta: (Cf*(n_conv+1),) f32  -- outer BN affine
    returns:      (N, Cf*(n_conv+1), L) f32   -- NCL
    """
    N, C_in, L = x.shape
    Cb = w_bottleneck.shape[0]
    Cf = w_convs[0].shape[0]
    nb = len(w_convs)
    C = Cf * (nb + 1)
    c_inner = Cf * nb

    radii = [(w.shape[2] - 1) // 2 for w in w_convs]
    max_r = max(radii)
    G = _GROUP
    taps_pad = -(-(2 * max_r + 1) // G) * G       # taps rounded up to the group size
    ng = taps_pad // G

    # L tiling (rows = sublanes): one tile if it fits, else multiples of 128 so the
    # transposed (C, tl) output blocks stay lane-dense.
    l_r = -(-L // 8) * 8
    if l_r <= block_l:
        tl = l_r
    else:
        tl = max(128, (block_l // 128) * 128)
    n_lt = -(-L // tl)
    l_pad = n_lt * tl
    win = tl + taps_pad

    # --- glue: layout + padding (NCL -> NLC, channel-last) ---
    x_nlc = jnp.transpose(x, (0, 2, 1)).astype(jnp.float32)                   # (N, L, C_in)
    lxp = l_pad + taps_pad
    xp = jnp.pad(x_nlc, ((0, 0), (max_r, lxp - max_r - L), (0, 0)))           # zero pad
    lxm = l_pad + 8
    xm = jnp.pad(x_nlc, ((0, 0), (1, lxm - 1 - L), (0, 0)),
                 constant_values=_NEG)                                        # -inf pad

    # --- glue: weight re-layout (channel-last; taps grouped to K = G*Cb; bf16 for the MXU) --
    wb = jnp.transpose(w_bottleneck[:, :, 0], (1, 0)).astype(jnp.float32)     # (C_in, Cb)
    w_all = jnp.zeros((taps_pad, Cb, C), jnp.float32)
    for i, w in enumerate(w_convs):
        r = radii[i]
        w_all = w_all.at[max_r - r:max_r + r + 1, :, Cf * i:Cf * (i + 1)].set(
            jnp.transpose(w, (2, 1, 0)))
    w_grp = w_all.reshape(ng, G * Cb, C).astype(jnp.bfloat16)                 # (ng, G*Cb, C)
    wm = jnp.zeros((C_in, C), jnp.float32).at[:, c_inner:].set(
        jnp.transpose(w_mpconv[:, :, 0], (1, 0)))                             # (C_in, C)

    grid = (N, n_lt)
    # TODO(synk): xp/xm are whole-sample blocks (fine while C_in*L is small); switch to an
    # L-tiled halo window (manual DMA from a pl.ANY ref) before this hits v7x's 64 MiB VMEM.
    data_specs = [
        pl.BlockSpec((None, lxp, C_in), lambda n, t: (n, 0, 0)),   # zero-padded x
        pl.BlockSpec((None, lxm, C_in), lambda n, t: (n, 0, 0)),   # -inf-padded x (maxpool)
        pl.BlockSpec((C_in, Cb), lambda n, t: (0, 0)),             # bottleneck weight
        pl.BlockSpec((ng, G * Cb, C), lambda n, t: (0, 0, 0)),     # grouped branch weights
        pl.BlockSpec((C_in, C), lambda n, t: (0, 0)),              # maxpool-conv weight
    ]

    flops1 = (2 * N * n_lt * win * C_in * Cb
              + 2 * N * n_lt * tl * taps_pad * Cb * C
              + 2 * N * n_lt * tl * C_in * C)
    bytes1 = ((xp.size + xm.size + wb.size + wm.size) * 4 + w_grp.size * 2
              + N * l_pad * C * 4 + N * 2 * C * 4)

    # Phase 1: pre-BN activations + exact per-sample batch-stat partials (megacore over N).
    z_pre, partials = pl.pallas_call(
        functools.partial(_stats_kernel, tl=tl, taps_pad=taps_pad, group=G, seq_len=L),
        grid=grid,
        in_specs=data_specs,
        out_specs=[pl.BlockSpec((None, tl, C), lambda n, t: (n, t, 0)),
                   pl.BlockSpec((None, 2, C), lambda n, t: (n, 0, 0))],
        out_shape=[jax.ShapeDtypeStruct((N, l_pad, C), jnp.float32),
                   jax.ShapeDtypeStruct((N, 2, C), jnp.float32)],
        compiler_params=pltpu.CompilerParams(
            dimension_semantics=("parallel", "arbitrary"),
            vmem_limit_bytes=32 * 1024 * 1024),
        cost_estimate=pl.CostEstimate(flops=flops1, transcendentals=0,
                                      bytes_accessed=bytes1),
    )(xp, xm, wb, w_grp, wm)

    # --- glue: fold the two BatchNorms into one per-channel affine (tiny (C,) math) ---
    stats = jnp.sum(partials, axis=0)                       # (2, C) over the whole batch
    inv_count = 1.0 / float(N * L)
    mean = stats[0] * inv_count
    var = jnp.maximum(stats[1] * inv_count - mean * mean, 0.0)
    g1 = jnp.concatenate([g.astype(jnp.float32) for g in bn1_gammas]
                         + [jnp.ones((Cf,), jnp.float32)])
    g2 = bn2_gamma.astype(jnp.float32)
    b2 = bn2_beta.astype(jnp.float32)
    inv1 = jax.lax.rsqrt(var + EPS_INNER)
    # Inner branches: the batch mean of the inner BN's output is beta1 (cancels) and its
    # biased variance is gamma1^2 * v / (v + eps1), so the two BNs compose into one affine.
    var_u = (g1 * g1) * var * (inv1 * inv1)
    scale_in = g2 * g1 * inv1 * jax.lax.rsqrt(var_u + EPS_OUTER)
    # Maxpool-conv branch: only the outer BN applies.
    scale_mp = g2 * jax.lax.rsqrt(var + EPS_OUTER)
    scale = jnp.where(jnp.arange(C) < c_inner, scale_in, scale_mp)
    offset = (b2 - mean * scale).reshape(1, C)
    scale = scale.reshape(1, C)

    # Phase 2: pure affine + ReLU + fused transpose to NCL (fully parallel, no recompute).
    flops2 = 2 * N * l_pad * C
    bytes2 = 2 * N * l_pad * C * 4 + 2 * C * 4
    out_ncl = pl.pallas_call(
        _apply_kernel,
        grid=grid,
        in_specs=[pl.BlockSpec((None, tl, C), lambda n, t: (n, t, 0)),
                  pl.BlockSpec((1, C), lambda n, t: (0, 0)),
                  pl.BlockSpec((1, C), lambda n, t: (0, 0))],
        out_specs=pl.BlockSpec((None, C, tl), lambda n, t: (n, 0, t)),
        out_shape=jax.ShapeDtypeStruct((N, C, l_pad), jnp.float32),
        compiler_params=pltpu.CompilerParams(
            dimension_semantics=("parallel", "parallel"),
            vmem_limit_bytes=32 * 1024 * 1024),
        cost_estimate=pl.CostEstimate(flops=flops2, transcendentals=0,
                                      bytes_accessed=bytes2),
    )(z_pre, scale, offset)

    return out_ncl if l_pad == L else out_ncl[:, :, :L]


if __name__ == "__main__":
    # Module defaults: n_convolutions=3, n_filters=32, kernel_size=39 (-> 39/19/9),
    # bottleneck_size=32, activation='linear'.  Small input: batch=2, channels=4, length=128.
    N, C_in, L = 2, 4, 128
    n_conv, n_filters, kernel_size, bneck = 3, 32, 39, 32

    key = jax.random.PRNGKey(0)
    keys = jax.random.split(key, 3 + n_conv)
    x = jax.random.normal(keys[0], (N, C_in, L), dtype=jnp.float32)
    w_bot = jax.random.normal(keys[1], (bneck, C_in, 1), dtype=jnp.float32) * 0.3
    w_convs = []
    for i in range(n_conv):
        k = kernel_size // (2 ** i)
        if k % 2 == 0:
            k -= 1
        w_convs.append(jax.random.normal(keys[2 + i], (n_filters, bneck, k),
                                         dtype=jnp.float32) * 0.05)
    w_mp = jax.random.normal(keys[2 + n_conv], (n_filters, C_in, 1), dtype=jnp.float32) * 0.3

    C_total = n_filters * (n_conv + 1)
    bn1_g = tuple(jnp.ones((n_filters,), jnp.float32) for _ in range(n_conv))  # fresh BN
    bn2_g = jnp.ones((C_total,), jnp.float32)
    bn2_b = jnp.zeros((C_total,), jnp.float32)

    out = inception_forward(x, w_bot, tuple(w_convs), w_mp, bn1_g, bn2_g, bn2_b)
    out = jax.block_until_ready(out)
    assert out.shape == (N, C_total, L)
    assert bool(jnp.all(jnp.isfinite(out)))
    print("KERNEL_OK")
</pallas_src>

<mosaic_0001>
module attributes {stable_mosaic.version = 11 : i64} {
  func.func @_stats_kernel(%arg0: i32, %arg1: i32, %arg2: memref<1x168x4xf32, #tpu.memory_space<vmem>>, %arg3: memref<1x136x4xf32, #tpu.memory_space<vmem>>, %arg4: memref<4x32xf32, #tpu.memory_space<vmem>>, %arg5: memref<5x256x128xbf16, #tpu.memory_space<vmem>>, %arg6: memref<4x128xf32, #tpu.memory_space<vmem>>, %arg7: memref<1x128x128xf32, #tpu.memory_space<vmem>>, %arg8: memref<1x2x128xf32, #tpu.memory_space<vmem>>) attributes {dimension_semantics = [#tpu.dimension_semantics<parallel>, #tpu.dimension_semantics<arbitrary>], iteration_bounds = array<i64: 2, 1>, scalar_prefetch = 0 : i64, scratch_operands = 0 : i64, tpu.core_type = #tpu.core_type<tc>, window_params = [{transform_indices = @transform_0, window_bounds = array<i64: 1, 168, 4>}, {transform_indices = @transform_1, window_bounds = array<i64: 1, 136, 4>}, {pipeline_mode = #tpu.pipeline_mode<synchronous>, transform_indices = @transform_2, window_bounds = array<i64: 4, 32>}, {pipeline_mode = #tpu.pipeline_mode<synchronous>, transform_indices = @transform_3, window_bounds = array<i64: 5, 256, 128>}, {pipeline_mode = #tpu.pipeline_mode<synchronous>, transform_indices = @transform_4, window_bounds = array<i64: 4, 128>}, {transform_indices = @transform_5, window_bounds = array<i64: 1, 128, 128>}, {transform_indices = @transform_6, window_bounds = array<i64: 1, 2, 128>}]} {
    %c0_i32 = arith.constant 0 : i32
    %0 = arith.cmpi eq, %arg1, %c0_i32 : i32
    %1 = arith.extui %0 : i1 to i32
    %c0_i32_0 = arith.constant 0 : i32
    %2 = arith.cmpi ne, %1, %c0_i32_0 : i32
    scf.if %2 {
      %cst_37 = arith.constant 0.000000e+00 : f32
      %124 = vector.broadcast %cst_37 : f32 to vector<2x128xf32>
      %c0_38 = arith.constant 0 : index
      %c0_39 = arith.constant 0 : index
      %c0_40 = arith.constant 0 : index
      %125 = vector.load %arg8[%c0_38, %c0_39, %c0_40] : memref<1x2x128xf32, #tpu.memory_space<vmem>>, vector<1x2x128xf32>
      %126 = vector.shape_cast %125 : vector<1x2x128xf32> to vector<2x128xf32>
      %127 = vector.shape_cast %124 : vector<2x128xf32> to vector<1x2x128xf32>
      tpu.vector_store %arg8[%c0_38, %c0_39, %c0_40], %127 {strides = array<i32>} : memref<1x2x128xf32, #tpu.memory_space<vmem>>, vector<1x2x128xf32>,
    } else {
    }
    %c128_i32 = arith.constant 128 : i32
    %3 = arith.muli %arg1, %c128_i32 : i32
    %4 = tpu.assume_multiple %3, 8 : i32
    %c0 = arith.constant 0 : index
    %5 = arith.index_cast %4 : i32 to index
    %c0_1 = arith.constant 0 : index
    %6 = vector.load %arg2[%c0, %5, %c0_1] : memref<1x168x4xf32, #tpu.memory_space<vmem>>, vector<1x168x4xf32>
    %7 = vector.shape_cast %6 : vector<1x168x4xf32> to vector<168x4xf32>
    %c0_2 = arith.constant 0 : index
    %c0_3 = arith.constant 0 : index
    %8 = vector.load %arg4[%c0_2, %c0_3] : memref<4x32xf32, #tpu.memory_space<vmem>>, vector<4x32xf32>
    %9 = vector.extract_strided_slice %7 {offsets = [0, 0], sizes = [168, 1], strides = [1, 1]} : vector<168x4xf32> to vector<168x1xf32>
    %10 = vector.extract_strided_slice %8 {offsets = [0, 0], sizes = [1, 32], strides = [1, 1]} : vector<4x32xf32> to vector<1x32xf32>
    %11 = vector.broadcast %9 : vector<168x1xf32> to vector<168x32xf32>
    %12 = vector.broadcast %10 : vector<1x32xf32> to vector<168x32xf32>
    %13 = arith.mulf %11, %12 : vector<168x32xf32>
    %14 = vector.extract_strided_slice %7 {offsets = [0, 1], sizes = [168, 1], strides = [1, 1]} : vector<168x4xf32> to vector<168x1xf32>
    %15 = vector.extract_strided_slice %8 {offsets = [1, 0], sizes = [1, 32], strides = [1, 1]} : vector<4x32xf32> to vector<1x32xf32>
    %16 = vector.broadcast %14 : vector<168x1xf32> to vector<168x32xf32>
    %17 = vector.broadcast %15 : vector<1x32xf32> to vector<168x32xf32>
    %18 = arith.mulf %16, %17 : vector<168x32xf32>
    %19 = arith.addf %13, %18 : vector<168x32xf32>
    %20 = vector.extract_strided_slice %7 {offsets = [0, 2], sizes = [168, 1], strides = [1, 1]} : vector<168x4xf32> to vector<168x1xf32>
    %21 = vector.extract_strided_slice %8 {offsets = [2, 0], sizes = [1, 32], strides = [1, 1]} : vector<4x32xf32> to vector<1x32xf32>
    %22 = vector.broadcast %20 : vector<168x1xf32> to vector<168x32xf32>
    %23 = vector.broadcast %21 : vector<1x32xf32> to vector<168x32xf32>
    %24 = arith.mulf %22, %23 : vector<168x32xf32>
    %25 = arith.addf %19, %24 : vector<168x32xf32>
    %26 = vector.extract_strided_slice %7 {offsets = [0, 3], sizes = [168, 1], strides = [1, 1]} : vector<168x4xf32> to vector<168x1xf32>
    %27 = vector.extract_strided_slice %8 {offsets = [3, 0], sizes = [1, 32], strides = [1, 1]} : vector<4x32xf32> to vector<1x32xf32>
    %28 = vector.broadcast %26 : vector<168x1xf32> to vector<168x32xf32>
    %29 = vector.broadcast %27 : vector<1x32xf32> to vector<168x32xf32>
    %30 = arith.mulf %28, %29 : vector<168x32xf32>
    %31 = arith.addf %25, %30 : vector<168x32xf32>
    %32 = vector.extract_strided_slice %31 {offsets = [0, 0], sizes = [160, 32], strides = [1, 1]} : vector<168x32xf32> to vector<160x32xf32>
    %33 = vector.extract_strided_slice %31 {offsets = [1, 0], sizes = [160, 32], strides = [1, 1]} : vector<168x32xf32> to vector<160x32xf32>
    %34 = vector.extract_strided_slice %31 {offsets = [2, 0], sizes = [160, 32], strides = [1, 1]} : vector<168x32xf32> to vector<160x32xf32>
    %35 = vector.extract_strided_slice %31 {offsets = [3, 0], sizes = [160, 32], strides = [1, 1]} : vector<168x32xf32> to vector<160x32xf32>
    %36 = vector.extract_strided_slice %31 {offsets = [4, 0], sizes = [160, 32], strides = [1, 1]} : vector<168x32xf32> to vector<160x32xf32>
    %37 = vector.extract_strided_slice %31 {offsets = [5, 0], sizes = [160, 32], strides = [1, 1]} : vector<168x32xf32> to vector<160x32xf32>
    %38 = vector.extract_strided_slice %31 {offsets = [6, 0], sizes = [160, 32], strides = [1, 1]} : vector<168x32xf32> to vector<160x32xf32>
    %39 = vector.extract_strided_slice %31 {offsets = [7, 0], sizes = [160, 32], strides = [1, 1]} : vector<168x32xf32> to vector<160x32xf32>
    %40 = tpu.concatenate %32, %33, %34, %35, %36, %37, %38, %39 in 1 : vector<160x32xf32>, vector<160x32xf32>, vector<160x32xf32>, vector<160x32xf32>, vector<160x32xf32>, vector<160x32xf32>, vector<160x32xf32>, vector<160x32xf32> -> vector<160x256xf32>
    %41 = arith.truncf %40 : vector<160x256xf32> to vector<160x256xbf16>
    %42 = vector.extract_strided_slice %41 {offsets = [0, 0], sizes = [128, 256], strides = [1, 1]} : vector<160x256xbf16> to vector<128x256xbf16>
    %c0_4 = arith.constant 0 : index
    %c0_5 = arith.constant 0 : index
    %c0_6 = arith.constant 0 : index
    %43 = vector.load %arg5[%c0_4, %c0_5, %c0_6] : memref<5x256x128xbf16, #tpu.memory_space<vmem>>, vector<1x256x128xbf16>
    %44 = vector.shape_cast %43 : vector<1x256x128xbf16> to vector<256x128xbf16>
    %cst = arith.constant dense<0.000000e+00> : vector<128x128xf32>
    %45 = tpu.matmul %42, %44, %cst {dimension_numbers = #tpu.dot_dimension_numbers<[1], [0], [0], [1], [0, 0, 1, 1], [], []>} : vector<128x256xbf16>, vector<256x128xbf16>, vector<128x128xf32> -> vector<128x128xf32>
    %46 = vector.extract_strided_slice %41 {offsets = [8, 0], sizes = [128, 256], strides = [1, 1]} : vector<160x256xbf16> to vector<128x256xbf16>
    %c1 = arith.constant 1 : index
    %c0_7 = arith.constant 0 : index
    %c0_8 = arith.constant 0 : index
    %47 = vector.load %arg5[%c1, %c0_7, %c0_8] : memref<5x256x128xbf16, #tpu.memory_space<vmem>>, vector<1x256x128xbf16>
    %48 = vector.shape_cast %47 : vector<1x256x128xbf16> to vector<256x128xbf16>
    %cst_9 = arith.constant dense<0.000000e+00> : vector<128x128xf32>
    %49 = tpu.matmul %46, %48, %cst_9 {dimension_numbers = #tpu.dot_dimension_numbers<[1], [0], [0], [1], [0, 0, 1, 1], [], []>} : vector<128x256xbf16>, vector<256x128xbf16>, vector<128x128xf32> -> vector<128x128xf32>
    %50 = arith.addf %45, %49 : vector<128x128xf32>
    %51 = vector.extract_strided_slice %41 {offsets = [16, 0], sizes = [128, 256], strides = [1, 1]} : vector<160x256xbf16> to vector<128x256xbf16>
    %c2 = arith.constant 2 : index
    %c0_10 = arith.constant 0 : index
    %c0_11 = arith.constant 0 : index
    %52 = vector.load %arg5[%c2, %c0_10, %c0_11] : memref<5x256x128xbf16, #tpu.memory_space<vmem>>, vector<1x256x128xbf16>
    %53 = vector.shape_cast %52 : vector<1x256x128xbf16> to vector<256x128xbf16>
    %cst_12 = arith.constant dense<0.000000e+00> : vector<128x128xf32>
    %54 = tpu.matmul %51, %53, %cst_12 {dimension_numbers = #tpu.dot_dimension_numbers<[1], [0], [0], [1], [0, 0, 1, 1], [], []>} : vector<128x256xbf16>, vector<256x128xbf16>, vector<128x128xf32> -> vector<128x128xf32>
    %55 = arith.addf %50, %54 : vector<128x128xf32>
    %56 = vector.extract_strided_slice %41 {offsets = [24, 0], sizes = [128, 256], strides = [1, 1]} : vector<160x256xbf16> to vector<128x256xbf16>
    %c3 = arith.constant 3 : index
    %c0_13 = arith.constant 0 : index
    %c0_14 = arith.constant 0 : index
    %57 = vector.load %arg5[%c3, %c0_13, %c0_14] : memref<5x256x128xbf16, #tpu.memory_space<vmem>>, vector<1x256x128xbf16>
    %58 = vector.shape_cast %57 : vector<1x256x128xbf16> to vector<256x128xbf16>
    %cst_15 = arith.constant dense<0.000000e+00> : vector<128x128xf32>
    %59 = tpu.matmul %56, %58, %cst_15 {dimension_numbers = #tpu.dot_dimension_numbers<[1], [0], [0], [1], [0, 0, 1, 1], [], []>} : vector<128x256xbf16>, vector<256x128xbf16>, vector<128x128xf32> -> vector<128x128xf32>
    %60 = arith.addf %55, %59 : vector<128x128xf32>
    %61 = vector.extract_strided_slice %41 {offsets = [32, 0], sizes = [128, 256], strides = [1, 1]} : vector<160x256xbf16> to vector<128x256xbf16>
    %c4 = arith.constant 4 : index
    %c0_16 = arith.constant 0 : index
    %c0_17 = arith.constant 0 : index
    %62 = vector.load %arg5[%c4, %c0_16, %c0_17] : memref<5x256x128xbf16, #tpu.memory_space<vmem>>, vector<1x256x128xbf16>
    %63 = vector.shape_cast %62 : vector<1x256x128xbf16> to vector<256x128xbf16>
    %cst_18 = arith.constant dense<0.000000e+00> : vector<128x128xf32>
    %64 = tpu.matmul %61, %63, %cst_18 {dimension_numbers = #tpu.dot_dimension_numbers<[1], [0], [0], [1], [0, 0, 1, 1], [], []>} : vector<128x256xbf16>, vector<256x128xbf16>, vector<128x128xf32> -> vector<128x128xf32>
    %65 = arith.addf %60, %64 : vector<128x128xf32>
    %c0_19 = arith.constant 0 : index
    %66 = arith.index_cast %4 : i32 to index
    %c0_20 = arith.constant 0 : index
    %67 = vector.load %arg3[%c0_19, %66, %c0_20] : memref<1x136x4xf32, #tpu.memory_space<vmem>>, vector<1x136x4xf32>
    %68 = vector.shape_cast %67 : vector<1x136x4xf32> to vector<136x4xf32>
    %69 = vector.extract_strided_slice %68 {offsets = [0, 0], sizes = [128, 4], strides = [1, 1]} : vector<136x4xf32> to vector<128x4xf32>
    %70 = vector.extract_strided_slice %68 {offsets = [1, 0], sizes = [128, 4], strides = [1, 1]} : vector<136x4xf32> to vector<128x4xf32>
    %71 = arith.maximumf %69, %70 : vector<128x4xf32>
    %72 = vector.extract_strided_slice %68 {offsets = [2, 0], sizes = [128, 4], strides = [1, 1]} : vector<136x4xf32> to vector<128x4xf32>
    %73 = arith.maximumf %71, %72 : vector<128x4xf32>
    %c0_21 = arith.constant 0 : index
    %c0_22 = arith.constant 0 : index
    %74 = vector.load %arg6[%c0_21, %c0_22] : memref<4x128xf32, #tpu.memory_space<vmem>>, vector<4x128xf32>
    %75 = vector.extract_strided_slice %73 {offsets = [0, 0], sizes = [128, 1], strides = [1, 1]} : vector<128x4xf32> to vector<128x1xf32>
    %76 = vector.extract_strided_slice %74 {offsets = [0, 0], sizes = [1, 128], strides = [1, 1]} : vector<4x128xf32> to vector<1x128xf32>
    %77 = vector.broadcast %75 : vector<128x1xf32> to vector<128x128xf32>
    %78 = vector.broadcast %76 : vector<1x128xf32> to vector<128x128xf32>
    %79 = arith.mulf %77, %78 : vector<128x128xf32>
    %80 = vector.extract_strided_slice %73 {offsets = [0, 1], sizes = [128, 1], strides = [1, 1]} : vector<128x4xf32> to vector<128x1xf32>
    %81 = vector.extract_strided_slice %74 {offsets = [1, 0], sizes = [1, 128], strides = [1, 1]} : vector<4x128xf32> to vector<1x128xf32>
    %82 = vector.broadcast %80 : vector<128x1xf32> to vector<128x128xf32>
    %83 = vector.broadcast %81 : vector<1x128xf32> to vector<128x128xf32>
    %84 = arith.mulf %82, %83 : vector<128x128xf32>
    %85 = arith.addf %79, %84 : vector<128x128xf32>
    %86 = vector.extract_strided_slice %73 {offsets = [0, 2], sizes = [128, 1], strides = [1, 1]} : vector<128x4xf32> to vector<128x1xf32>
    %87 = vector.extract_strided_slice %74 {offsets = [2, 0], sizes = [1, 128], strides = [1, 1]} : vector<4x128xf32> to vector<1x128xf32>
    %88 = vector.broadcast %86 : vector<128x1xf32> to vector<128x128xf32>
    %89 = vector.broadcast %87 : vector<1x128xf32> to vector<128x128xf32>
    %90 = arith.mulf %88, %89 : vector<128x128xf32>
    %91 = arith.addf %85, %90 : vector<128x128xf32>
    %92 = vector.extract_strided_slice %73 {offsets = [0, 3], sizes = [128, 1], strides = [1, 1]} : vector<128x4xf32> to vector<128x1xf32>
    %93 = vector.extract_strided_slice %74 {offsets = [3, 0], sizes = [1, 128], strides = [1, 1]} : vector<4x128xf32> to vector<1x128xf32>
    %94 = vector.broadcast %92 : vector<128x1xf32> to vector<128x128xf32>
    %95 = vector.broadcast %93 : vector<1x128xf32> to vector<128x128xf32>
    %96 = arith.mulf %94, %95 : vector<128x128xf32>
    %97 = arith.addf %91, %96 : vector<128x128xf32>
    %98 = arith.addf %65, %97 : vector<128x128xf32>
    %c128_i32_23 = arith.constant 128 : i32
    %99 = arith.muli %arg1, %c128_i32_23 : i32
    %100 = tpu.iota {dimensions = array<i32: 0>} : vector<128x1xi32>
    %101 = vector.broadcast %99 : i32 to vector<128x1xi32>
    %102 = arith.addi %101, %100 : vector<128x1xi32>
    %c128_i32_24 = arith.constant 128 : i32
    %103 = vector.broadcast %c128_i32_24 : i32 to vector<128x1xi32>
    %104 = arith.cmpi slt, %102, %103 : vector<128x1xi32>
    %cst_25 = arith.constant 0.000000e+00 : f32
    %105 = vector.shape_cast %104 : vector<128x1xi1> to vector<128x1xi1>
    %106 = vector.broadcast %105 : vector<128x1xi1> to vector<128x128xi1>
    %107 = vector.broadcast %cst_25 : f32 to vector<128x128xf32>
    %108 = arith.select %106, %98, %107 : vector<128x128xi1>, vector<128x128xf32>
    %c0_26 = arith.constant 0 : index
    %c0_27 = arith.constant 0 : index
    %c0_28 = arith.constant 0 : index
    %109 = vector.load %arg7[%c0_26, %c0_27, %c0_28] : memref<1x128x128xf32, #tpu.memory_space<vmem>>, vector<1x128x128xf32>
    %110 = vector.shape_cast %109 : vector<1x128x128xf32> to vector<128x128xf32>
    %111 = vector.shape_cast %108 : vector<128x128xf32> to vector<1x128x128xf32>
    tpu.vector_store %arg7[%c0_26, %c0_27, %c0_28], %111 {strides = array<i32>} : memref<1x128x128xf32, #tpu.memory_space<vmem>>, vector<1x128x128xf32>,
    %c0_29 = arith.constant 0 : index
    %c0_30 = arith.constant 0 : index
    %c0_31 = arith.constant 0 : index
    %112 = vector.load %arg8[%c0_29, %c0_30, %c0_31] : memref<1x2x128xf32, #tpu.memory_space<vmem>>, vector<1x2x128xf32>
    %113 = vector.shape_cast %112 : vector<1x2x128xf32> to vector<2x128xf32>
    %cst_32 = arith.constant dense<0.000000e+00> : vector<128xf32>
    %114 = vector.multi_reduction <add>, %108, %cst_32 [0] : vector<128x128xf32> to vector<128xf32>
    %115 = vector.shape_cast %114 : vector<128xf32> to vector<1x128xf32>
    %116 = arith.mulf %108, %108 : vector<128x128xf32>
    %cst_33 = arith.constant dense<0.000000e+00> : vector<128xf32>
    %117 = vector.multi_reduction <add>, %116, %cst_33 [0] : vector<128x128xf32> to vector<128xf32>
    %118 = vector.shape_cast %117 : vector<128xf32> to vector<1x128xf32>
    %119 = tpu.concatenate %115, %118 in 0 : vector<1x128xf32>, vector<1x128xf32> -> vector<2x128xf32>
    %120 = arith.addf %113, %119 : vector<2x128xf32>
    %c0_34 = arith.constant 0 : index
    %c0_35 = arith.constant 0 : index
    %c0_36 = arith.constant 0 : index
    %121 = vector.load %arg8[%c0_34, %c0_35, %c0_36] : memref<1x2x128xf32, #tpu.memory_space<vmem>>, vector<1x2x128xf32>
    %122 = vector.shape_cast %121 : vector<1x2x128xf32> to vector<2x128xf32>
    %123 = vector.shape_cast %120 : vector<2x128xf32> to vector<1x2x128xf32>
    tpu.vector_store %arg8[%c0_34, %c0_35, %c0_36], %123 {strides = array<i32>} : memref<1x2x128xf32, #tpu.memory_space<vmem>>, vector<1x2x128xf32>,
    return
  }
  func.func @transform_0(%arg0: i32, %arg1: i32) -> (i32, i32, i32) {
    %c0_i32 = arith.constant 0 : i32
    %c0_i32_0 = arith.constant 0 : i32
    %c0_i32_1 = arith.constant 0 : i32
    return %arg0, %c0_i32, %c0_i32_0 : i32, i32, i32
  }
  func.func @transform_1(%arg0: i32, %arg1: i32) -> (i32, i32, i32) {
    %c0_i32 = arith.constant 0 : i32
    %c0_i32_0 = arith.constant 0 : i32
    %c0_i32_1 = arith.constant 0 : i32
    return %arg0, %c0_i32, %c0_i32_0 : i32, i32, i32
  }
  func.func @transform_2(%arg0: i32, %arg1: i32) -> (i32, i32) {
    %c0_i32 = arith.constant 0 : i32
    %c0_i32_0 = arith.constant 0 : i32
    %c0_i32_1 = arith.constant 0 : i32
    return %c0_i32, %c0_i32_0 : i32, i32
  }
  func.func @transform_3(%arg0: i32, %arg1: i32) -> (i32, i32, i32) {
    %c0_i32 = arith.constant 0 : i32
    %c0_i32_0 = arith.constant 0 : i32
    %c0_i32_1 = arith.constant 0 : i32
    %c0_i32_2 = arith.constant 0 : i32
    return %c0_i32, %c0_i32_0, %c0_i32_1 : i32, i32, i32
  }
  func.func @transform_4(%arg0: i32, %arg1: i32) -> (i32, i32) {
    %c0_i32 = arith.constant 0 : i32
    %c0_i32_0 = arith.constant 0 : i32
    %c0_i32_1 = arith.constant 0 : i32
    return %c0_i32, %c0_i32_0 : i32, i32
  }
  func.func @transform_5(%arg0: i32, %arg1: i32) -> (i32, i32, i32) {
    %c0_i32 = arith.constant 0 : i32
    %c0_i32_0 = arith.constant 0 : i32
    return %arg0, %arg1, %c0_i32 : i32, i32, i32
  }
  func.func @transform_6(%arg0: i32, %arg1: i32) -> (i32, i32, i32) {
    %c0_i32 = arith.constant 0 : i32
    %c0_i32_0 = arith.constant 0 : i32
    %c0_i32_1 = arith.constant 0 : i32
    return %arg0, %c0_i32, %c0_i32_0 : i32, i32, i32
  }
}

module attributes {stable_mosaic.version = 11 : i64} {
  func.func @_apply_kernel(%arg0: i32, %arg1: i32, %arg2: memref<1x128x128xf32, #tpu.memory_space<vmem>>, %arg3: memref<1x128xf32, #tpu.memory_space<vmem>>, %arg4: memref<1x128xf32, #tpu.memory_space<vmem>>, %arg5: memref<1x128x128xf32, #tpu.memory_space<vmem>>) attributes {dimension_semantics = [#tpu.dimension_semantics<parallel>, #tpu.dimension_semantics<parallel>], iteration_bounds = array<i64: 2, 1>, scalar_prefetch = 0 : i64, scratch_operands = 0 : i64, tpu.core_type = #tpu.core_type<tc>, window_params = [{transform_indices = @transform_0, window_bounds = array<i64: 1, 128, 128>}, {pipeline_mode = #tpu.pipeline_mode<synchronous>, transform_indices = @transform_1, window_bounds = array<i64: 1, 128>}, {pipeline_mode = #tpu.pipeline_mode<synchronous>, transform_indices = @transform_2, window_bounds = array<i64: 1, 128>}, {transform_indices = @transform_3, window_bounds = array<i64: 1, 128, 128>}]} {
    %c0 = arith.constant 0 : index
    %c0_0 = arith.constant 0 : index
    %c0_1 = arith.constant 0 : index
    %0 = vector.load %arg2[%c0, %c0_0, %c0_1] : memref<1x128x128xf32, #tpu.memory_space<vmem>>, vector<1x128x128xf32>
    %1 = vector.shape_cast %0 : vector<1x128x128xf32> to vector<128x128xf32>
    %c0_2 = arith.constant 0 : index
    %c0_3 = arith.constant 0 : index
    %2 = vector.load %arg3[%c0_2, %c0_3] : memref<1x128xf32, #tpu.memory_space<vmem>>, vector<1x128xf32>
    %3 = vector.broadcast %2 : vector<1x128xf32> to vector<128x128xf32>
    %4 = arith.mulf %1, %3 : vector<128x128xf32>
    %c0_4 = arith.constant 0 : index
    %c0_5 = arith.constant 0 : index
    %5 = vector.load %arg4[%c0_4, %c0_5] : memref<1x128xf32, #tpu.memory_space<vmem>>, vector<1x128xf32>
    %6 = vector.broadcast %5 : vector<1x128xf32> to vector<128x128xf32>
    %7 = arith.addf %4, %6 : vector<128x128xf32>
    %cst = arith.constant 0.000000e+00 : f32
    %8 = vector.broadcast %cst : f32 to vector<128x128xf32>
    %9 = arith.maximumf %7, %8 : vector<128x128xf32>
    %10 = tpu.transpose %9, [1, 0] : vector<128x128xf32> -> vector<128x128xf32>
    %c0_6 = arith.constant 0 : index
    %c0_7 = arith.constant 0 : index
    %c0_8 = arith.constant 0 : index
    %11 = vector.load %arg5[%c0_6, %c0_7, %c0_8] : memref<1x128x128xf32, #tpu.memory_space<vmem>>, vector<1x128x128xf32>
    %12 = vector.shape_cast %11 : vector<1x128x128xf32> to vector<128x128xf32>
    %13 = vector.shape_cast %10 : vector<128x128xf32> to vector<1x128x128xf32>
    tpu.vector_store %arg5[%c0_6, %c0_7, %c0_8], %13 {strides = array<i32>} : memref<1x128x128xf32, #tpu.memory_space<vmem>>, vector<1x128x128xf32>,
    return
  }
  func.func @transform_0(%arg0: i32, %arg1: i32) -> (i32, i32, i32) {
    %c0_i32 = arith.constant 0 : i32
    %c0_i32_0 = arith.constant 0 : i32
    return %arg0, %arg1, %c0_i32 : i32, i32, i32
  }
  func.func @transform_1(%arg0: i32, %arg1: i32) -> (i32, i32) {
    %c0_i32 = arith.constant 0 : i32
    %c0_i32_0 = arith.constant 0 : i32
    %c0_i32_1 = arith.constant 0 : i32
    return %c0_i32, %c0_i32_0 : i32, i32
  }
  func.func @transform_2(%arg0: i32, %arg1: i32) -> (i32, i32) {
    %c0_i32 = arith.constant 0 : i32
    %c0_i32_0 = arith.constant 0 : i32
    %c0_i32_1 = arith.constant 0 : i32
    return %c0_i32, %c0_i32_0 : i32, i32
  }
  func.func @transform_3(%arg0: i32, %arg1: i32) -> (i32, i32, i32) {
    %c0_i32 = arith.constant 0 : i32
    %c0_i32_0 = arith.constant 0 : i32
    return %arg0, %c0_i32, %arg1 : i32, i32, i32
  }
}

</mosaic_0001>

<llo_original>
// kernel: inception_forward.2
$region0: #{inception_forward.2}
  #allocation0 [shape = 'u32[]', space=smem, size = 0x4, offset = 0x4, fixed_abs, tag = 'smem constant byte address 0x4 - core index']
  #allocation1 [shape = 'u32[144,128]{1,0:T(1,128)}', space=vmem, size = 0x12000, scoped, tag = 'internal scratch']
  %s0 = inlined_call_operand.vmem [shape: f32[2,168,4], index: 0, kind: input, shape index: {}]
  %s1 = inlined_call_operand.vmem [shape: f32[2,136,4], index: 1, kind: input, shape index: {}]
  %s2 = inlined_call_operand.vmem [shape: f32[4,32], index: 2, kind: input, shape index: {}]
  %s3 = inlined_call_operand.vmem [shape: bf16[5,256,128], index: 3, kind: input, shape index: {}]
  %s4 = inlined_call_operand.vmem [shape: f32[4,128], index: 4, kind: input, shape index: {}]
  %s5 = inlined_call_operand.vmem [shape: f32[2,128,128], index: 5, kind: output, shape index: {0}]
  %s6 = inlined_call_operand.vmem [shape: f32[2,2,128], index: 6, kind: output, shape index: {1}]
  %7 = xla_tuple %s5, %s6
  %s8 = sld [smem:[#allocation0]]
  $region65: #{inception_forward.2} parent=0
    _
  %s10 = ssub.s32 1, %s8
  %s11 = scalar_select 0, %s10, %s8
  loop: start=0, step=1, limit=4
  $region2: #{inception_forward.2} parent=0 // loop_pre_header
    _
  $region3: #{inception_forward.2} parent=0 // loop_header
    %s13 = sphi 0, %s17
    %p14 = scmp.ge.s32.totalorder %s13, 4
    %s20 = sphi 0, %s32
    %s21 = sphi 0, %s28
    %s22 = sphi 0, %s20
    %s23 = sphi 0, %s21
    %s24 = sphi 0, %s22
    %s25 = sphi 0, %s23
    %s35 = sphi 0, %s37
    %s38 = sphi 0, %s35
    %s39 = sphi 0, %s38
    %s55 = sphi 0, %s39
    %s61 = sphi 0, %s63
    %s64 = sphi 0, %s61
    %s65 = sphi 0, %s64
    %s81 = sphi 0, %s65
    %s85 = sphi 0, %s85
    %s87 = sphi 0, %s85
    %s88 = sphi 0, %s87
    %s102 = sphi 0, %s88
    %s106 = sphi 0, %s106
    %s108 = sphi 0, %s106
    %s109 = sphi 0, %s108
    %s123 = sphi 0, %s109
    %s127 = sphi 0, %s127
    %s129 = sphi 0, %s127
    %s130 = sphi 0, %s129
    %s144 = sphi 0, %s130
    %s152 = sphi 0, %s154
    %s155 = sphi 0, %s152
    %s156 = sphi 0, %s155
    %s172 = sphi 0, %s156
    %s178 = sphi 0, %s180
    %s181 = sphi 0, %s178
    %s182 = sphi 0, %s181
    %s198 = sphi 0, %s182
  $region4: #{inception_forward.2} parent=0 // loop_header_branch
    %16 = sbr.rel (%p14) target = $region8
  $region5: #{inception_forward.2} parent=0 // loop_body
    %s18 = ssub.s32 %s13, 1
    %s19 = ssub.s32 %s13, 2
    %s26 = sadd.s32 1, %s21
    %p27 = scmp.ge.s32.totalorder %s26, 1
    %s28 = scalar_select %p27, 0, %s26
    %s29 = sadd.s32 1, %s20
    %s30 = scalar_select %p27, %s29, %s20
    %p31 = scmp.ge.s32.totalorder %s30, 2
    %s32 = scalar_select %p31, 0, %s30
    %s33 = ssub.s32 %s20, %s32
    %p34 = scmp.eq.s32.totalorder %s33, 0
    %s36 = sadd.s32 %s35, 1
    %s37 = scalar_select %p34, %s35, %s36
    %p40 = pneg %p34
    %p41 = scmp.eq.s32.totalorder %s13, 1
    %p42 = por %p40, %p41
    %p43 = scmp.ne.s32.totalorder %s35, %s38
    %p44 = scmp.eq.s32.totalorder %s13, 0
    %p45 = por %p43, %p44
    %p46 = scmp.ne.s32.totalorder %s35, %s38
    %p47 = scmp.eq.s32.totalorder %s18, 1
    %p48 = por %p46, %p47
    %p49 = scmp.ne.s32.totalorder %s38, %s39
    %p50 = scmp.eq.s32.totalorder %s18, 0
    %p51 = por %p49, %p50
    %p52 = scmp.ne.s32.totalorder %s38, %s39
    %p53 = scmp.eq.s32.totalorder %s19, 1
    %p54 = por %p52, %p53
    %p56 = scmp.ne.s32.totalorder %s39, %s55
    %p57 = scmp.eq.s32.totalorder %s19, 0
    %p58 = por %p56, %p57
    %s59 = ssub.s32 %s20, %s32
    %p60 = scmp.eq.s32.totalorder %s59, 0
    %s62 = sadd.s32 %s61, 1
    %s63 = scalar_select %p60, %s61, %s62
    %p66 = pneg %p60
    %p67 = scmp.eq.s32.totalorder %s13, 1
    %p68 = por %p66, %p67
    %p69 = scmp.ne.s32.totalorder %s61, %s64
    %p70 = scmp.eq.s32.totalorder %s13, 0
    %p71 = por %p69, %p70
    %p72 = scmp.ne.s32.totalorder %s61, %s64
    %p73 = scmp.eq.s32.totalorder %s18, 1
    %p74 = por %p72, %p73
    %p75 = scmp.ne.s32.totalorder %s64, %s65
    %p76 = scmp.eq.s32.totalorder %s18, 0
    %p77 = por %p75, %p76
    %p78 = scmp.ne.s32.totalorder %s64, %s65
    %p79 = scmp.eq.s32.totalorder %s19, 1
    %p80 = por %p78, %p79
    %p82 = scmp.ne.s32.totalorder %s65, %s81
    %p83 = scmp.eq.s32.totalorder %s19, 0
    %p84 = por %p82, %p83
    %s86 = sadd.s32 %s85, 1
    %p89 = scmp.eq.s32.totalorder %s13, 1
    %p90 = scmp.ne.s32.totalorder %s85, %s87
    %p91 = scmp.eq.s32.totalorder %s13, 0
    %p92 = por %p90, %p91
    %p93 = scmp.ne.s32.totalorder %s85, %s87
    %p94 = scmp.eq.s32.totalorder %s18, 1
    %p95 = por %p93, %p94
    %p96 = scmp.ne.s32.totalorder %s87, %s88
    %p97 = scmp.eq.s32.totalorder %s18, 0
    %p98 = por %p96, %p97
    %p99 = scmp.ne.s32.totalorder %s87, %s88
    %p100 = scmp.eq.s32.totalorder %s19, 1
    %p101 = por %p99, %p100
    %p103 = scmp.ne.s32.totalorder %s88, %s102
    %p104 = scmp.eq.s32.totalorder %s19, 0
    %p105 = por %p103, %p104
    %s107 = sadd.s32 %s106, 1
    %p110 = scmp.eq.s32.totalorder %s13, 1
    %p111 = scmp.ne.s32.totalorder %s106, %s108
    %p112 = scmp.eq.s32.totalorder %s13, 0
    %p113 = por %p111, %p112
    %p114 = scmp.ne.s32.totalorder %s106, %s108
    %p115 = scmp.eq.s32.totalorder %s18, 1
    %p116 = por %p114, %p115
    %p117 = scmp.ne.s32.totalorder %s108, %s109
    %p118 = scmp.eq.s32.totalorder %s18, 0
    %p119 = por %p117, %p118
    %p120 = scmp.ne.s32.totalorder %s108, %s109
    %p121 = scmp.eq.s32.totalorder %s19, 1
    %p122 = por %p120, %p121
    %p124 = scmp.ne.s32.totalorder %s109, %s123
    %p125 = scmp.eq.s32.totalorder %s19, 0
    %p126 = por %p124, %p125
    %s128 = sadd.s32 %s127, 1
    %p131 = scmp.eq.s32.totalorder %s13, 1
    %p132 = scmp.ne.s32.totalorder %s127, %s129
    %p133 = scmp.eq.s32.totalorder %s13, 0
    %p134 = por %p132, %p133
    %p135 = scmp.ne.s32.totalorder %s127, %s129
    %p136 = scmp.eq.s32.totalorder %s18, 1
    %p137 = por %p135, %p136
    %p138 = scmp.ne.s32.totalorder %s129, %s130
    %p139 = scmp.eq.s32.totalorder %s18, 0
    %p140 = por %p138, %p139
    %p141 = scmp.ne.s32.totalorder %s129, %s130
    %p142 = scmp.eq.s32.totalorder %s19, 1
    %p143 = por %p141, %p142
    %p145 = scmp.ne.s32.totalorder %s130, %s144
    %p146 = scmp.eq.s32.totalorder %s19, 0
    %p147 = por %p145, %p146
    %s148 = ssub.s32 %s20, %s32
    %s149 = ssub.s32 %s21, %s28
    %s150 = sor.u32 %s148, %s149
    %p151 = scmp.eq.s32.totalorder %s150, 0
    %s153 = sadd.s32 %s152, 1
    %s154 = scalar_select %p151, %s152, %s153
    %p157 = pneg %p151
    %p158 = scmp.eq.s32.totalorder %s13, 1
    %p159 = por %p157, %p158
    %p160 = scmp.ne.s32.totalorder %s152, %s155
    %p161 = scmp.eq.s32.totalorder %s13, 0
    %p162 = por %p160, %p161
    %p163 = scmp.ne.s32.totalorder %s152, %s155
    %p164 = scmp.eq.s32.totalorder %s18, 1
    %p165 = por %p163, %p164
    %p166 = scmp.ne.s32.totalorder %s155, %s156
    %p167 = scmp.eq.s32.totalorder %s18, 0
    %p168 = por %p166, %p167
    %p169 = scmp.ne.s32.totalorder %s155, %s156
    %p170 = scmp.eq.s32.totalorder %s19, 1
    %p171 = por %p169, %p170
    %p173 = scmp.ne.s32.totalorder %s156, %s172
    %p174 = scmp.eq.s32.totalorder %s19, 0
    %p175 = por %p173, %p174
    %s176 = ssub.s32 %s20, %s32
    %p177 = scmp.eq.s32.totalorder %s176, 0
    %s179 = sadd.s32 %s178, 1
    %s180 = scalar_select %p177, %s178, %s179
    %p183 = pneg %p177
    %p184 = scmp.eq.s32.totalorder %s13, 1
    %p185 = por %p183, %p184
    %p186 = scmp.ne.s32.totalorder %s178, %s181
    %p187 = scmp.eq.s32.totalorder %s13, 0
    %p188 = por %p186, %p187
    %p189 = scmp.ne.s32.totalorder %s178, %s181
    %p190 = scmp.eq.s32.totalorder %s18, 1
    %p191 = por %p189, %p190
    %p192 = scmp.ne.s32.totalorder %s181, %s182
    %p193 = scmp.eq.s32.totalorder %s18, 0
    %p194 = por %p192, %p193
    %p195 = scmp.ne.s32.totalorder %s181, %s182
    %p196 = scmp.eq.s32.totalorder %s19, 1
    %p197 = por %p195, %p196
    %p199 = scmp.ne.s32.totalorder %s182, %s198
    %p200 = scmp.eq.s32.totalorder %s19, 0
    %p201 = por %p199, %p200
    %p202 = scmp.le.s32.totalorder 1, %s13
    %p203 = scmp.lt.s32.totalorder %s13, 3
    %p204 = pnand %p202, %p203
    %p205 = pneg %p204
    // Predicated region
    $region9: #{inception_forward.2} parent=5 // pred_check
      _
    $region10: #{inception_forward.2} parent=5 // pred_check_branch
      %207 = sbr.rel (%p204) target = $region12
    $region11: #{inception_forward.2} parent=5 // pred_region
      %s208 = ssub.s32 %s13, 1
      // Predicated region
      $region13: #{inception_forward.2} parent=11 // pred_check
        %p209 = pneg %p98
      $region14: #{inception_forward.2} parent=11 // pred_check_branch
        %211 = sbr.rel (%p209) target = $region16
      $region15: #{inception_forward.2} parent=11 // pred_region
        _
      $region16: #{inception_forward.2} parent=11 // pred_fallthru
        _
      // Predicated region
      $region17: #{inception_forward.2} parent=11 // pred_check
        %p212 = pneg %p119
      $region18: #{inception_forward.2} parent=11 // pred_check_branch
        %214 = sbr.rel (%p212) target = $region20
      $region19: #{inception_forward.2} parent=11 // pred_region
        _
      $region20: #{inception_forward.2} parent=11 // pred_fallthru
        _
      // Predicated region
      $region21: #{inception_forward.2} parent=11 // pred_check
        %p215 = pneg %p140
      $region22: #{inception_forward.2} parent=11 // pred_check_branch
        %217 = sbr.rel (%p215) target = $region24
      $region23: #{inception_forward.2} parent=11 // pred_region
        _
      $region24: #{inception_forward.2} parent=11 // pred_fallthru
        _
    $region12: #{inception_forward.2} parent=5 // pred_fallthru
      _
    %p218 = scmp.lt.s32.totalorder %s13, 2
    // Predicated region
    $region25: #{inception_forward.2} parent=5 // pred_check
      %p219 = pneg %p218
    $region26: #{inception_forward.2} parent=5 // pred_check_branch
      %221 = sbr.rel (%p219) target = $region28
    $region27: #{inception_forward.2} parent=5 // pred_region
      // Predicated region
      $region29: #{inception_forward.2} parent=27 // pred_check
        %p222 = pneg %p45
      $region30: #{inception_forward.2} parent=27 // pred_check_branch
        %224 = sbr.rel (%p222) target = $region32
      $region31: #{inception_forward.2} parent=27 // pred_region
        %p225 = scmp.lt.s32.totalorder %s20, 1
        %s226 = scalar_select %p225, %s20, 1
        %s227 = smul.addr %s226, 21
        %s228 = smul.addr %s227, 8
        %s229 = scalar_lea.vmem %s0, %s228
      $region32: #{inception_forward.2} parent=27 // pred_fallthru
        _
      // Predicated region
      $region33: #{inception_forward.2} parent=27 // pred_check
        %p230 = pneg %p71
      $region34: #{inception_forward.2} parent=27 // pred_check_branch
        %232 = sbr.rel (%p230) target = $region36
      $region35: #{inception_forward.2} parent=27 // pred_region
        %p233 = scmp.lt.s32.totalorder %s20, 1
        %s234 = scalar_select %p233, %s20, 1
        %s235 = smul.addr %s234, 17
        %s236 = smul.addr %s235, 8
        %s237 = scalar_lea.vmem %s1, %s236
      $region36: #{inception_forward.2} parent=27 // pred_fallthru
        _
    $region28: #{inception_forward.2} parent=5 // pred_fallthru
      _
    %p238 = scmp.le.s32.totalorder 1, %s13
    %p239 = scmp.lt.s32.totalorder %s13, 3
    %p240 = pnand %p238, %p239
    %p241 = pneg %p240
    // Predicated region
    $region37: #{inception_forward.2} parent=5 // pred_check
      _
    $region38: #{inception_forward.2} parent=5 // pred_check_branch
      %243 = sbr.rel (%p240) target = $region40
    $region39: #{inception_forward.2} parent=5 // pred_region
      %s244 = ssub.s32 %s13, 1
      %p245 = scmp.lt.s32.totalorder %s22, 1
      %s246 = scalar_select %p245, %s22, 1
      %s247 = smul.addr %s246, 21
      %s248 = smul.addr %s247, 8
      %s249 = scalar_lea.vmem %s0, %s248
      %p250 = pneg %p51
      %p251 = pneg %p48
      %p252 = scmp.lt.s32.totalorder %s22, 1
      %s253 = scalar_select %p252, %s22, 1
      %s254 = smul.addr %s253, 17
      %s255 = smul.addr %s254, 8
      %s256 = scalar_lea.vmem %s1, %s255
      %p257 = pneg %p77
      %p258 = pneg %p74
      %p259 = pneg %p98
      %p260 = pneg %p95
      %p261 = pneg %p119
      %p262 = pneg %p116
      %p263 = pneg %p140
      %p264 = pneg %p137
      %p265 = pneg %p168
      %p266 = pneg %p165
      %s267 = smul.u32 16, %s23
      %p268 = scmp.lt.s32.totalorder %s22, 1
      %s269 = scalar_select %p268, %s22, 1
      %p270 = scmp.lt.s32.totalorder %s267, 15
      %s271 = scalar_select %p270, %s267, 15
      %s272 = smul.addr %s269, 16
      %s273 = sadd.s32 %s271, %s272
      %s274 = smul.addr %s273, 8
      %s275 = scalar_lea.vmem %s5, %s274
      %p276 = pneg %p194
      %p277 = pneg %p191
      %p278 = scmp.lt.s32.totalorder %s22, 1
      %s279 = scalar_select %p278, %s22, 1
      %s280 = smul.addr %s279, 2
      %s281 = scalar_lea.vmem %s6, %s280
      %p282 = scmp.lt.s32.totalorder %s22, 1
      %s283 = scalar_select %p282, %s22, 1
      %s284 = smul.addr %s283, 21
      %s285 = smul.addr %s284, 8
      %s286 = scalar_lea.vmem %s0, %s285
      %p287 = scmp.lt.s32.totalorder %s22, 1
      %s288 = scalar_select %p287, %s22, 1
      %s289 = smul.addr %s288, 17
      %s290 = smul.addr %s289, 8
      %s291 = scalar_lea.vmem %s1, %s290
      %s292 = smul.u32 16, %s23
      %p293 = scmp.lt.s32.totalorder %s22, 1
      %s294 = scalar_select %p293, %s22, 1
      %p295 = scmp.lt.s32.totalorder %s292, 15
      %s296 = scalar_select %p295, %s292, 15
      %s297 = smul.addr %s294, 16
      %s298 = sadd.s32 %s296, %s297
      %s299 = smul.addr %s298, 8
      %s300 = scalar_lea.vmem %s5, %s299
      %s301 = smul.u32 16, %s23
      %p302 = scmp.lt.s32.totalorder %s22, 1
      %s303 = scalar_select %p302, %s22, 1
      %s304 = smul.addr %s303, 2
      %s305 = scalar_lea.vmem %s6, %s304
      %p307 = scmp.eq.s32.totalorder %s23, 0
      // Predicated region
      $region41: #{inception_forward.2} parent=39 // pred_check
        %p308 = pneg %p307
      $region42: #{inception_forward.2} parent=39 // pred_check_branch
        %310 = sbr.rel (%p308) target = $region44
      $region43: #{inception_forward.2} parent=39 // pred_region
        %311 = vst [vmem:[%s305] sm:$0x3] 0.0
      $region44: #{inception_forward.2} parent=39 // pred_fallthru
        _
      %s312 = smul.u32 %s23, 128
      %s313 = scalar_lea.vmem %s286, %s312
      %v314 = vld [vmem:[%s313] sm:$0xff]
      %v315 = vld [vmem:[%s313 + $0x8] sm:$0xff]
      %v316 = vld [vmem:[%s313 + $0x10] sm:$0xff]
      %v317 = vld [vmem:[%s313 + $0x18] sm:$0xff]
      %v318 = vld [vmem:[%s313 + $0x20] sm:$0xff]
      %v319 = vld [vmem:[%s313 + $0x28] sm:$0xff]
      %v320 = vld [vmem:[%s313 + $0x30] sm:$0xff]
      %v321 = vld [vmem:[%s313 + $0x38] sm:$0xff]
      %v322 = vld [vmem:[%s313 + $0x40] sm:$0xff]
      %v323 = vld [vmem:[%s313 + $0x48] sm:$0xff]
      %v324 = vld [vmem:[%s313 + $0x50] sm:$0xff]
      %v325 = vld [vmem:[%s313 + $0x58] sm:$0xff]
      %v326 = vld [vmem:[%s313 + $0x60] sm:$0xff]
      %v327 = vld [vmem:[%s313 + $0x68] sm:$0xff]
      %v328 = vld [vmem:[%s313 + $0x70] sm:$0xff]
      %v329 = vld [vmem:[%s313 + $0x78] sm:$0xff]
      %v330 = vld [vmem:[%s313 + $0x80] sm:$0xff]
      %v331 = vld [vmem:[%s313 + $0x88] sm:$0xff]
      %v332 = vld [vmem:[%s313 + $0x90] sm:$0xff]
      %v333 = vld [vmem:[%s313 + $0x98] sm:$0xff]
      %v334 = vld [vmem:[%s313 + $0xa0] sm:$0xff]
      %v335 = vld [vmem:[%s2] sm:$0xf]
      %337 = vset.pattern.permute.xlu0 0
      %338 = vperm.xlu0 %337, %v314
      %v339 = vpop.permute.xlu0 %338
      %342 = vset.pattern.permute.xlu0 0
      %343 = vperm.xlu0 %342, %v315
      %v344 = vpop.permute.xlu0 %343
      %347 = vset.pattern.permute.xlu0 0
      %348 = vperm.xlu0 %347, %v316
      %v349 = vpop.permute.xlu0 %348
      %352 = vset.pattern.permute.xlu0 0
      %353 = vperm.xlu0 %352, %v317
      %v354 = vpop.permute.xlu0 %353
      %357 = vset.pattern.permute.xlu0 0
      %358 = vperm.xlu0 %357, %v318
      %v359 = vpop.permute.xlu0 %358
      %362 = vset.pattern.permute.xlu0 0
      %363 = vperm.xlu0 %362, %v319
      %v364 = vpop.permute.xlu0 %363
      %367 = vset.pattern.permute.xlu0 0
      %368 = vperm.xlu0 %367, %v320
      %v369 = vpop.permute.xlu0 %368
      %372 = vset.pattern.permute.xlu0 0
      %373 = vperm.xlu0 %372, %v321
      %v374 = vpop.permute.xlu0 %373
      %377 = vset.pattern.permute.xlu0 0
      %378 = vperm.xlu0 %377, %v322
      %v379 = vpop.permute.xlu0 %378
      %382 = vset.pattern.permute.xlu0 0
      %383 = vperm.xlu0 %382, %v323
      %v384 = vpop.permute.xlu0 %383
      %387 = vset.pattern.permute.xlu0 0
      %388 = vperm.xlu0 %387, %v324
      %v389 = vpop.permute.xlu0 %388
      %392 = vset.pattern.permute.xlu0 0
      %393 = vperm.xlu0 %392, %v325
      %v394 = vpop.permute.xlu0 %393
      %397 = vset.pattern.permute.xlu0 0
      %398 = vperm.xlu0 %397, %v326
      %v399 = vpop.permute.xlu0 %398
      %402 = vset.pattern.permute.xlu0 0
      %403 = vperm.xlu0 %402, %v327
      %v404 = vpop.permute.xlu0 %403
      %407 = vset.pattern.permute.xlu0 0
      %408 = vperm.xlu0 %407, %v328
      %v409 = vpop.permute.xlu0 %408
      %412 = vset.pattern.permute.xlu0 0
      %413 = vperm.xlu0 %412, %v329
      %v414 = vpop.permute.xlu0 %413
      %417 = vset.pattern.permute.xlu0 0
      %418 = vperm.xlu0 %417, %v330
      %v419 = vpop.permute.xlu0 %418
      %422 = vset.pattern.permute.xlu0 0
      %423 = vperm.xlu0 %422, %v331
      %v424 = vpop.permute.xlu0 %423
      %427 = vset.pattern.permute.xlu0 0
      %428 = vperm.xlu0 %427, %v332
      %v429 = vpop.permute.xlu0 %428
      %432 = vset.pattern.permute.xlu0 0
      %433 = vperm.xlu0 %432, %v333
      %v434 = vpop.permute.xlu0 %433
      %437 = vset.pattern.permute.xlu0 0
      %438 = vperm.xlu0 %437, %v334
      %v439 = vpop.permute.xlu0 %438
      %v441 = vlaneseq
      %v442 = vshrl.u32 %v441, 7
      %v443 = vsub.s32 0, %v442
      %v444 = vrot.slane %v335, %v443
      %v445 = vmul.f32 %v339, %v444
      %v446 = vmul.f32 %v344, %v444
      %v447 = vmul.f32 %v349, %v444
      %v448 = vmul.f32 %v354, %v444
      %v449 = vmul.f32 %v359, %v444
      %v450 = vmul.f32 %v364, %v444
      %v451 = vmul.f32 %v369, %v444
      %v452 = vmul.f32 %v374, %v444
      %v453 = vmul.f32 %v379, %v444
      %v454 = vmul.f32 %v384, %v444
      %v455 = vmul.f32 %v389, %v444
      %v456 = vmul.f32 %v394, %v444
      %v457 = vmul.f32 %v399, %v444
      %v458 = vmul.f32 %v404, %v444
      %v459 = vmul.f32 %v409, %v444
      %v460 = vmul.f32 %v414, %v444
      %v461 = vmul.f32 %v419, %v444
      %v462 = vmul.f32 %v424, %v444
      %v463 = vmul.f32 %v429, %v444
      %v464 = vmul.f32 %v434, %v444
      %v465 = vmul.f32 %v439, %v444
      %466 = vset.pattern.permute.xlu0 1
      %467 = vperm.xlu0 %466, %v314
      %v468 = vpop.permute.xlu0 %467
      %470 = vset.pattern.permute.xlu0 1
      %471 = vperm.xlu0 %470, %v315
      %v472 = vpop.permute.xlu0 %471
      %474 = vset.pattern.permute.xlu0 1
      %475 = vperm.xlu0 %474, %v316
      %v476 = vpop.permute.xlu0 %475
      %478 = vset.pattern.permute.xlu0 1
      %479 = vperm.xlu0 %478, %v317
      %v480 = vpop.permute.xlu0 %479
      %482 = vset.pattern.permute.xlu0 1
      %483 = vperm.xlu0 %482, %v318
      %v484 = vpop.permute.xlu0 %483
      %486 = vset.pattern.permute.xlu0 1
      %487 = vperm.xlu0 %486, %v319
      %v488 = vpop.permute.xlu0 %487
      %490 = vset.pattern.permute.xlu0 1
      %491 = vperm.xlu0 %490, %v320
      %v492 = vpop.permute.xlu0 %491
      %494 = vset.pattern.permute.xlu0 1
      %495 = vperm.xlu0 %494, %v321
      %v496 = vpop.permute.xlu0 %495
      %498 = vset.pattern.permute.xlu0 1
      %499 = vperm.xlu0 %498, %v322
      %v500 = vpop.permute.xlu0 %499
      %502 = vset.pattern.permute.xlu0 1
      %503 = vperm.xlu0 %502, %v323
      %v504 = vpop.permute.xlu0 %503
      %506 = vset.pattern.permute.xlu0 1
      %507 = vperm.xlu0 %506, %v324
      %v508 = vpop.permute.xlu0 %507
      %510 = vset.pattern.permute.xlu0 1
      %511 = vperm.xlu0 %510, %v325
      %v512 = vpop.permute.xlu0 %511
      %514 = vset.pattern.permute.xlu0 1
      %515 = vperm.xlu0 %514, %v326
      %v516 = vpop.permute.xlu0 %515
      %518 = vset.pattern.permute.xlu0 1
      %519 = vperm.xlu0 %518, %v327
      %v520 = vpop.permute.xlu0 %519
      %522 = vset.pattern.permute.xlu0 1
      %523 = vperm.xlu0 %522, %v328
      %v524 = vpop.permute.xlu0 %523
      %526 = vset.pattern.permute.xlu0 1
      %527 = vperm.xlu0 %526, %v329
      %v528 = vpop.permute.xlu0 %527
      %530 = vset.pattern.permute.xlu0 1
      %531 = vperm.xlu0 %530, %v330
      %v532 = vpop.permute.xlu0 %531
      %534 = vset.pattern.permute.xlu0 1
      %535 = vperm.xlu0 %534, %v331
      %v536 = vpop.permute.xlu0 %535
      %538 = vset.pattern.permute.xlu0 1
      %539 = vperm.xlu0 %538, %v332
      %v540 = vpop.permute.xlu0 %539
      %542 = vset.pattern.permute.xlu0 1
      %543 = vperm.xlu0 %542, %v333
      %v544 = vpop.permute.xlu0 %543
      %546 = vset.pattern.permute.xlu0 1
      %547 = vperm.xlu0 %546, %v334
      %v548 = vpop.permute.xlu0 %547
      %v550 = vlaneseq
      %v551 = vshrl.u32 %v550, 7
      %v552 = vsub.s32 1, %v551
      %v553 = vrot.slane %v335, %v552
      %v554 = vmul.f32 %v468, %v553
      %v555 = vmul.f32 %v472, %v553
      %v556 = vmul.f32 %v476, %v553
      %v557 = vmul.f32 %v480, %v553
      %v558 = vmul.f32 %v484, %v553
      %v559 = vmul.f32 %v488, %v553
      %v560 = vmul.f32 %v492, %v553
      %v561 = vmul.f32 %v496, %v553
      %v562 = vmul.f32 %v500, %v553
      %v563 = vmul.f32 %v504, %v553
      %v564 = vmul.f32 %v508, %v553
      %v565 = vmul.f32 %v512, %v553
      %v566 = vmul.f32 %v516, %v553
      %v567 = vmul.f32 %v520, %v553
      %v568 = vmul.f32 %v524, %v553
      %v569 = vmul.f32 %v528, %v553
      %v570 = vmul.f32 %v532, %v553
      %v571 = vmul.f32 %v536, %v553
      %v572 = vmul.f32 %v540, %v553
      %v573 = vmul.f32 %v544, %v553
      %v574 = vmul.f32 %v548, %v553
      %v575 = vadd.f32 %v445, %v554
      %v576 = vadd.f32 %v446, %v555
      %v577 = vadd.f32 %v447, %v556
      %v578 = vadd.f32 %v448, %v557
      %v579 = vadd.f32 %v449, %v558
      %v580 = vadd.f32 %v450, %v559
      %v581 = vadd.f32 %v451, %v560
      %v582 = vadd.f32 %v452, %v561
      %v583 = vadd.f32 %v453, %v562
      %v584 = vadd.f32 %v454, %v563
      %v585 = vadd.f32 %v455, %v564
      %v586 = vadd.f32 %v456, %v565
      %v587 = vadd.f32 %v457, %v566
      %v588 = vadd.f32 %v458, %v567
      %v589 = vadd.f32 %v459, %v568
      %v590 = vadd.f32 %v460, %v569
      %v591 = vadd.f32 %v461, %v570
      %v592 = vadd.f32 %v462, %v571
      %v593 = vadd.f32 %v463, %v572
      %v594 = vadd.f32 %v464, %v573
      %v595 = vadd.f32 %v465, %v574
      %596 = vset.pattern.permute.xlu0 2
      %597 = vperm.xlu0 %596, %v314
      %v598 = vpop.permute.xlu0 %597
      %600 = vset.pattern.permute.xlu0 2
      %601 = vperm.xlu0 %600, %v315
      %v602 = vpop.permute.xlu0 %601
      %604 = vset.pattern.permute.xlu0 2
      %605 = vperm.xlu0 %604, %v316
      %v606 = vpop.permute.xlu0 %605
      %608 = vset.pattern.permute.xlu0 2
      %609 = vperm.xlu0 %608, %v317
      %v610 = vpop.permute.xlu0 %609
      %612 = vset.pattern.permute.xlu0 2
      %613 = vperm.xlu0 %612, %v318
      %v614 = vpop.permute.xlu0 %613
      %616 = vset.pattern.permute.xlu0 2
      %617 = vperm.xlu0 %616, %v319
      %v618 = vpop.permute.xlu0 %617
      %620 = vset.pattern.permute.xlu0 2
      %621 = vperm.xlu0 %620, %v320
      %v622 = vpop.permute.xlu0 %621
      %624 = vset.pattern.permute.xlu0 2
      %625 = vperm.xlu0 %624, %v321
      %v626 = vpop.permute.xlu0 %625
      %628 = vset.pattern.permute.xlu0 2
      %629 = vperm.xlu0 %628, %v322
      %v630 = vpop.permute.xlu0 %629
      %632 = vset.pattern.permute.xlu0 2
      %633 = vperm.xlu0 %632, %v323
      %v634 = vpop.permute.xlu0 %633
      %636 = vset.pattern.permute.xlu0 2
      %637 = vperm.xlu0 %636, %v324
      %v638 = vpop.permute.xlu0 %637
      %640 = vset.pattern.permute.xlu0 2
      %641 = vperm.xlu0 %640, %v325
      %v642 = vpop.permute.xlu0 %641
      %644 = vset.pattern.permute.xlu0 2
      %645 = vperm.xlu0 %644, %v326
      %v646 = vpop.permute.xlu0 %645
      %648 = vset.pattern.permute.xlu0 2
      %649 = vperm.xlu0 %648, %v327
      %v650 = vpop.permute.xlu0 %649
      %652 = vset.pattern.permute.xlu0 2
      %653 = vperm.xlu0 %652, %v328
      %v654 = vpop.permute.xlu0 %653
      %656 = vset.pattern.permute.xlu0 2
      %657 = vperm.xlu0 %656, %v329
      %v658 = vpop.permute.xlu0 %657
      %660 = vset.pattern.permute.xlu0 2
      %661 = vperm.xlu0 %660, %v330
      %v662 = vpop.permute.xlu0 %661
      %664 = vset.pattern.permute.xlu0 2
      %665 = vperm.xlu0 %664, %v331
      %v666 = vpop.permute.xlu0 %665
      %668 = vset.pattern.permute.xlu0 2
      %669 = vperm.xlu0 %668, %v332
      %v670 = vpop.permute.xlu0 %669
      %672 = vset.pattern.permute.xlu0 2
      %673 = vperm.xlu0 %672, %v333
      %v674 = vpop.permute.xlu0 %673
      %676 = vset.pattern.permute.xlu0 2
      %677 = vperm.xlu0 %676, %v334
      %v678 = vpop.permute.xlu0 %677
      %v680 = vlaneseq
      %v681 = vshrl.u32 %v680, 7
      %v682 = vsub.s32 2, %v681
      %v683 = vrot.slane %v335, %v682
      %v684 = vmul.f32 %v598, %v683
      %v685 = vmul.f32 %v602, %v683
      %v686 = vmul.f32 %v606, %v683
      %v687 = vmul.f32 %v610, %v683
      %v688 = vmul.f32 %v614, %v683
      %v689 = vmul.f32 %v618, %v683
      %v690 = vmul.f32 %v622, %v683
      %v691 = vmul.f32 %v626, %v683
      %v692 = vmul.f32 %v630, %v683
      %v693 = vmul.f32 %v634, %v683
      %v694 = vmul.f32 %v638, %v683
      %v695 = vmul.f32 %v642, %v683
      %v696 = vmul.f32 %v646, %v683
      %v697 = vmul.f32 %v650, %v683
      %v698 = vmul.f32 %v654, %v683
      %v699 = vmul.f32 %v658, %v683
      %v700 = vmul.f32 %v662, %v683
      %v701 = vmul.f32 %v666, %v683
      %v702 = vmul.f32 %v670, %v683
      %v703 = vmul.f32 %v674, %v683
      %v704 = vmul.f32 %v678, %v683
      %v705 = vadd.f32 %v575, %v684
      %v706 = vadd.f32 %v576, %v685
      %v707 = vadd.f32 %v577, %v686
      %v708 = vadd.f32 %v578, %v687
      %v709 = vadd.f32 %v579, %v688
      %v710 = vadd.f32 %v580, %v689
      %v711 = vadd.f32 %v581, %v690
      %v712 = vadd.f32 %v582, %v691
      %v713 = vadd.f32 %v583, %v692
      %v714 = vadd.f32 %v584, %v693
      %v715 = vadd.f32 %v585, %v694
      %v716 = vadd.f32 %v586, %v695
      %v717 = vadd.f32 %v587, %v696
      %v718 = vadd.f32 %v588, %v697
      %v719 = vadd.f32 %v589, %v698
      %v720 = vadd.f32 %v590, %v699
      %v721 = vadd.f32 %v591, %v700
      %v722 = vadd.f32 %v592, %v701
      %v723 = vadd.f32 %v593, %v702
      %v724 = vadd.f32 %v594, %v703
      %v725 = vadd.f32 %v595, %v704
      %726 = vset.pattern.permute.xlu0 3
      %727 = vperm.xlu0 %726, %v314
      %v728 = vpop.permute.xlu0 %727
      %730 = vset.pattern.permute.xlu0 3
      %731 = vperm.xlu0 %730, %v315
      %v732 = vpop.permute.xlu0 %731
      %734 = vset.pattern.permute.xlu0 3
      %735 = vperm.xlu0 %734, %v316
      %v736 = vpop.permute.xlu0 %735
      %738 = vset.pattern.permute.xlu0 3
      %739 = vperm.xlu0 %738, %v317
      %v740 = vpop.permute.xlu0 %739
      %742 = vset.pattern.permute.xlu0 3
      %743 = vperm.xlu0 %742, %v318
      %v744 = vpop.permute.xlu0 %743
      %746 = vset.pattern.permute.xlu0 3
      %747 = vperm.xlu0 %746, %v319
      %v748 = vpop.permute.xlu0 %747
      %750 = vset.pattern.permute.xlu0 3
      %751 = vperm.xlu0 %750, %v320
      %v752 = vpop.permute.xlu0 %751
      %754 = vset.pattern.permute.xlu0 3
      %755 = vperm.xlu0 %754, %v321
      %v756 = vpop.permute.xlu0 %755
      %758 = vset.pattern.permute.xlu0 3
      %759 = vperm.xlu0 %758, %v322
      %v760 = vpop.permute.xlu0 %759
      %762 = vset.pattern.permute.xlu0 3
      %763 = vperm.xlu0 %762, %v323
      %v764 = vpop.permute.xlu0 %763
      %766 = vset.pattern.permute.xlu0 3
      %767 = vperm.xlu0 %766, %v324
      %v768 = vpop.permute.xlu0 %767
      %770 = vset.pattern.permute.xlu0 3
      %771 = vperm.xlu0 %770, %v325
      %v772 = vpop.permute.xlu0 %771
      %774 = vset.pattern.permute.xlu0 3
      %775 = vperm.xlu0 %774, %v326
      %v776 = vpop.permute.xlu0 %775
      %778 = vset.pattern.permute.xlu0 3
      %779 = vperm.xlu0 %778, %v327
      %v780 = vpop.permute.xlu0 %779
      %782 = vset.pattern.permute.xlu0 3
      %783 = vperm.xlu0 %782, %v328
      %v784 = vpop.permute.xlu0 %783
      %786 = vset.pattern.permute.xlu0 3
      %787 = vperm.xlu0 %786, %v329
      %v788 = vpop.permute.xlu0 %787
      %790 = vset.pattern.permute.xlu0 3
      %791 = vperm.xlu0 %790, %v330
      %v792 = vpop.permute.xlu0 %791
      %794 = vset.pattern.permute.xlu0 3
      %795 = vperm.xlu0 %794, %v331
      %v796 = vpop.permute.xlu0 %795
      %798 = vset.pattern.permute.xlu0 3
      %799 = vperm.xlu0 %798, %v332
      %v800 = vpop.permute.xlu0 %799
      %802 = vset.pattern.permute.xlu0 3
      %803 = vperm.xlu0 %802, %v333
      %v804 = vpop.permute.xlu0 %803
      %806 = vset.pattern.permute.xlu0 3
      %807 = vperm.xlu0 %806, %v334
      %v808 = vpop.permute.xlu0 %807
      %v810 = vlaneseq
      %v811 = vshrl.u32 %v810, 7
      %v812 = vsub.s32 3, %v811
      %v813 = vrot.slane %v335, %v812
      %v814 = vmul.f32 %v728, %v813
      %v815 = vmul.f32 %v732, %v813
      %v816 = vmul.f32 %v736, %v813
      %v817 = vmul.f32 %v740, %v813
      %v818 = vmul.f32 %v744, %v813
      %v819 = vmul.f32 %v748, %v813
      %v820 = vmul.f32 %v752, %v813
      %v821 = vmul.f32 %v756, %v813
      %v822 = vmul.f32 %v760, %v813
      %v823 = vmul.f32 %v764, %v813
      %v824 = vmul.f32 %v768, %v813
      %v825 = vmul.f32 %v772, %v813
      %v826 = vmul.f32 %v776, %v813
      %v827 = vmul.f32 %v780, %v813
      %v828 = vmul.f32 %v784, %v813
      %v829 = vmul.f32 %v788, %v813
      %v830 = vmul.f32 %v792, %v813
      %v831 = vmul.f32 %v796, %v813
      %v832 = vmul.f32 %v800, %v813
      %v833 = vmul.f32 %v804, %v813
      %v834 = vmul.f32 %v808, %v813
      %v835 = vadd.f32 %v705, %v814
      %v836 = vadd.f32 %v706, %v815
      %v837 = vadd.f32 %v707, %v816
      %v838 = vadd.f32 %v708, %v817
      %v839 = vadd.f32 %v709, %v818
      %v840 = vadd.f32 %v710, %v819
      %v841 = vadd.f32 %v711, %v820
      %v842 = vadd.f32 %v712, %v821
      %v843 = vadd.f32 %v713, %v822
      %v844 = vadd.f32 %v714, %v823
      %v845 = vadd.f32 %v715, %v824
      %v846 = vadd.f32 %v716, %v825
      %v847 = vadd.f32 %v717, %v826
      %v848 = vadd.f32 %v718, %v827
      %v849 = vadd.f32 %v719, %v828
      %v850 = vadd.f32 %v720, %v829
      %v851 = vadd.f32 %v721, %v830
      %v852 = vadd.f32 %v722, %v831
      %v853 = vadd.f32 %v723, %v832
      %v854 = vadd.f32 %v724, %v833
      %v855 = vadd.f32 %v725, %v834
      %vm877 = vcmask 1046528
      %v878 = vrot.slane %v835, 1
      %v879 = vrot.slane %v836, 1
      %v880 = vsel %vm877, %v878, %v879
      %v881 = vrot.slane %v837, 1
      %v882 = vsel %vm877, %v879, %v881
      %v883 = vrot.slane %v838, 1
      %v884 = vsel %vm877, %v881, %v883
      %v885 = vrot.slane %v839, 1
      %v886 = vsel %vm877, %v883, %v885
      %v887 = vrot.slane %v840, 1
      %v888 = vsel %vm877, %v885, %v887
      %v889 = vrot.slane %v841, 1
      %v890 = vsel %vm877, %v887, %v889
      %v891 = vrot.slane %v842, 1
      %v892 = vsel %vm877, %v889, %v891
      %v893 = vrot.slane %v843, 1
      %v894 = vsel %vm877, %v891, %v893
      %v895 = vrot.slane %v844, 1
      %v896 = vsel %vm877, %v893, %v895
      %v897 = vrot.slane %v845, 1
      %v898 = vsel %vm877, %v895, %v897
      %v899 = vrot.slane %v846, 1
      %v900 = vsel %vm877, %v897, %v899
      %v901 = vrot.slane %v847, 1
      %v902 = vsel %vm877, %v899, %v901
      %v903 = vrot.slane %v848, 1
      %v904 = vsel %vm877, %v901, %v903
      %v905 = vrot.slane %v849, 1
      %v906 = vsel %vm877, %v903, %v905
      %v907 = vrot.slane %v850, 1
      %v908 = vsel %vm877, %v905, %v907
      %v909 = vrot.slane %v851, 1
      %v910 = vsel %vm877, %v907, %v909
      %v911 = vrot.slane %v852, 1
      %v912 = vsel %vm877, %v909, %v911
      %v913 = vrot.slane %v853, 1
      %v914 = vsel %vm877, %v911, %v913
      %v915 = vrot.slane %v854, 1
      %v916 = vsel %vm877, %v913, %v915
      %v917 = vrot.slane %v855, 1
      %v918 = vsel %vm877, %v915, %v917
      %919 = vrot.lane.b32.xlu0 %v880, 32
      %v920 = vpop.permute.xlu0 %919
      %921 = vrot.lane.b32.xlu0 %v882, 32
      %v922 = vpop.permute.xlu0 %921
      %923 = vrot.lane.b32.xlu0 %v884, 32
      %v924 = vpop.permute.xlu0 %923
      %925 = vrot.lane.b32.xlu0 %v886, 32
      %v926 = vpop.permute.xlu0 %925
      %927 = vrot.lane.b32.xlu0 %v888, 32
      %v928 = vpop.permute.xlu0 %927
      %929 = vrot.lane.b32.xlu0 %v890, 32
      %v930 = vpop.permute.xlu0 %929
      %931 = vrot.lane.b32.xlu0 %v892, 32
      %v932 = vpop.permute.xlu0 %931
      %933 = vrot.lane.b32.xlu0 %v894, 32
      %v934 = vpop.permute.xlu0 %933
      %935 = vrot.lane.b32.xlu0 %v896, 32
      %v936 = vpop.permute.xlu0 %935
      %937 = vrot.lane.b32.xlu0 %v898, 32
      %v938 = vpop.permute.xlu0 %937
      %939 = vrot.lane.b32.xlu0 %v900, 32
      %v940 = vpop.permute.xlu0 %939
      %941 = vrot.lane.b32.xlu0 %v902, 32
      %v942 = vpop.permute.xlu0 %941
      %943 = vrot.lane.b32.xlu0 %v904, 32
      %v944 = vpop.permute.xlu0 %943
      %945 = vrot.lane.b32.xlu0 %v906, 32
      %v946 = vpop.permute.xlu0 %945
      %947 = vrot.lane.b32.xlu0 %v908, 32
      %v948 = vpop.permute.xlu0 %947
      %949 = vrot.lane.b32.xlu0 %v910, 32
      %v950 = vpop.permute.xlu0 %949
      %951 = vrot.lane.b32.xlu0 %v912, 32
      %v952 = vpop.permute.xlu0 %951
      %953 = vrot.lane.b32.xlu0 %v914, 32
      %v954 = vpop.permute.xlu0 %953
      %955 = vrot.lane.b32.xlu0 %v916, 32
      %v956 = vpop.permute.xlu0 %955
      %957 = vrot.lane.b32.xlu0 %v918, 32
      %v958 = vpop.permute.xlu0 %957
      %vm979 = vcmask 1045504
      %v980 = vrot.slane %v835, 2
      %v981 = vrot.slane %v836, 2
      %v982 = vsel %vm979, %v980, %v981
      %v983 = vrot.slane %v837, 2
      %v984 = vsel %vm979, %v981, %v983
      %v985 = vrot.slane %v838, 2
      %v986 = vsel %vm979, %v983, %v985
      %v987 = vrot.slane %v839, 2
      %v988 = vsel %vm979, %v985, %v987
      %v989 = vrot.slane %v840, 2
      %v990 = vsel %vm979, %v987, %v989
      %v991 = vrot.slane %v841, 2
      %v992 = vsel %vm979, %v989, %v991
      %v993 = vrot.slane %v842, 2
      %v994 = vsel %vm979, %v991, %v993
      %v995 = vrot.slane %v843, 2
      %v996 = vsel %vm979, %v993, %v995
      %v997 = vrot.slane %v844, 2
      %v998 = vsel %vm979, %v995, %v997
      %v999 = vrot.slane %v845, 2
      %v1000 = vsel %vm979, %v997, %v999
      %v1001 = vrot.slane %v846, 2
      %v1002 = vsel %vm979, %v999, %v1001
      %v1003 = vrot.slane %v847, 2
      %v1004 = vsel %vm979, %v1001, %v1003
      %v1005 = vrot.slane %v848, 2
      %v1006 = vsel %vm979, %v1003, %v1005
      %v1007 = vrot.slane %v849, 2
      %v1008 = vsel %vm979, %v1005, %v1007
      %v1009 = vrot.slane %v850, 2
      %v1010 = vsel %vm979, %v1007, %v1009
      %v1011 = vrot.slane %v851, 2
      %v1012 = vsel %vm979, %v1009, %v1011
      %v1013 = vrot.slane %v852, 2
      %v1014 = vsel %vm979, %v1011, %v1013
      %v1015 = vrot.slane %v853, 2
      %v1016 = vsel %vm979, %v1013, %v1015
      %v1017 = vrot.slane %v854, 2
      %v1018 = vsel %vm979, %v1015, %v1017
      %v1019 = vrot.slane %v855, 2
      %v1020 = vsel %vm979, %v1017, %v1019
      %1021 = vrot.lane.b32.xlu0 %v982, 64
      %v1022 = vpop.permute.xlu0 %1021
      %1023 = vrot.lane.b32.xlu0 %v984, 64
      %v1024 = vpop.permute.xlu0 %1023
      %1025 = vrot.lane.b32.xlu0 %v986, 64
      %v1026 = vpop.permute.xlu0 %1025
      %1027 = vrot.lane.b32.xlu0 %v988, 64
      %v1028 = vpop.permute.xlu0 %1027
      %1029 = vrot.lane.b32.xlu0 %v990, 64
      %v1030 = vpop.permute.xlu0 %1029
      %1031 = vrot.lane.b32.xlu0 %v992, 64
      %v1032 = vpop.permute.xlu0 %1031
      %1033 = vrot.lane.b32.xlu0 %v994, 64
      %v1034 = vpop.permute.xlu0 %1033
      %1035 = vrot.lane.b32.xlu0 %v996, 64
      %v1036 = vpop.permute.xlu0 %1035
      %1037 = vrot.lane.b32.xlu0 %v998, 64
      %v1038 = vpop.permute.xlu0 %1037
      %1039 = vrot.lane.b32.xlu0 %v1000, 64
      %v1040 = vpop.permute.xlu0 %1039
      %1041 = vrot.lane.b32.xlu0 %v1002, 64
      %v1042 = vpop.permute.xlu0 %1041
      %1043 = vrot.lane.b32.xlu0 %v1004, 64
      %v1044 = vpop.permute.xlu0 %1043
      %1045 = vrot.lane.b32.xlu0 %v1006, 64
      %v1046 = vpop.permute.xlu0 %1045
      %1047 = vrot.lane.b32.xlu0 %v1008, 64
      %v1048 = vpop.permute.xlu0 %1047
      %1049 = vrot.lane.b32.xlu0 %v1010, 64
      %v1050 = vpop.permute.xlu0 %1049
      %1051 = vrot.lane.b32.xlu0 %v1012, 64
      %v1052 = vpop.permute.xlu0 %1051
      %1053 = vrot.lane.b32.xlu0 %v1014, 64
      %v1054 = vpop.permute.xlu0 %1053
      %1055 = vrot.lane.b32.xlu0 %v1016, 64
      %v1056 = vpop.permute.xlu0 %1055
      %1057 = vrot.lane.b32.xlu0 %v1018, 64
      %v1058 = vpop.permute.xlu0 %1057
      %1059 = vrot.lane.b32.xlu0 %v1020, 64
      %v1060 = vpop.permute.xlu0 %1059
      %vm1081 = vcmask 1044480
      %v1082 = vrot.slane %v835, 3
      %v1083 = vrot.slane %v836, 3
      %v1084 = vsel %vm1081, %v1082, %v1083
      %v1085 = vrot.slane %v837, 3
      %v1086 = vsel %vm1081, %v1083, %v1085
      %v1087 = vrot.slane %v838, 3
      %v1088 = vsel %vm1081, %v1085, %v1087
      %v1089 = vrot.slane %v839, 3
      %v1090 = vsel %vm1081, %v1087, %v1089
      %v1091 = vrot.slane %v840, 3
      %v1092 = vsel %vm1081, %v1089, %v1091
      %v1093 = vrot.slane %v841, 3
      %v1094 = vsel %vm1081, %v1091, %v1093
      %v1095 = vrot.slane %v842, 3
      %v1096 = vsel %vm1081, %v1093, %v1095
      %v1097 = vrot.slane %v843, 3
      %v1098 = vsel %vm1081, %v1095, %v1097
      %v1099 = vrot.slane %v844, 3
      %v1100 = vsel %vm1081, %v1097, %v1099
      %v1101 = vrot.slane %v845, 3
      %v1102 = vsel %vm1081, %v1099, %v1101
      %v1103 = vrot.slane %v846, 3
      %v1104 = vsel %vm1081, %v1101, %v1103
      %v1105 = vrot.slane %v847, 3
      %v1106 = vsel %vm1081, %v1103, %v1105
      %v1107 = vrot.slane %v848, 3
      %v1108 = vsel %vm1081, %v1105, %v1107
      %v1109 = vrot.slane %v849, 3
      %v1110 = vsel %vm1081, %v1107, %v1109
      %v1111 = vrot.slane %v850, 3
      %v1112 = vsel %vm1081, %v1109, %v1111
      %v1113 = vrot.slane %v851, 3
      %v1114 = vsel %vm1081, %v1111, %v1113
      %v1115 = vrot.slane %v852, 3
      %v1116 = vsel %vm1081, %v1113, %v1115
      %v1117 = vrot.slane %v853, 3
      %v1118 = vsel %vm1081, %v1115, %v1117
      %v1119 = vrot.slane %v854, 3
      %v1120 = vsel %vm1081, %v1117, %v1119
      %v1121 = vrot.slane %v855, 3
      %v1122 = vsel %vm1081, %v1119, %v1121
      %1123 = vrot.lane.b32.xlu0 %v1084, 96
      %v1124 = vpop.permute.xlu0 %1123
      %1125 = vrot.lane.b32.xlu0 %v1086, 96
      %v1126 = vpop.permute.xlu0 %1125
      %1127 = vrot.lane.b32.xlu0 %v1088, 96
      %v1128 = vpop.permute.xlu0 %1127
      %1129 = vrot.lane.b32.xlu0 %v1090, 96
      %v1130 = vpop.permute.xlu0 %1129
      %1131 = vrot.lane.b32.xlu0 %v1092, 96
      %v1132 = vpop.permute.xlu0 %1131
      %1133 = vrot.lane.b32.xlu0 %v1094, 96
      %v1134 = vpop.permute.xlu0 %1133
      %1135 = vrot.lane.b32.xlu0 %v1096, 96
      %v1136 = vpop.permute.xlu0 %1135
      %1137 = vrot.lane.b32.xlu0 %v1098, 96
      %v1138 = vpop.permute.xlu0 %1137
      %1139 = vrot.lane.b32.xlu0 %v1100, 96
      %v1140 = vpop.permute.xlu0 %1139
      %1141 = vrot.lane.b32.xlu0 %v1102, 96
      %v1142 = vpop.permute.xlu0 %1141
      %1143 = vrot.lane.b32.xlu0 %v1104, 96
      %v1144 = vpop.permute.xlu0 %1143
      %1145 = vrot.lane.b32.xlu0 %v1106, 96
      %v1146 = vpop.permute.xlu0 %1145
      %1147 = vrot.lane.b32.xlu0 %v1108, 96
      %v1148 = vpop.permute.xlu0 %1147
      %1149 = vrot.lane.b32.xlu0 %v1110, 96
      %v1150 = vpop.permute.xlu0 %1149
      %1151 = vrot.lane.b32.xlu0 %v1112, 96
      %v1152 = vpop.permute.xlu0 %1151
      %1153 = vrot.lane.b32.xlu0 %v1114, 96
      %v1154 = vpop.permute.xlu0 %1153
      %1155 = vrot.lane.b32.xlu0 %v1116, 96
      %v1156 = vpop.permute.xlu0 %1155
      %1157 = vrot.lane.b32.xlu0 %v1118, 96
      %v1158 = vpop.permute.xlu0 %1157
      %1159 = vrot.lane.b32.xlu0 %v1120, 96
      %v1160 = vpop.permute.xlu0 %1159
      %1161 = vrot.lane.b32.xlu0 %v1122, 96
      %v1162 = vpop.permute.xlu0 %1161
      %vm1183 = vcmask 1043456
      %v1184 = vrot.slane %v835, 4
      %v1185 = vrot.slane %v836, 4
      %v1186 = vsel %vm1183, %v1184, %v1185
      %v1187 = vrot.slane %v837, 4
      %v1188 = vsel %vm1183, %v1185, %v1187
      %v1189 = vrot.slane %v838, 4
      %v1190 = vsel %vm1183, %v1187, %v1189
      %v1191 = vrot.slane %v839, 4
      %v1192 = vsel %vm1183, %v1189, %v1191
      %v1193 = vrot.slane %v840, 4
      %v1194 = vsel %vm1183, %v1191, %v1193
      %v1195 = vrot.slane %v841, 4
      %v1196 = vsel %vm1183, %v1193, %v1195
      %v1197 = vrot.slane %v842, 4
      %v1198 = vsel %vm1183, %v1195, %v1197
      %v1199 = vrot.slane %v843, 4
      %v1200 = vsel %vm1183, %v1197, %v1199
      %v1201 = vrot.slane %v844, 4
      %v1202 = vsel %vm1183, %v1199, %v1201
      %v1203 = vrot.slane %v845, 4
      %v1204 = vsel %vm1183, %v1201, %v1203
      %v1205 = vrot.slane %v846, 4
      %v1206 = vsel %vm1183, %v1203, %v1205
      %v1207 = vrot.slane %v847, 4
      %v1208 = vsel %vm1183, %v1205, %v1207
      %v1209 = vrot.slane %v848, 4
      %v1210 = vsel %vm1183, %v1207, %v1209
      %v1211 = vrot.slane %v849, 4
      %v1212 = vsel %vm1183, %v1209, %v1211
      %v1213 = vrot.slane %v850, 4
      %v1214 = vsel %vm1183, %v1211, %v1213
      %v1215 = vrot.slane %v851, 4
      %v1216 = vsel %vm1183, %v1213, %v1215
      %v1217 = vrot.slane %v852, 4
      %v1218 = vsel %vm1183, %v1215, %v1217
      %v1219 = vrot.slane %v853, 4
      %v1220 = vsel %vm1183, %v1217, %v1219
      %v1221 = vrot.slane %v854, 4
      %v1222 = vsel %vm1183, %v1219, %v1221
      %v1223 = vrot.slane %v855, 4
      %v1224 = vsel %vm1183, %v1221, %v1223
      %vm1245 = vcmask 1042432
      %v1246 = vrot.slane %v835, 5
      %v1247 = vrot.slane %v836, 5
      %v1248 = vsel %vm1245, %v1246, %v1247
      %v1249 = vrot.slane %v837, 5
      %v1250 = vsel %vm1245, %v1247, %v1249
      %v1251 = vrot.slane %v838, 5
      %v1252 = vsel %vm1245, %v1249, %v1251
      %v1253 = vrot.slane %v839, 5
      %v1254 = vsel %vm1245, %v1251, %v1253
      %v1255 = vrot.slane %v840, 5
      %v1256 = vsel %vm1245, %v1253, %v1255
      %v1257 = vrot.slane %v841, 5
      %v1258 = vsel %vm1245, %v1255, %v1257
      %v1259 = vrot.slane %v842, 5
      %v1260 = vsel %vm1245, %v1257, %v1259
      %v1261 = vrot.slane %v843, 5
      %v1262 = vsel %vm1245, %v1259, %v1261
      %v1263 = vrot.slane %v844, 5
      %v1264 = vsel %vm1245, %v1261, %v1263
      %v1265 = vrot.slane %v845, 5
      %v1266 = vsel %vm1245, %v1263, %v1265
      %v1267 = vrot.slane %v846, 5
      %v1268 = vsel %vm1245, %v1265, %v1267
      %v1269 = vrot.slane %v847, 5
      %v1270 = vsel %vm1245, %v1267, %v1269
      %v1271 = vrot.slane %v848, 5
      %v1272 = vsel %vm1245, %v1269, %v1271
      %v1273 = vrot.slane %v849, 5
      %v1274 = vsel %vm1245, %v1271, %v1273
      %v1275 = vrot.slane %v850, 5
      %v1276 = vsel %vm1245, %v1273, %v1275
      %v1277 = vrot.slane %v851, 5
      %v1278 = vsel %vm1245, %v1275, %v1277
      %v1279 = vrot.slane %v852, 5
      %v1280 = vsel %vm1245, %v1277, %v1279
      %v1281 = vrot.slane %v853, 5
      %v1282 = vsel %vm1245, %v1279, %v1281
      %v1283 = vrot.slane %v854, 5
      %v1284 = vsel %vm1245, %v1281, %v1283
      %v1285 = vrot.slane %v855, 5
      %v1286 = vsel %vm1245, %v1283, %v1285
      %1287 = vrot.lane.b32.xlu0 %v1248, 32
      %v1288 = vpop.permute.xlu0 %1287
      %1289 = vrot.lane.b32.xlu0 %v1250, 32
      %v1290 = vpop.permute.xlu0 %1289
      %1291 = vrot.lane.b32.xlu0 %v1252, 32
      %v1292 = vpop.permute.xlu0 %1291
      %1293 = vrot.lane.b32.xlu0 %v1254, 32
      %v1294 = vpop.permute.xlu0 %1293
      %1295 = vrot.lane.b32.xlu0 %v1256, 32
      %v1296 = vpop.permute.xlu0 %1295
      %1297 = vrot.lane.b32.xlu0 %v1258, 32
      %v1298 = vpop.permute.xlu0 %1297
      %1299 = vrot.lane.b32.xlu0 %v1260, 32
      %v1300 = vpop.permute.xlu0 %1299
      %1301 = vrot.lane.b32.xlu0 %v1262, 32
      %v1302 = vpop.permute.xlu0 %1301
      %1303 = vrot.lane.b32.xlu0 %v1264, 32
      %v1304 = vpop.permute.xlu0 %1303
      %1305 = vrot.lane.b32.xlu0 %v1266, 32
      %v1306 = vpop.permute.xlu0 %1305
      %1307 = vrot.lane.b32.xlu0 %v1268, 32
      %v1308 = vpop.permute.xlu0 %1307
      %1309 = vrot.lane.b32.xlu0 %v1270, 32
      %v1310 = vpop.permute.xlu0 %1309
      %1311 = vrot.lane.b32.xlu0 %v1272, 32
      %v1312 = vpop.permute.xlu0 %1311
      %1313 = vrot.lane.b32.xlu0 %v1274, 32
      %v1314 = vpop.permute.xlu0 %1313
      %1315 = vrot.lane.b32.xlu0 %v1276, 32
      %v1316 = vpop.permute.xlu0 %1315
      %1317 = vrot.lane.b32.xlu0 %v1278, 32
      %v1318 = vpop.permute.xlu0 %1317
      %1319 = vrot.lane.b32.xlu0 %v1280, 32
      %v1320 = vpop.permute.xlu0 %1319
      %1321 = vrot.lane.b32.xlu0 %v1282, 32
      %v1322 = vpop.permute.xlu0 %1321
      %1323 = vrot.lane.b32.xlu0 %v1284, 32
      %v1324 = vpop.permute.xlu0 %1323
      %1325 = vrot.lane.b32.xlu0 %v1286, 32
      %v1326 = vpop.permute.xlu0 %1325
      %vm1347 = vcmask 1041408
      %v1348 = vrot.slane %v835, 6
      %v1349 = vrot.slane %v836, 6
      %v1350 = vsel %vm1347, %v1348, %v1349
      %v1351 = vrot.slane %v837, 6
      %v1352 = vsel %vm1347, %v1349, %v1351
      %v1353 = vrot.slane %v838, 6
      %v1354 = vsel %vm1347, %v1351, %v1353
      %v1355 = vrot.slane %v839, 6
      %v1356 = vsel %vm1347, %v1353, %v1355
      %v1357 = vrot.slane %v840, 6
      %v1358 = vsel %vm1347, %v1355, %v1357
      %v1359 = vrot.slane %v841, 6
      %v1360 = vsel %vm1347, %v1357, %v1359
      %v1361 = vrot.slane %v842, 6
      %v1362 = vsel %vm1347, %v1359, %v1361
      %v1363 = vrot.slane %v843, 6
      %v1364 = vsel %vm1347, %v1361, %v1363
      %v1365 = vrot.slane %v844, 6
      %v1366 = vsel %vm1347, %v1363, %v1365
      %v1367 = vrot.slane %v845, 6
      %v1368 = vsel %vm1347, %v1365, %v1367
      %v1369 = vrot.slane %v846, 6
      %v1370 = vsel %vm1347, %v1367, %v1369
      %v1371 = vrot.slane %v847, 6
      %v1372 = vsel %vm1347, %v1369, %v1371
      %v1373 = vrot.slane %v848, 6
      %v1374 = vsel %vm1347, %v1371, %v1373
      %v1375 = vrot.slane %v849, 6
      %v1376 = vsel %vm1347, %v1373, %v1375
      %v1377 = vrot.slane %v850, 6
      %v1378 = vsel %vm1347, %v1375, %v1377
      %v1379 = vrot.slane %v851, 6
      %v1380 = vsel %vm1347, %v1377, %v1379
      %v1381 = vrot.slane %v852, 6
      %v1382 = vsel %vm1347, %v1379, %v1381
      %v1383 = vrot.slane %v853, 6
      %v1384 = vsel %vm1347, %v1381, %v1383
      %v1385 = vrot.slane %v854, 6
      %v1386 = vsel %vm1347, %v1383, %v1385
      %v1387 = vrot.slane %v855, 6
      %v1388 = vsel %vm1347, %v1385, %v1387
      %1389 = vrot.lane.b32.xlu0 %v1350, 64
      %v1390 = vpop.permute.xlu0 %1389
      %1391 = vrot.lane.b32.xlu0 %v1352, 64
      %v1392 = vpop.permute.xlu0 %1391
      %1393 = vrot.lane.b32.xlu0 %v1354, 64
      %v1394 = vpop.permute.xlu0 %1393
      %1395 = vrot.lane.b32.xlu0 %v1356, 64
      %v1396 = vpop.permute.xlu0 %1395
      %1397 = vrot.lane.b32.xlu0 %v1358, 64
      %v1398 = vpop.permute.xlu0 %1397
      %1399 = vrot.lane.b32.xlu0 %v1360, 64
      %v1400 = vpop.permute.xlu0 %1399
      %1401 = vrot.lane.b32.xlu0 %v1362, 64
      %v1402 = vpop.permute.xlu0 %1401
      %1403 = vrot.lane.b32.xlu0 %v1364, 64
      %v1404 = vpop.permute.xlu0 %1403
      %1405 = vrot.lane.b32.xlu0 %v1366, 64
      %v1406 = vpop.permute.xlu0 %1405
      %1407 = vrot.lane.b32.xlu0 %v1368, 64
      %v1408 = vpop.permute.xlu0 %1407
      %1409 = vrot.lane.b32.xlu0 %v1370, 64
      %v1410 = vpop.permute.xlu0 %1409
      %1411 = vrot.lane.b32.xlu0 %v1372, 64
      %v1412 = vpop.permute.xlu0 %1411
      %1413 = vrot.lane.b32.xlu0 %v1374, 64
      %v1414 = vpop.permute.xlu0 %1413
      %1415 = vrot.lane.b32.xlu0 %v1376, 64
      %v1416 = vpop.permute.xlu0 %1415
      %1417 = vrot.lane.b32.xlu0 %v1378, 64
      %v1418 = vpop.permute.xlu0 %1417
      %1419 = vrot.lane.b32.xlu0 %v1380, 64
      %v1420 = vpop.permute.xlu0 %1419
      %1421 = vrot.lane.b32.xlu0 %v1382, 64
      %v1422 = vpop.permute.xlu0 %1421
      %1423 = vrot.lane.b32.xlu0 %v1384, 64
      %v1424 = vpop.permute.xlu0 %1423
      %1425 = vrot.lane.b32.xlu0 %v1386, 64
      %v1426 = vpop.permute.xlu0 %1425
      %1427 = vrot.lane.b32.xlu0 %v1388, 64
      %v1428 = vpop.permute.xlu0 %1427
      %vm1449 = vcmask 1040384
      %v1450 = vrot.slane %v835, 7
      %v1451 = vrot.slane %v836, 7
      %v1452 = vsel %vm1449, %v1450, %v1451
      %v1453 = vrot.slane %v837, 7
      %v1454 = vsel %vm1449, %v1451, %v1453
      %v1455 = vrot.slane %v838, 7
      %v1456 = vsel %vm1449, %v1453, %v1455
      %v1457 = vrot.slane %v839, 7
      %v1458 = vsel %vm1449, %v1455, %v1457
      %v1459 = vrot.slane %v840, 7
      %v1460 = vsel %vm1449, %v1457, %v1459
      %v1461 = vrot.slane %v841, 7
      %v1462 = vsel %vm1449, %v1459, %v1461
      %v1463 = vrot.slane %v842, 7
      %v1464 = vsel %vm1449, %v1461, %v1463
      %v1465 = vrot.slane %v843, 7
      %v1466 = vsel %vm1449, %v1463, %v1465
      %v1467 = vrot.slane %v844, 7
      %v1468 = vsel %vm1449, %v1465, %v1467
      %v1469 = vrot.slane %v845, 7
      %v1470 = vsel %vm1449, %v1467, %v1469
      %v1471 = vrot.slane %v846, 7
      %v1472 = vsel %vm1449, %v1469, %v1471
      %v1473 = vrot.slane %v847, 7
      %v1474 = vsel %vm1449, %v1471, %v1473
      %v1475 = vrot.slane %v848, 7
      %v1476 = vsel %vm1449, %v1473, %v1475
      %v1477 = vrot.slane %v849, 7
      %v1478 = vsel %vm1449, %v1475, %v1477
      %v1479 = vrot.slane %v850, 7
      %v1480 = vsel %vm1449, %v1477, %v1479
      %v1481 = vrot.slane %v851, 7
      %v1482 = vsel %vm1449, %v1479, %v1481
      %v1483 = vrot.slane %v852, 7
      %v1484 = vsel %vm1449, %v1481, %v1483
      %v1485 = vrot.slane %v853, 7
      %v1486 = vsel %vm1449, %v1483, %v1485
      %v1487 = vrot.slane %v854, 7
      %v1488 = vsel %vm1449, %v1485, %v1487
      %v1489 = vrot.slane %v855, 7
      %v1490 = vsel %vm1449, %v1487, %v1489
      %1491 = vrot.lane.b32.xlu0 %v1452, 96
      %v1492 = vpop.permute.xlu0 %1491
      %1493 = vrot.lane.b32.xlu0 %v1454, 96
      %v1494 = vpop.permute.xlu0 %1493
      %1495 = vrot.lane.b32.xlu0 %v1456, 96
      %v1496 = vpop.permute.xlu0 %1495
      %1497 = vrot.lane.b32.xlu0 %v1458, 96
      %v1498 = vpop.permute.xlu0 %1497
      %1499 = vrot.lane.b32.xlu0 %v1460, 96
      %v1500 = vpop.permute.xlu0 %1499
      %1501 = vrot.lane.b32.xlu0 %v1462, 96
      %v1502 = vpop.permute.xlu0 %1501
      %1503 = vrot.lane.b32.xlu0 %v1464, 96
      %v1504 = vpop.permute.xlu0 %1503
      %1505 = vrot.lane.b32.xlu0 %v1466, 96
      %v1506 = vpop.permute.xlu0 %1505
      %1507 = vrot.lane.b32.xlu0 %v1468, 96
      %v1508 = vpop.permute.xlu0 %1507
      %1509 = vrot.lane.b32.xlu0 %v1470, 96
      %v1510 = vpop.permute.xlu0 %1509
      %1511 = vrot.lane.b32.xlu0 %v1472, 96
      %v1512 = vpop.permute.xlu0 %1511
      %1513 = vrot.lane.b32.xlu0 %v1474, 96
      %v1514 = vpop.permute.xlu0 %1513
      %1515 = vrot.lane.b32.xlu0 %v1476, 96
      %v1516 = vpop.permute.xlu0 %1515
      %1517 = vrot.lane.b32.xlu0 %v1478, 96
      %v1518 = vpop.permute.xlu0 %1517
      %1519 = vrot.lane.b32.xlu0 %v1480, 96
      %v1520 = vpop.permute.xlu0 %1519
      %1521 = vrot.lane.b32.xlu0 %v1482, 96
      %v1522 = vpop.permute.xlu0 %1521
      %1523 = vrot.lane.b32.xlu0 %v1484, 96
      %v1524 = vpop.permute.xlu0 %1523
      %1525 = vrot.lane.b32.xlu0 %v1486, 96
      %v1526 = vpop.permute.xlu0 %1525
      %1527 = vrot.lane.b32.xlu0 %v1488, 96
      %v1528 = vpop.permute.xlu0 %1527
      %1529 = vrot.lane.b32.xlu0 %v1490, 96
      %v1530 = vpop.permute.xlu0 %1529
      %vm1551 = vcmask 261120
      %v1552 = vsel %vm1551, %v835, %v920
      %v1553 = vsel %vm1551, %v836, %v922
      %v1554 = vsel %vm1551, %v837, %v924
      %v1555 = vsel %vm1551, %v838, %v926
      %v1556 = vsel %vm1551, %v839, %v928
      %v1557 = vsel %vm1551, %v840, %v930
      %v1558 = vsel %vm1551, %v841, %v932
      %v1559 = vsel %vm1551, %v842, %v934
      %v1560 = vsel %vm1551, %v843, %v936
      %v1561 = vsel %vm1551, %v844, %v938
      %v1562 = vsel %vm1551, %v845, %v940
      %v1563 = vsel %vm1551, %v846, %v942
      %v1564 = vsel %vm1551, %v847, %v944
      %v1565 = vsel %vm1551, %v848, %v946
      %v1566 = vsel %vm1551, %v849, %v948
      %v1567 = vsel %vm1551, %v850, %v950
      %v1568 = vsel %vm1551, %v851, %v952
      %v1569 = vsel %vm1551, %v852, %v954
      %v1570 = vsel %vm1551, %v853, %v956
      %v1571 = vsel %vm1551, %v854, %v958
      %vm1572 = vcmask 523264
      %v1573 = vsel %vm1572, %v1552, %v1022
      %v1574 = vsel %vm1572, %v1553, %v1024
      %v1575 = vsel %vm1572, %v1554, %v1026
      %v1576 = vsel %vm1572, %v1555, %v1028
      %v1577 = vsel %vm1572, %v1556, %v1030
      %v1578 = vsel %vm1572, %v1557, %v1032
      %v1579 = vsel %vm1572, %v1558, %v1034
      %v1580 = vsel %vm1572, %v1559, %v1036
      %v1581 = vsel %vm1572, %v1560, %v1038
      %v1582 = vsel %vm1572, %v1561, %v1040
      %v1583 = vsel %vm1572, %v1562, %v1042
      %v1584 = vsel %vm1572, %v1563, %v1044
      %v1585 = vsel %vm1572, %v1564, %v1046
      %v1586 = vsel %vm1572, %v1565, %v1048
      %v1587 = vsel %vm1572, %v1566, %v1050
      %v1588 = vsel %vm1572, %v1567, %v1052
      %v1589 = vsel %vm1572, %v1568, %v1054
      %v1590 = vsel %vm1572, %v1569, %v1056
      %v1591 = vsel %vm1572, %v1570, %v1058
      %v1592 = vsel %vm1572, %v1571, %v1060
      %vm1593 = vcmask 785408
      %v1594 = vsel %vm1593, %v1573, %v1124
      %v1595 = vsel %vm1593, %v1574, %v1126
      %v1596 = vsel %vm1593, %v1575, %v1128
      %v1597 = vsel %vm1593, %v1576, %v1130
      %v1598 = vsel %vm1593, %v1577, %v1132
      %v1599 = vsel %vm1593, %v1578, %v1134
      %v1600 = vsel %vm1593, %v1579, %v1136
      %v1601 = vsel %vm1593, %v1580, %v1138
      %v1602 = vsel %vm1593, %v1581, %v1140
      %v1603 = vsel %vm1593, %v1582, %v1142
      %v1604 = vsel %vm1593, %v1583, %v1144
      %v1605 = vsel %vm1593, %v1584, %v1146
      %v1606 = vsel %vm1593, %v1585, %v1148
      %v1607 = vsel %vm1593, %v1586, %v1150
      %v1608 = vsel %vm1593, %v1587, %v1152
      %v1609 = vsel %vm1593, %v1588, %v1154
      %v1610 = vsel %vm1593, %v1589, %v1156
      %v1611 = vsel %vm1593, %v1590, %v1158
      %v1612 = vsel %vm1593, %v1591, %v1160
      %v1613 = vsel %vm1593, %v1592, %v1162
      %v1614 = vsel %vm1551, %v1186, %v1288
      %v1615 = vsel %vm1551, %v1188, %v1290
      %v1616 = vsel %vm1551, %v1190, %v1292
      %v1617 = vsel %vm1551, %v1192, %v1294
      %v1618 = vsel %vm1551, %v1194, %v1296
      %v1619 = vsel %vm1551, %v1196, %v1298
      %v1620 = vsel %vm1551, %v1198, %v1300
      %v1621 = vsel %vm1551, %v1200, %v1302
      %v1622 = vsel %vm1551, %v1202, %v1304
      %v1623 = vsel %vm1551, %v1204, %v1306
      %v1624 = vsel %vm1551, %v1206, %v1308
      %v1625 = vsel %vm1551, %v1208, %v1310
      %v1626 = vsel %vm1551, %v1210, %v1312
      %v1627 = vsel %vm1551, %v1212, %v1314
      %v1628 = vsel %vm1551, %v1214, %v1316
      %v1629 = vsel %vm1551, %v1216, %v1318
      %v1630 = vsel %vm1551, %v1218, %v1320
      %v1631 = vsel %vm1551, %v1220, %v1322
      %v1632 = vsel %vm1551, %v1222, %v1324
      %v1633 = vsel %vm1551, %v1224, %v1326
      %v1634 = vsel %vm1572, %v1614, %v1390
      %v1635 = vsel %vm1572, %v1615, %v1392
      %v1636 = vsel %vm1572, %v1616, %v1394
      %v1637 = vsel %vm1572, %v1617, %v1396
      %v1638 = vsel %vm1572, %v1618, %v1398
      %v1639 = vsel %vm1572, %v1619, %v1400
      %v1640 = vsel %vm1572, %v1620, %v1402
      %v1641 = vsel %vm1572, %v1621, %v1404
      %v1642 = vsel %vm1572, %v1622, %v1406
      %v1643 = vsel %vm1572, %v1623, %v1408
      %v1644 = vsel %vm1572, %v1624, %v1410
      %v1645 = vsel %vm1572, %v1625, %v1412
      %v1646 = vsel %vm1572, %v1626, %v1414
      %v1647 = vsel %vm1572, %v1627, %v1416
      %v1648 = vsel %vm1572, %v1628, %v1418
      %v1649 = vsel %vm1572, %v1629, %v1420
      %v1650 = vsel %vm1572, %v1630, %v1422
      %v1651 = vsel %vm1572, %v1631, %v1424
      %v1652 = vsel %vm1572, %v1632, %v1426
      %v1653 = vsel %vm1572, %v1633, %v1428
      %v1654 = vsel %vm1593, %v1634, %v1492
      %v1655 = vsel %vm1593, %v1635, %v1494
      %v1656 = vsel %vm1593, %v1636, %v1496
      %v1657 = vsel %vm1593, %v1637, %v1498
      %v1658 = vsel %vm1593, %v1638, %v1500
      %v1659 = vsel %vm1593, %v1639, %v1502
      %v1660 = vsel %vm1593, %v1640, %v1504
      %v1661 = vsel %vm1593, %v1641, %v1506
      %v1662 = vsel %vm1593, %v1642, %v1508
      %v1663 = vsel %vm1593, %v1643, %v1510
      %v1664 = vsel %vm1593, %v1644, %v1512
      %v1665 = vsel %vm1593, %v1645, %v1514
      %v1666 = vsel %vm1593, %v1646, %v1516
      %v1667 = vsel %vm1593, %v1647, %v1518
      %v1668 = vsel %vm1593, %v1648, %v1520
      %v1669 = vsel %vm1593, %v1649, %v1522
      %v1670 = vsel %vm1593, %v1650, %v1524
      %v1671 = vsel %vm1593, %v1651, %v1526
      %v1672 = vsel %vm1593, %v1652, %v1528
      %v1673 = vsel %vm1593, %v1653, %v1530
      %v1674 = vpack.c.bf16 %v1595, %v1594
      %v1675 = vpack.c.bf16 %v1655, %v1654
      %v1676 = vpack.c.bf16 %v1597, %v1596
      %v1677 = vpack.c.bf16 %v1657, %v1656
      %v1678 = vpack.c.bf16 %v1599, %v1598
      %v1679 = vpack.c.bf16 %v1659, %v1658
      %v1680 = vpack.c.bf16 %v1601, %v1600
      %v1681 = vpack.c.bf16 %v1661, %v1660
      %v1682 = vpack.c.bf16 %v1603, %v1602
      %v1683 = vpack.c.bf16 %v1663, %v1662
      %v1684 = vpack.c.bf16 %v1605, %v1604
      %v1685 = vpack.c.bf16 %v1665, %v1664
      %v1686 = vpack.c.bf16 %v1607, %v1606
      %v1687 = vpack.c.bf16 %v1667, %v1666
      %v1688 = vpack.c.bf16 %v1609, %v1608
      %v1689 = vpack.c.bf16 %v1669, %v1668
      %v1690 = vpack.c.bf16 %v1611, %v1610
      %v1691 = vpack.c.bf16 %v1671, %v1670
      %v1692 = vpack.c.bf16 %v1613, %v1612
      %v1693 = vpack.c.bf16 %v1673, %v1672
      %v1694 = vld [vmem:[%s3] sm:$0xf]
      %v1695 = vld [vmem:[%s3 + $0x4] sm:$0xf]
      %v1696 = vld [vmem:[%s3 + $0x8] sm:$0xf]
      %v1697 = vld [vmem:[%s3 + $0xc] sm:$0xf]
      %v1698 = vld [vmem:[%s3 + $0x10] sm:$0xf]
      %v1699 = vld [vmem:[%s3 + $0x14] sm:$0xf]
      %v1700 = vld [vmem:[%s3 + $0x18] sm:$0xf]
      %v1701 = vld [vmem:[%s3 + $0x1c] sm:$0xf]
      %v1702 = vld [vmem:[%s3 + $0x20] sm:$0xf]
      %v1703 = vld [vmem:[%s3 + $0x24] sm:$0xf]
      %v1704 = vld [vmem:[%s3 + $0x28] sm:$0xf]
      %v1705 = vld [vmem:[%s3 + $0x2c] sm:$0xf]
      %v1706 = vld [vmem:[%s3 + $0x30] sm:$0xf]
      %v1707 = vld [vmem:[%s3 + $0x34] sm:$0xf]
      %v1708 = vld [vmem:[%s3 + $0x38] sm:$0xf]
      %v1709 = vld [vmem:[%s3 + $0x3c] sm:$0xf]
      %v1710 = vld [vmem:[%s3 + $0x40] sm:$0xf]
      %v1711 = vld [vmem:[%s3 + $0x44] sm:$0xf]
      %v1712 = vld [vmem:[%s3 + $0x48] sm:$0xf]
      %v1713 = vld [vmem:[%s3 + $0x4c] sm:$0xf]
      %v1714 = vld [vmem:[%s3 + $0x50] sm:$0xf]
      %v1715 = vld [vmem:[%s3 + $0x54] sm:$0xf]
      %v1716 = vld [vmem:[%s3 + $0x58] sm:$0xf]
      %v1717 = vld [vmem:[%s3 + $0x5c] sm:$0xf]
      %v1718 = vld [vmem:[%s3 + $0x60] sm:$0xf]
      %v1719 = vld [vmem:[%s3 + $0x64] sm:$0xf]
      %v1720 = vld [vmem:[%s3 + $0x68] sm:$0xf]
      %v1721 = vld [vmem:[%s3 + $0x6c] sm:$0xf]
      %v1722 = vld [vmem:[%s3 + $0x70] sm:$0xf]
      %v1723 = vld [vmem:[%s3 + $0x74] sm:$0xf]
      %v1724 = vld [vmem:[%s3 + $0x78] sm:$0xf]
      %v1725 = vld [vmem:[%s3 + $0x7c] sm:$0xf]
      %s1726 = scalar_lea.vmem %s3, 128
      %v1727 = vld [vmem:[%s1726] sm:$0xf]
      %v1728 = vld [vmem:[%s1726 + $0x4] sm:$0xf]
      %v1729 = vld [vmem:[%s1726 + $0x8] sm:$0xf]
      %v1730 = vld [vmem:[%s1726 + $0xc] sm:$0xf]
      %v1731 = vld [vmem:[%s1726 + $0x10] sm:$0xf]
      %v1732 = vld [vmem:[%s1726 + $0x14] sm:$0xf]
      %v1733 = vld [vmem:[%s1726 + $0x18] sm:$0xf]
      %v1734 = vld [vmem:[%s1726 + $0x1c] sm:$0xf]
      %v1735 = vld [vmem:[%s1726 + $0x20] sm:$0xf]
      %v1736 = vld [vmem:[%s1726 + $0x24] sm:$0xf]
      %v1737 = vld [vmem:[%s1726 + $0x28] sm:$0xf]
      %v1738 = vld [vmem:[%s1726 + $0x2c] sm:$0xf]
      %v1739 = vld [vmem:[%s1726 + $0x30] sm:$0xf]
      %v1740 = vld [vmem:[%s1726 + $0x34] sm:$0xf]
      %v1741 = vld [vmem:[%s1726 + $0x38] sm:$0xf]
      %v1742 = vld [vmem:[%s1726 + $0x3c] sm:$0xf]
      %v1743 = vld [vmem:[%s1726 + $0x40] sm:$0xf]
      %v1744 = vld [vmem:[%s1726 + $0x44] sm:$0xf]
      %v1745 = vld [vmem:[%s1726 + $0x48] sm:$0xf]
      %v1746 = vld [vmem:[%s1726 + $0x4c] sm:$0xf]
      %v1747 = vld [vmem:[%s1726 + $0x50] sm:$0xf]
      %v1748 = vld [vmem:[%s1726 + $0x54] sm:$0xf]
      %v1749 = vld [vmem:[%s1726 + $0x58] sm:$0xf]
      %v1750 = vld [vmem:[%s1726 + $0x5c] sm:$0xf]
      %v1751 = vld [vmem:[%s1726 + $0x60] sm:$0xf]
      %v1752 = vld [vmem:[%s1726 + $0x64] sm:$0xf]
      %v1753 = vld [vmem:[%s1726 + $0x68] sm:$0xf]
      %v1754 = vld [vmem:[%s1726 + $0x6c] sm:$0xf]
      %v1755 = vld [vmem:[%s1726 + $0x70] sm:$0xf]
      %v1756 = vld [vmem:[%s1726 + $0x74] sm:$0xf]
      %v1757 = vld [vmem:[%s1726 + $0x78] sm:$0xf]
      %v1758 = vld [vmem:[%s1726 + $0x7c] sm:$0xf]
      %vm1777 = vcmask 1043456
      %v1778 = vrot.slane %v1674, 4
      %v1779 = vrot.slane %v1676, 4
      %v1780 = vsel %vm1777, %v1778, %v1779
      %v1781 = vrot.slane %v1675, 4
      %v1782 = vrot.slane %v1677, 4
      %v1783 = vsel %vm1777, %v1781, %v1782
      %v1784 = vrot.slane %v1678, 4
      %v1785 = vsel %vm1777, %v1779, %v1784
      %v1786 = vrot.slane %v1679, 4
      %v1787 = vsel %vm1777, %v1782, %v1786
      %v1788 = vrot.slane %v1680, 4
      %v1789 = vsel %vm1777, %v1784, %v1788
      %v1790 = vrot.slane %v1681, 4
      %v1791 = vsel %vm1777, %v1786, %v1790
      %v1792 = vrot.slane %v1682, 4
      %v1793 = vsel %vm1777, %v1788, %v1792
      %v1794 = vrot.slane %v1683, 4
      %v1795 = vsel %vm1777, %v1790, %v1794
      %v1796 = vrot.slane %v1684, 4
      %v1797 = vsel %vm1777, %v1792, %v1796
      %v1798 = vrot.slane %v1685, 4
      %v1799 = vsel %vm1777, %v1794, %v1798
      %v1800 = vrot.slane %v1686, 4
      %v1801 = vsel %vm1777, %v1796, %v1800
      %v1802 = vrot.slane %v1687, 4
      %v1803 = vsel %vm1777, %v1798, %v1802
      %v1804 = vrot.slane %v1688, 4
      %v1805 = vsel %vm1777, %v1800, %v1804
      %v1806 = vrot.slane %v1689, 4
      %v1807 = vsel %vm1777, %v1802, %v1806
      %v1808 = vrot.slane %v1690, 4
      %v1809 = vsel %vm1777, %v1804, %v1808
      %v1810 = vrot.slane %v1691, 4
      %v1811 = vsel %vm1777, %v1806, %v1810
      %v1860 = vunpack.c.l.b16 %v1727
      %v1861 = vunpack.c.l.b16 %v1728
      %v1862 = vunpack.c.l.b16 %v1729
      %v1863 = vunpack.c.l.b16 %v1730
      %v1864 = vunpack.c.l.b16 %v1731
      %v1865 = vunpack.c.l.b16 %v1732
      %v1866 = vunpack.c.l.b16 %v1733
      %v1867 = vunpack.c.l.b16 %v1734
      %v1868 = vunpack.c.l.b16 %v1735
      %v1869 = vunpack.c.l.b16 %v1736
      %v1870 = vunpack.c.l.b16 %v1737
      %v1871 = vunpack.c.l.b16 %v1738
      %v1872 = vunpack.c.l.b16 %v1739
      %v1873 = vunpack.c.l.b16 %v1740
      %v1874 = vunpack.c.l.b16 %v1741
      %v1875 = vunpack.c.l.b16 %v1742
      %v1876 = vunpack.c.l.b16 %v1743
      %v1877 = vunpack.c.l.b16 %v1744
      %v1878 = vunpack.c.l.b16 %v1745
      %v1879 = vunpack.c.l.b16 %v1746
      %v1880 = vunpack.c.l.b16 %v1747
      %v1881 = vunpack.c.l.b16 %v1748
      %v1882 = vunpack.c.l.b16 %v1749
      %v1883 = vunpack.c.l.b16 %v1750
      %v1884 = vunpack.c.l.b16 %v1751
      %v1885 = vunpack.c.l.b16 %v1752
      %v1886 = vunpack.c.l.b16 %v1753
      %v1887 = vunpack.c.l.b16 %v1754
      %v1888 = vunpack.c.l.b16 %v1755
      %v1889 = vunpack.c.l.b16 %v1756
      %v1890 = vunpack.c.l.b16 %v1757
      %v1891 = vunpack.c.l.b16 %v1758
      %v1892 = vpack.c.b16 %v1861, %v1860
      %v1893 = vpack.c.b16 %v1863, %v1862
      %v1894 = vpack.c.b16 %v1865, %v1864
      %v1895 = vpack.c.b16 %v1867, %v1866
      %v1896 = vpack.c.b16 %v1869, %v1868
      %v1897 = vpack.c.b16 %v1871, %v1870
      %v1898 = vpack.c.b16 %v1873, %v1872
      %v1899 = vpack.c.b16 %v1875, %v1874
      %v1900 = vpack.c.b16 %v1877, %v1876
      %v1901 = vpack.c.b16 %v1879, %v1878
      %v1902 = vpack.c.b16 %v1881, %v1880
      %v1903 = vpack.c.b16 %v1883, %v1882
      %v1904 = vpack.c.b16 %v1885, %v1884
      %v1905 = vpack.c.b16 %v1887, %v1886
      %v1906 = vpack.c.b16 %v1889, %v1888
      %v1907 = vpack.c.b16 %v1891, %v1890
      %1924 = vmatprep.subr.bf16.mxu0 0
      %1925 = vmatpush1.bf16.msra.mxu0 %v1892
      %1926 = vmatprep.subr.bf16.mxu0 0
      %1927 = vmatpush1.bf16.msra.mxu0 %v1893
      %1928 = vmatprep.subr.bf16.mxu0 0
      %1929 = vmatpush1.bf16.msra.mxu0 %v1894
      %1930 = vmatprep.subr.bf16.mxu0 0
      %1931 = vmatpush1.bf16.msra.mxu0 %v1895
      %1932 = vmatprep.subr.bf16.mxu0 0
      %1933 = vmatpush1.bf16.msra.mxu0 %v1896
      %1934 = vmatprep.subr.bf16.mxu0 0
      %1935 = vmatpush1.bf16.msra.mxu0 %v1897
      %1936 = vmatprep.subr.bf16.mxu0 0
      %1937 = vmatpush1.bf16.msra.mxu0 %v1898
      %1938 = vmatprep.subr.bf16.mxu0 0
      %1939 = vmatpush1.bf16.msra.mxu0 %v1899
      %1940 = vmatprep.subr.bf16.mxu0 0
      %1941 = vmatpush1.bf16.msra.mxu0 %v1900
      %1942 = vmatprep.subr.bf16.mxu0 0
      %1943 = vmatpush1.bf16.msra.mxu0 %v1901
      %1944 = vmatprep.subr.bf16.mxu0 0
      %1945 = vmatpush1.bf16.msra.mxu0 %v1902
      %1946 = vmatprep.subr.bf16.mxu0 0
      %1947 = vmatpush1.bf16.msra.mxu0 %v1903
      %1948 = vmatprep.subr.bf16.mxu0 0
      %1949 = vmatpush1.bf16.msra.mxu0 %v1904
      %1950 = vmatprep.subr.bf16.mxu0 0
      %1951 = vmatpush1.bf16.msra.mxu0 %v1905
      %1952 = vmatprep.subr.bf16.mxu0 0
      %1953 = vmatpush1.bf16.msra.mxu0 %v1906
      %1954 = vmatprep.subr.bf16.mxu0 0
      %1955 = vmatpush1.bf16.msra.mxu0 %v1907
      %1956 = vmatprep.mubr.bf16.mxu0 %v1783
      %1957 = vmatmul.mubr.bf16.gmra.mrb[0].mxu0 %v1780
      %v1958 = vpop.f32.mrb[0].mxu0
      %v1959 = vadd.f32 0.0, %v1958
      %v1960 = vpop.f32.mrb[0].mxu0
      %v1961 = vpop.f32.mrb[0].mxu0
      %v1962 = vadd.f32 0.0, %v1961
      %v1963 = vpop.f32.mrb[0].mxu0
      %1964 = vmatprep.mubr.bf16.mxu0 %v1787
      %1965 = vmatmul.mubr.bf16.gmra.mrb[0].mxu0 %v1785
      %v1966 = vpop.f32.mrb[0].mxu0
      %v1967 = vadd.f32 0.0, %v1966
      %v1968 = vpop.f32.mrb[0].mxu0
      %v1969 = vpop.f32.mrb[0].mxu0
      %v1970 = vadd.f32 0.0, %v1969
      %v1971 = vpop.f32.mrb[0].mxu0
      %1972 = vmatprep.mubr.bf16.mxu0 %v1791
      %1973 = vmatmul.mubr.bf16.gmra.mrb[0].mxu0 %v1789
      %v1974 = vpop.f32.mrb[0].mxu0
      %v1975 = vadd.f32 0.0, %v1974
      %v1976 = vpop.f32.mrb[0].mxu0
      %v1977 = vpop.f32.mrb[0].mxu0
      %v1978 = vadd.f32 0.0, %v1977
      %v1979 = vpop.f32.mrb[0].mxu0
      %1980 = vmatprep.mubr.bf16.mxu0 %v1795
      %1981 = vmatmul.mubr.bf16.gmra.mrb[0].mxu0 %v1793
      %v1982 = vpop.f32.mrb[0].mxu0
      %v1983 = vadd.f32 0.0, %v1982
      %v1984 = vpop.f32.mrb[0].mxu0
      %v1985 = vpop.f32.mrb[0].mxu0
      %v1986 = vadd.f32 0.0, %v1985
      %v1987 = vpop.f32.mrb[0].mxu0
      %1988 = vmatprep.mubr.bf16.mxu0 %v1799
      %1989 = vmatmul.mubr.bf16.gmra.mrb[0].mxu0 %v1797
      %v1990 = vpop.f32.mrb[0].mxu0
      %v1991 = vadd.f32 0.0, %v1990
      %v1992 = vpop.f32.mrb[0].mxu0
      %v1993 = vpop.f32.mrb[0].mxu0
      %v1994 = vadd.f32 0.0, %v1993
      %v1995 = vpop.f32.mrb[0].mxu0
      %1996 = vmatprep.mubr.bf16.mxu0 %v1803
      %1997 = vmatmul.mubr.bf16.gmra.mrb[0].mxu0 %v1801
      %v1998 = vpop.f32.mrb[0].mxu0
      %v1999 = vadd.f32 0.0, %v1998
      %v2000 = vpop.f32.mrb[0].mxu0
      %v2001 = vpop.f32.mrb[0].mxu0
      %v2002 = vadd.f32 0.0, %v2001
      %v2003 = vpop.f32.mrb[0].mxu0
      %2004 = vmatprep.mubr.bf16.mxu0 %v1807
      %2005 = vmatmul.mubr.bf16.gmra.mrb[0].mxu0 %v1805
      %v2006 = vpop.f32.mrb[0].mxu0
      %v2007 = vadd.f32 0.0, %v2006
      %v2008 = vpop.f32.mrb[0].mxu0
      %v2009 = vpop.f32.mrb[0].mxu0
      %v2010 = vadd.f32 0.0, %v2009
      %v2011 = vpop.f32.mrb[0].mxu0
      %2012 = vmatprep.mubr.bf16.mxu0 %v1811
      %2013 = vmatmul.mubr.bf16.gmra.mrb[0].mxu0 %v1809
      %v2014 = vpop.f32.mrb[0].mxu0
      %v2015 = vadd.f32 0.0, %v2014
      %v2016 = vpop.f32.mrb[0].mxu0
      %v2017 = vpop.f32.mrb[0].mxu0
      %v2018 = vadd.f32 0.0, %v2017
      %v2019 = vpop.f32.mrb[0].mxu0
      %2020 = vdwg.mxu0
      %v2053 = vunpack.c.l.b16 %v1694
      %v2054 = vunpack.c.l.b16 %v1695
      %v2055 = vunpack.c.l.b16 %v1696
      %v2056 = vunpack.c.l.b16 %v1697
      %v2057 = vunpack.c.l.b16 %v1698
      %v2058 = vunpack.c.l.b16 %v1699
      %v2059 = vunpack.c.l.b16 %v1700
      %v2060 = vunpack.c.l.b16 %v1701
      %v2061 = vunpack.c.l.b16 %v1702
      %v2062 = vunpack.c.l.b16 %v1703
      %v2063 = vunpack.c.l.b16 %v1704
      %v2064 = vunpack.c.l.b16 %v1705
      %v2065 = vunpack.c.l.b16 %v1706
      %v2066 = vunpack.c.l.b16 %v1707
      %v2067 = vunpack.c.l.b16 %v1708
      %v2068 = vunpack.c.l.b16 %v1709
      %v2069 = vunpack.c.l.b16 %v1710
      %v2070 = vunpack.c.l.b16 %v1711
      %v2071 = vunpack.c.l.b16 %v1712
      %v2072 = vunpack.c.l.b16 %v1713
      %v2073 = vunpack.c.l.b16 %v1714
      %v2074 = vunpack.c.l.b16 %v1715
      %v2075 = vunpack.c.l.b16 %v1716
      %v2076 = vunpack.c.l.b16 %v1717
      %v2077 = vunpack.c.l.b16 %v1718
      %v2078 = vunpack.c.l.b16 %v1719
      %v2079 = vunpack.c.l.b16 %v1720
      %v2080 = vunpack.c.l.b16 %v1721
      %v2081 = vunpack.c.l.b16 %v1722
      %v2082 = vunpack.c.l.b16 %v1723
      %v2083 = vunpack.c.l.b16 %v1724
      %v2084 = vunpack.c.l.b16 %v1725
      %v2085 = vpack.c.b16 %v2054, %v2053
      %v2086 = vpack.c.b16 %v2056, %v2055
      %v2087 = vpack.c.b16 %v2058, %v2057
      %v2088 = vpack.c.b16 %v2060, %v2059
      %v2089 = vpack.c.b16 %v2062, %v2061
      %v2090 = vpack.c.b16 %v2064, %v2063
      %v2091 = vpack.c.b16 %v2066, %v2065
      %v2092 = vpack.c.b16 %v2068, %v2067
      %v2093 = vpack.c.b16 %v2070, %v2069
      %v2094 = vpack.c.b16 %v2072, %v2071
      %v2095 = vpack.c.b16 %v2074, %v2073
      %v2096 = vpack.c.b16 %v2076, %v2075
      %v2097 = vpack.c.b16 %v2078, %v2077
      %v2098 = vpack.c.b16 %v2080, %v2079
      %v2099 = vpack.c.b16 %v2082, %v2081
      %v2100 = vpack.c.b16 %v2084, %v2083
      %2117 = vmatprep.subr.bf16.mxu0 0
      %2118 = vmatpush1.bf16.msra.mxu0 %v2085
      %2119 = vmatprep.subr.bf16.mxu0 0
      %2120 = vmatpush1.bf16.msra.mxu0 %v2086
      %2121 = vmatprep.subr.bf16.mxu0 0
      %2122 = vmatpush1.bf16.msra.mxu0 %v2087
      %2123 = vmatprep.subr.bf16.mxu0 0
      %2124 = vmatpush1.bf16.msra.mxu0 %v2088
      %2125 = vmatprep.subr.bf16.mxu0 0
      %2126 = vmatpush1.bf16.msra.mxu0 %v2089
      %2127 = vmatprep.subr.bf16.mxu0 0
      %2128 = vmatpush1.bf16.msra.mxu0 %v2090
      %2129 = vmatprep.subr.bf16.mxu0 0
      %2130 = vmatpush1.bf16.msra.mxu0 %v2091
      %2131 = vmatprep.subr.bf16.mxu0 0
      %2132 = vmatpush1.bf16.msra.mxu0 %v2092
      %2133 = vmatprep.subr.bf16.mxu0 0
      %2134 = vmatpush1.bf16.msra.mxu0 %v2093
      %2135 = vmatprep.subr.bf16.mxu0 0
      %2136 = vmatpush1.bf16.msra.mxu0 %v2094
      %2137 = vmatprep.subr.bf16.mxu0 0
      %2138 = vmatpush1.bf16.msra.mxu0 %v2095
      %2139 = vmatprep.subr.bf16.mxu0 0
      %2140 = vmatpush1.bf16.msra.mxu0 %v2096
      %2141 = vmatprep.subr.bf16.mxu0 0
      %2142 = vmatpush1.bf16.msra.mxu0 %v2097
      %2143 = vmatprep.subr.bf16.mxu0 0
      %2144 = vmatpush1.bf16.msra.mxu0 %v2098
      %2145 = vmatprep.subr.bf16.mxu0 0
      %2146 = vmatpush1.bf16.msra.mxu0 %v2099
      %2147 = vmatprep.subr.bf16.mxu0 0
      %2148 = vmatpush1.bf16.msra.mxu0 %v2100
      %2149 = vmatprep.mubr.bf16.mxu0 %v1675
      %2150 = vmatmul.mubr.bf16.gmra.mrb[0].mxu0 %v1674
      %v2151 = vpop.f32.mrb[0].mxu0
      %v2152 = vadd.f32 %v1959, %v2151
      %v2153 = vpop.f32.mrb[0].mxu0
      %v2154 = vpop.f32.mrb[0].mxu0
      %v2155 = vadd.f32 %v1962, %v2154
      %v2156 = vpop.f32.mrb[0].mxu0
      %2157 = vmatprep.mubr.bf16.mxu0 %v1677
      %2158 = vmatmul.mubr.bf16.gmra.mrb[0].mxu0 %v1676
      %v2159 = vpop.f32.mrb[0].mxu0
      %v2160 = vadd.f32 %v1967, %v2159
      %v2161 = vpop.f32.mrb[0].mxu0
      %v2162 = vpop.f32.mrb[0].mxu0
      %v2163 = vadd.f32 %v1970, %v2162
      %v2164 = vpop.f32.mrb[0].mxu0
      %2165 = vmatprep.mubr.bf16.mxu0 %v1679
      %2166 = vmatmul.mubr.bf16.gmra.mrb[0].mxu0 %v1678
      %v2167 = vpop.f32.mrb[0].mxu0
      %v2168 = vadd.f32 %v1975, %v2167
      %v2169 = vpop.f32.mrb[0].mxu0
      %v2170 = vpop.f32.mrb[0].mxu0
      %v2171 = vadd.f32 %v1978, %v2170
      %v2172 = vpop.f32.mrb[0].mxu0
      %2173 = vmatprep.mubr.bf16.mxu0 %v1681
      %2174 = vmatmul.mubr.bf16.gmra.mrb[0].mxu0 %v1680
      %v2175 = vpop.f32.mrb[0].mxu0
      %v2176 = vadd.f32 %v1983, %v2175
      %v2177 = vpop.f32.mrb[0].mxu0
      %v2178 = vpop.f32.mrb[0].mxu0
      %v2179 = vadd.f32 %v1986, %v2178
      %v2180 = vpop.f32.mrb[0].mxu0
      %2181 = vmatprep.mubr.bf16.mxu0 %v1683
      %2182 = vmatmul.mubr.bf16.gmra.mrb[0].mxu0 %v1682
      %v2183 = vpop.f32.mrb[0].mxu0
      %v2184 = vadd.f32 %v1991, %v2183
      %v2185 = vpop.f32.mrb[0].mxu0
      %v2186 = vpop.f32.mrb[0].mxu0
      %v2187 = vadd.f32 %v1994, %v2186
      %v2188 = vpop.f32.mrb[0].mxu0
      %2189 = vmatprep.mubr.bf16.mxu0 %v1685
      %2190 = vmatmul.mubr.bf16.gmra.mrb[0].mxu0 %v1684
      %v2191 = vpop.f32.mrb[0].mxu0
      %v2192 = vadd.f32 %v1999, %v2191
      %v2193 = vpop.f32.mrb[0].mxu0
      %v2194 = vpop.f32.mrb[0].mxu0
      %v2195 = vadd.f32 %v2002, %v2194
      %v2196 = vpop.f32.mrb[0].mxu0
      %2197 = vmatprep.mubr.bf16.mxu0 %v1687
      %2198 = vmatmul.mubr.bf16.gmra.mrb[0].mxu0 %v1686
      %v2199 = vpop.f32.mrb[0].mxu0
      %v2200 = vadd.f32 %v2007, %v2199
      %v2201 = vpop.f32.mrb[0].mxu0
      %v2202 = vpop.f32.mrb[0].mxu0
      %v2203 = vadd.f32 %v2010, %v2202
      %v2204 = vpop.f32.mrb[0].mxu0
      %2205 = vmatprep.mubr.bf16.mxu0 %v1689
      %2206 = vmatmul.mubr.bf16.gmra.mrb[0].mxu0 %v1688
      %v2207 = vpop.f32.mrb[0].mxu0
      %v2208 = vadd.f32 %v2015, %v2207
      %v2209 = vpop.f32.mrb[0].mxu0
      %v2210 = vpop.f32.mrb[0].mxu0
      %v2211 = vadd.f32 %v2018, %v2210
      %v2212 = vpop.f32.mrb[0].mxu0
      %2213 = vdwg.mxu0
      %s2214 = scalar_lea.vmem %s3, 256
      %v2215 = vld [vmem:[%s2214] sm:$0xf]
      %v2216 = vld [vmem:[%s2214 + $0x4] sm:$0xf]
      %v2217 = vld [vmem:[%s2214 + $0x8] sm:$0xf]
      %v2218 = vld [vmem:[%s2214 + $0xc] sm:$0xf]
      %v2219 = vld [vmem:[%s2214 + $0x10] sm:$0xf]
      %v2220 = vld [vmem:[%s2214 + $0x14] sm:$0xf]
      %v2221 = vld [vmem:[%s2214 + $0x18] sm:$0xf]
      %v2222 = vld [vmem:[%s2214 + $0x1c] sm:$0xf]
      %v2223 = vld [vmem:[%s2214 + $0x20] sm:$0xf]
      %v2224 = vld [vmem:[%s2214 + $0x24] sm:$0xf]
      %v2225 = vld [vmem:[%s2214 + $0x28] sm:$0xf]
      %v2226 = vld [vmem:[%s2214 + $0x2c] sm:$0xf]
      %v2227 = vld [vmem:[%s2214 + $0x30] sm:$0xf]
      %v2228 = vld [vmem:[%s2214 + $0x34] sm:$0xf]
      %v2229 = vld [vmem:[%s2214 + $0x38] sm:$0xf]
      %v2230 = vld [vmem:[%s2214 + $0x3c] sm:$0xf]
      %v2231 = vld [vmem:[%s2214 + $0x40] sm:$0xf]
      %v2232 = vld [vmem:[%s2214 + $0x44] sm:$0xf]
      %v2233 = vld [vmem:[%s2214 + $0x48] sm:$0xf]
      %v2234 = vld [vmem:[%s2214 + $0x4c] sm:$0xf]
      %v2235 = vld [vmem:[%s2214 + $0x50] sm:$0xf]
      %v2236 = vld [vmem:[%s2214 + $0x54] sm:$0xf]
      %v2237 = vld [vmem:[%s2214 + $0x58] sm:$0xf]
      %v2238 = vld [vmem:[%s2214 + $0x5c] sm:$0xf]
      %v2239 = vld [vmem:[%s2214 + $0x60] sm:$0xf]
      %v2240 = vld [vmem:[%s2214 + $0x64] sm:$0xf]
      %v2241 = vld [vmem:[%s2214 + $0x68] sm:$0xf]
      %v2242 = vld [vmem:[%s2214 + $0x6c] sm:$0xf]
      %v2243 = vld [vmem:[%s2214 + $0x70] sm:$0xf]
      %v2244 = vld [vmem:[%s2214 + $0x74] sm:$0xf]
      %v2245 = vld [vmem:[%s2214 + $0x78] sm:$0xf]
      %v2246 = vld [vmem:[%s2214 + $0x7c] sm:$0xf]
      %v2279 = vunpack.c.l.b16 %v2215
      %v2280 = vunpack.c.l.b16 %v2216
      %v2281 = vunpack.c.l.b16 %v2217
      %v2282 = vunpack.c.l.b16 %v2218
      %v2283 = vunpack.c.l.b16 %v2219
      %v2284 = vunpack.c.l.b16 %v2220
      %v2285 = vunpack.c.l.b16 %v2221
      %v2286 = vunpack.c.l.b16 %v2222
      %v2287 = vunpack.c.l.b16 %v2223
      %v2288 = vunpack.c.l.b16 %v2224
      %v2289 = vunpack.c.l.b16 %v2225
      %v2290 = vunpack.c.l.b16 %v2226
      %v2291 = vunpack.c.l.b16 %v2227
      %v2292 = vunpack.c.l.b16 %v2228
      %v2293 = vunpack.c.l.b16 %v2229
      %v2294 = vunpack.c.l.b16 %v2230
      %v2295 = vunpack.c.l.b16 %v2231
      %v2296 = vunpack.c.l.b16 %v2232
      %v2297 = vunpack.c.l.b16 %v2233
      %v2298 = vunpack.c.l.b16 %v2234
      %v2299 = vunpack.c.l.b16 %v2235
      %v2300 = vunpack.c.l.b16 %v2236
      %v2301 = vunpack.c.l.b16 %v2237
      %v2302 = vunpack.c.l.b16 %v2238
      %v2303 = vunpack.c.l.b16 %v2239
      %v2304 = vunpack.c.l.b16 %v2240
      %v2305 = vunpack.c.l.b16 %v2241
      %v2306 = vunpack.c.l.b16 %v2242
      %v2307 = vunpack.c.l.b16 %v2243
      %v2308 = vunpack.c.l.b16 %v2244
      %v2309 = vunpack.c.l.b16 %v2245
      %v2310 = vunpack.c.l.b16 %v2246
      %v2311 = vpack.c.b16 %v2280, %v2279
      %v2312 = vpack.c.b16 %v2282, %v2281
      %v2313 = vpack.c.b16 %v2284, %v2283
      %v2314 = vpack.c.b16 %v2286, %v2285
      %v2315 = vpack.c.b16 %v2288, %v2287
      %v2316 = vpack.c.b16 %v2290, %v2289
      %v2317 = vpack.c.b16 %v2292, %v2291
      %v2318 = vpack.c.b16 %v2294, %v2293
      %v2319 = vpack.c.b16 %v2296, %v2295
      %v2320 = vpack.c.b16 %v2298, %v2297
      %v2321 = vpack.c.b16 %v2300, %v2299
      %v2322 = vpack.c.b16 %v2302, %v2301
      %v2323 = vpack.c.b16 %v2304, %v2303
      %v2324 = vpack.c.b16 %v2306, %v2305
      %v2325 = vpack.c.b16 %v2308, %v2307
      %v2326 = vpack.c.b16 %v2310, %v2309
      %2343 = vmatprep.subr.bf16.mxu0 0
      %2344 = vmatpush1.bf16.msra.mxu0 %v2311
      %2345 = vmatprep.subr.bf16.mxu0 0
      %2346 = vmatpush1.bf16.msra.mxu0 %v2312
      %2347 = vmatprep.subr.bf16.mxu0 0
      %2348 = vmatpush1.bf16.msra.mxu0 %v2313
      %2349 = vmatprep.subr.bf16.mxu0 0
      %2350 = vmatpush1.bf16.msra.mxu0 %v2314
      %2351 = vmatprep.subr.bf16.mxu0 0
      %2352 = vmatpush1.bf16.msra.mxu0 %v2315
      %2353 = vmatprep.subr.bf16.mxu0 0
      %2354 = vmatpush1.bf16.msra.mxu0 %v2316
      %2355 = vmatprep.subr.bf16.mxu0 0
      %2356 = vmatpush1.bf16.msra.mxu0 %v2317
      %2357 = vmatprep.subr.bf16.mxu0 0
      %2358 = vmatpush1.bf16.msra.mxu0 %v2318
      %2359 = vmatprep.subr.bf16.mxu0 0
      %2360 = vmatpush1.bf16.msra.mxu0 %v2319
      %2361 = vmatprep.subr.bf16.mxu0 0
      %2362 = vmatpush1.bf16.msra.mxu0 %v2320
      %2363 = vmatprep.subr.bf16.mxu0 0
      %2364 = vmatpush1.bf16.msra.mxu0 %v2321
      %2365 = vmatprep.subr.bf16.mxu0 0
      %2366 = vmatpush1.bf16.msra.mxu0 %v2322
      %2367 = vmatprep.subr.bf16.mxu0 0
      %2368 = vmatpush1.bf16.msra.mxu0 %v2323
      %2369 = vmatprep.subr.bf16.mxu0 0
      %2370 = vmatpush1.bf16.msra.mxu0 %v2324
      %2371 = vmatprep.subr.bf16.mxu0 0
      %2372 = vmatpush1.bf16.msra.mxu0 %v2325
      %2373 = vmatprep.subr.bf16.mxu0 0
      %2374 = vmatpush1.bf16.msra.mxu0 %v2326
      %2375 = vmatprep.mubr.bf16.mxu0 %v1677
      %2376 = vmatmul.mubr.bf16.gmra.mrb[0].mxu0 %v1676
      %v2377 = vpop.f32.mrb[0].mxu0
      %v2378 = vadd.f32 0.0, %v2377
      %v2379 = vpop.f32.mrb[0].mxu0
      %v2380 = vpop.f32.mrb[0].mxu0
      %v2381 = vadd.f32 0.0, %v2380
      %v2382 = vpop.f32.mrb[0].mxu0
      %2383 = vmatprep.mubr.bf16.mxu0 %v1679
      %2384 = vmatmul.mubr.bf16.gmra.mrb[0].mxu0 %v1678
      %v2385 = vpop.f32.mrb[0].mxu0
      %v2386 = vadd.f32 0.0, %v2385
      %v2387 = vpop.f32.mrb[0].mxu0
      %v2388 = vpop.f32.mrb[0].mxu0
      %v2389 = vadd.f32 0.0, %v2388
      %v2390 = vpop.f32.mrb[0].mxu0
      %2391 = vmatprep.mubr.bf16.mxu0 %v1681
      %2392 = vmatmul.mubr.bf16.gmra.mrb[0].mxu0 %v1680
      %v2393 = vpop.f32.mrb[0].mxu0
      %v2394 = vadd.f32 0.0, %v2393
      %v2395 = vpop.f32.mrb[0].mxu0
      %v2396 = vpop.f32.mrb[0].mxu0
      %v2397 = vadd.f32 0.0, %v2396
      %v2398 = vpop.f32.mrb[0].mxu0
      %2399 = vmatprep.mubr.bf16.mxu0 %v1683
      %2400 = vmatmul.mubr.bf16.gmra.mrb[0].mxu0 %v1682
      %v2401 = vpop.f32.mrb[0].mxu0
      %v2402 = vadd.f32 0.0, %v2401
      %v2403 = vpop.f32.mrb[0].mxu0
      %v2404 = vpop.f32.mrb[0].mxu0
      %v2405 = vadd.f32 0.0, %v2404
      %v2406 = vpop.f32.mrb[0].mxu0
      %2407 = vmatprep.mubr.bf16.mxu0 %v1685
      %2408 = vmatmul.mubr.bf16.gmra.mrb[0].mxu0 %v1684
      %v2409 = vpop.f32.mrb[0].mxu0
      %v2410 = vadd.f32 0.0, %v2409
      %v2411 = vpop.f32.mrb[0].mxu0
      %v2412 = vpop.f32.mrb[0].mxu0
      %v2413 = vadd.f32 0.0, %v2412
      %v2414 = vpop.f32.mrb[0].mxu0
      %2415 = vmatprep.mubr.bf16.mxu0 %v1687
      %2416 = vmatmul.mubr.bf16.gmra.mrb[0].mxu0 %v1686
      %v2417 = vpop.f32.mrb[0].mxu0
      %v2418 = vadd.f32 0.0, %v2417
      %v2419 = vpop.f32.mrb[0].mxu0
      %v2420 = vpop.f32.mrb[0].mxu0
      %v2421 = vadd.f32 0.0, %v2420
      %v2422 = vpop.f32.mrb[0].mxu0
      %2423 = vmatprep.mubr.bf16.mxu0 %v1689
      %2424 = vmatmul.mubr.bf16.gmra.mrb[0].mxu0 %v1688
      %v2425 = vpop.f32.mrb[0].mxu0
      %v2426 = vadd.f32 0.0, %v2425
      %v2427 = vpop.f32.mrb[0].mxu0
      %v2428 = vpop.f32.mrb[0].mxu0
      %v2429 = vadd.f32 0.0, %v2428
      %v2430 = vpop.f32.mrb[0].mxu0
      %2431 = vmatprep.mubr.bf16.mxu0 %v1691
      %2432 = vmatmul.mubr.bf16.gmra.mrb[0].mxu0 %v1690
      %v2433 = vpop.f32.mrb[0].mxu0
      %v2434 = vadd.f32 0.0, %v2433
      %v2435 = vpop.f32.mrb[0].mxu0
      %v2436 = vpop.f32.mrb[0].mxu0
      %v2437 = vadd.f32 0.0, %v2436
      %v2438 = vpop.f32.mrb[0].mxu0
      %2439 = vdwg.mxu0
      %v2440 = vadd.f32 %v2152, %v2378
      %v2441 = vadd.f32 %v2155, %v2381
      %v2442 = vadd.f32 %v2160, %v2386
      %v2443 = vadd.f32 %v2163, %v2389
      %v2444 = vadd.f32 %v2168, %v2394
      %v2445 = vadd.f32 %v2171, %v2397
      %v2446 = vadd.f32 %v2176, %v2402
      %v2447 = vadd.f32 %v2179, %v2405
      %v2448 = vadd.f32 %v2184, %v2410
      %v2449 = vadd.f32 %v2187, %v2413
      %v2450 = vadd.f32 %v2192, %v2418
      %v2451 = vadd.f32 %v2195, %v2421
      %v2452 = vadd.f32 %v2200, %v2426
      %v2453 = vadd.f32 %v2203, %v2429
      %v2454 = vadd.f32 %v2208, %v2434
      %v2455 = vadd.f32 %v2211, %v2437
      %s2456 = scalar_lea.vmem %s3, 384
      %v2457 = vld [vmem:[%s2456] sm:$0xf]
      %v2458 = vld [vmem:[%s2456 + $0x4] sm:$0xf]
      %v2459 = vld [vmem:[%s2456 + $0x8] sm:$0xf]
      %v2460 = vld [vmem:[%s2456 + $0xc] sm:$0xf]
      %v2461 = vld [vmem:[%s2456 + $0x10] sm:$0xf]
      %v2462 = vld [vmem:[%s2456 + $0x14] sm:$0xf]
      %v2463 = vld [vmem:[%s2456 + $0x18] sm:$0xf]
      %v2464 = vld [vmem:[%s2456 + $0x1c] sm:$0xf]
      %v2465 = vld [vmem:[%s2456 + $0x20] sm:$0xf]
      %v2466 = vld [vmem:[%s2456 + $0x24] sm:$0xf]
      %v2467 = vld [vmem:[%s2456 + $0x28] sm:$0xf]
      %v2468 = vld [vmem:[%s2456 + $0x2c] sm:$0xf]
      %v2469 = vld [vmem:[%s2456 + $0x30] sm:$0xf]
      %v2470 = vld [vmem:[%s2456 + $0x34] sm:$0xf]
      %v2471 = vld [vmem:[%s2456 + $0x38] sm:$0xf]
      %v2472 = vld [vmem:[%s2456 + $0x3c] sm:$0xf]
      %v2473 = vld [vmem:[%s2456 + $0x40] sm:$0xf]
      %v2474 = vld [vmem:[%s2456 + $0x44] sm:$0xf]
      %v2475 = vld [vmem:[%s2456 + $0x48] sm:$0xf]
      %v2476 = vld [vmem:[%s2456 + $0x4c] sm:$0xf]
      %v2477 = vld [vmem:[%s2456 + $0x50] sm:$0xf]
      %v2478 = vld [vmem:[%s2456 + $0x54] sm:$0xf]
      %v2479 = vld [vmem:[%s2456 + $0x58] sm:$0xf]
      %v2480 = vld [vmem:[%s2456 + $0x5c] sm:$0xf]
      %v2481 = vld [vmem:[%s2456 + $0x60] sm:$0xf]
      %v2482 = vld [vmem:[%s2456 + $0x64] sm:$0xf]
      %v2483 = vld [vmem:[%s2456 + $0x68] sm:$0xf]
      %v2484 = vld [vmem:[%s2456 + $0x6c] sm:$0xf]
      %v2485 = vld [vmem:[%s2456 + $0x70] sm:$0xf]
      %v2486 = vld [vmem:[%s2456 + $0x74] sm:$0xf]
      %v2487 = vld [vmem:[%s2456 + $0x78] sm:$0xf]
      %v2488 = vld [vmem:[%s2456 + $0x7c] sm:$0xf]
      %v2491 = vrot.slane %v1692, 4
      %v2492 = vsel %vm1777, %v1808, %v2491
      %v2493 = vrot.slane %v1693, 4
      %v2494 = vsel %vm1777, %v1810, %v2493
      %v2529 = vunpack.c.l.b16 %v2457
      %v2530 = vunpack.c.l.b16 %v2458
      %v2531 = vunpack.c.l.b16 %v2459
      %v2532 = vunpack.c.l.b16 %v2460
      %v2533 = vunpack.c.l.b16 %v2461
      %v2534 = vunpack.c.l.b16 %v2462
      %v2535 = vunpack.c.l.b16 %v2463
      %v2536 = vunpack.c.l.b16 %v2464
      %v2537 = vunpack.c.l.b16 %v2465
      %v2538 = vunpack.c.l.b16 %v2466
      %v2539 = vunpack.c.l.b16 %v2467
      %v2540 = vunpack.c.l.b16 %v2468
      %v2541 = vunpack.c.l.b16 %v2469
      %v2542 = vunpack.c.l.b16 %v2470
      %v2543 = vunpack.c.l.b16 %v2471
      %v2544 = vunpack.c.l.b16 %v2472
      %v2545 = vunpack.c.l.b16 %v2473
      %v2546 = vunpack.c.l.b16 %v2474
      %v2547 = vunpack.c.l.b16 %v2475
      %v2548 = vunpack.c.l.b16 %v2476
      %v2549 = vunpack.c.l.b16 %v2477
      %v2550 = vunpack.c.l.b16 %v2478
      %v2551 = vunpack.c.l.b16 %v2479
      %v2552 = vunpack.c.l.b16 %v2480
      %v2553 = vunpack.c.l.b16 %v2481
      %v2554 = vunpack.c.l.b16 %v2482
      %v2555 = vunpack.c.l.b16 %v2483
      %v2556 = vunpack.c.l.b16 %v2484
      %v2557 = vunpack.c.l.b16 %v2485
      %v2558 = vunpack.c.l.b16 %v2486
      %v2559 = vunpack.c.l.b16 %v2487
      %v2560 = vunpack.c.l.b16 %v2488
      %v2561 = vpack.c.b16 %v2530, %v2529
      %v2562 = vpack.c.b16 %v2532, %v2531
      %v2563 = vpack.c.b16 %v2534, %v2533
      %v2564 = vpack.c.b16 %v2536, %v2535
      %v2565 = vpack.c.b16 %v2538, %v2537
      %v2566 = vpack.c.b16 %v2540, %v2539
      %v2567 = vpack.c.b16 %v2542, %v2541
      %v2568 = vpack.c.b16 %v2544, %v2543
      %v2569 = vpack.c.b16 %v2546, %v2545
      %v2570 = vpack.c.b16 %v2548, %v2547
      %v2571 = vpack.c.b16 %v2550, %v2549
      %v2572 = vpack.c.b16 %v2552, %v2551
      %v2573 = vpack.c.b16 %v2554, %v2553
      %v2574 = vpack.c.b16 %v2556, %v2555
      %v2575 = vpack.c.b16 %v2558, %v2557
      %v2576 = vpack.c.b16 %v2560, %v2559
      %2593 = vmatprep.subr.bf16.mxu0 0
      %2594 = vmatpush1.bf16.msra.mxu0 %v2561
      %2595 = vmatprep.subr.bf16.mxu0 0
      %2596 = vmatpush1.bf16.msra.mxu0 %v2562
      %2597 = vmatprep.subr.bf16.mxu0 0
      %2598 = vmatpush1.bf16.msra.mxu0 %v2563
      %2599 = vmatprep.subr.bf16.mxu0 0
      %2600 = vmatpush1.bf16.msra.mxu0 %v2564
      %2601 = vmatprep.subr.bf16.mxu0 0
      %2602 = vmatpush1.bf16.msra.mxu0 %v2565
      %2603 = vmatprep.subr.bf16.mxu0 0
      %2604 = vmatpush1.bf16.msra.mxu0 %v2566
      %2605 = vmatprep.subr.bf16.mxu0 0
      %2606 = vmatpush1.bf16.msra.mxu0 %v2567
      %2607 = vmatprep.subr.bf16.mxu0 0
      %2608 = vmatpush1.bf16.msra.mxu0 %v2568
      %2609 = vmatprep.subr.bf16.mxu0 0
      %2610 = vmatpush1.bf16.msra.mxu0 %v2569
      %2611 = vmatprep.subr.bf16.mxu0 0
      %2612 = vmatpush1.bf16.msra.mxu0 %v2570
      %2613 = vmatprep.subr.bf16.mxu0 0
      %2614 = vmatpush1.bf16.msra.mxu0 %v2571
      %2615 = vmatprep.subr.bf16.mxu0 0
      %2616 = vmatpush1.bf16.msra.mxu0 %v2572
      %2617 = vmatprep.subr.bf16.mxu0 0
      %2618 = vmatpush1.bf16.msra.mxu0 %v2573
      %2619 = vmatprep.subr.bf16.mxu0 0
      %2620 = vmatpush1.bf16.msra.mxu0 %v2574
      %2621 = vmatprep.subr.bf16.mxu0 0
      %2622 = vmatpush1.bf16.msra.mxu0 %v2575
      %2623 = vmatprep.subr.bf16.mxu0 0
      %2624 = vmatpush1.bf16.msra.mxu0 %v2576
      %2625 = vmatprep.mubr.bf16.mxu0 %v1787
      %2626 = vmatmul.mubr.bf16.gmra.mrb[0].mxu0 %v1785
      %v2627 = vpop.f32.mrb[0].mxu0
      %v2628 = vadd.f32 0.0, %v2627
      %v2629 = vpop.f32.mrb[0].mxu0
      %v2630 = vpop.f32.mrb[0].mxu0
      %v2631 = vadd.f32 0.0, %v2630
      %v2632 = vpop.f32.mrb[0].mxu0
      %2633 = vmatprep.mubr.bf16.mxu0 %v1791
      %2634 = vmatmul.mubr.bf16.gmra.mrb[0].mxu0 %v1789
      %v2635 = vpop.f32.mrb[0].mxu0
      %v2636 = vadd.f32 0.0, %v2635
      %v2637 = vpop.f32.mrb[0].mxu0
      %v2638 = vpop.f32.mrb[0].mxu0
      %v2639 = vadd.f32 0.0, %v2638
      %v2640 = vpop.f32.mrb[0].mxu0
      %2641 = vmatprep.mubr.bf16.mxu0 %v1795
      %2642 = vmatmul.mubr.bf16.gmra.mrb[0].mxu0 %v1793
      %v2643 = vpop.f32.mrb[0].mxu0
      %v2644 = vadd.f32 0.0, %v2643
      %v2645 = vpop.f32.mrb[0].mxu0
      %v2646 = vpop.f32.mrb[0].mxu0
      %v2647 = vadd.f32 0.0, %v2646
      %v2648 = vpop.f32.mrb[0].mxu0
      %2649 = vmatprep.mubr.bf16.mxu0 %v1799
      %2650 = vmatmul.mubr.bf16.gmra.mrb[0].mxu0 %v1797
      %v2651 = vpop.f32.mrb[0].mxu0
      %v2652 = vadd.f32 0.0, %v2651
      %v2653 = vpop.f32.mrb[0].mxu0
      %v2654 = vpop.f32.mrb[0].mxu0
      %v2655 = vadd.f32 0.0, %v2654
      %v2656 = vpop.f32.mrb[0].mxu0
      %2657 = vmatprep.mubr.bf16.mxu0 %v1803
      %2658 = vmatmul.mubr.bf16.gmra.mrb[0].mxu0 %v1801
      %v2659 = vpop.f32.mrb[0].mxu0
      %v2660 = vadd.f32 0.0, %v2659
      %v2661 = vpop.f32.mrb[0].mxu0
      %v2662 = vpop.f32.mrb[0].mxu0
      %v2663 = vadd.f32 0.0, %v2662
      %v2664 = vpop.f32.mrb[0].mxu0
      %2665 = vmatprep.mubr.bf16.mxu0 %v1807
      %2666 = vmatmul.mubr.bf16.gmra.mrb[0].mxu0 %v1805
      %v2667 = vpop.f32.mrb[0].mxu0
      %v2668 = vadd.f32 0.0, %v2667
      %v2669 = vpop.f32.mrb[0].mxu0
      %v2670 = vpop.f32.mrb[0].mxu0
      %v2671 = vadd.f32 0.0, %v2670
      %v2672 = vpop.f32.mrb[0].mxu0
      %2673 = vmatprep.mubr.bf16.mxu0 %v1811
      %2674 = vmatmul.mubr.bf16.gmra.mrb[0].mxu0 %v1809
      %v2675 = vpop.f32.mrb[0].mxu0
      %v2676 = vadd.f32 0.0, %v2675
      %v2677 = vpop.f32.mrb[0].mxu0
      %v2678 = vpop.f32.mrb[0].mxu0
      %v2679 = vadd.f32 0.0, %v2678
      %v2680 = vpop.f32.mrb[0].mxu0
      %2681 = vmatprep.mubr.bf16.mxu0 %v2494
      %2682 = vmatmul.mubr.bf16.gmra.mrb[0].mxu0 %v2492
      %v2683 = vpop.f32.mrb[0].mxu0
      %v2684 = vadd.f32 0.0, %v2683
      %v2685 = vpop.f32.mrb[0].mxu0
      %v2686 = vpop.f32.mrb[0].mxu0
      %v2687 = vadd.f32 0.0, %v2686
      %v2688 = vpop.f32.mrb[0].mxu0
      %2689 = vdwg.mxu0
      %v2690 = vadd.f32 %v2440, %v2628
      %v2691 = vadd.f32 %v2441, %v2631
      %v2692 = vadd.f32 %v2442, %v2636
      %v2693 = vadd.f32 %v2443, %v2639
      %v2694 = vadd.f32 %v2444, %v2644
      %v2695 = vadd.f32 %v2445, %v2647
      %v2696 = vadd.f32 %v2446, %v2652
      %v2697 = vadd.f32 %v2447, %v2655
      %v2698 = vadd.f32 %v2448, %v2660
      %v2699 = vadd.f32 %v2449, %v2663
      %v2700 = vadd.f32 %v2450, %v2668
      %v2701 = vadd.f32 %v2451, %v2671
      %v2702 = vadd.f32 %v2452, %v2676
      %v2703 = vadd.f32 %v2453, %v2679
      %v2704 = vadd.f32 %v2454, %v2684
      %v2705 = vadd.f32 %v2455, %v2687
      %s2706 = scalar_lea.vmem %s3, 512
      %v2707 = vld [vmem:[%s2706] sm:$0xf]
      %v2708 = vld [vmem:[%s2706 + $0x4] sm:$0xf]
      %v2709 = vld [vmem:[%s2706 + $0x8] sm:$0xf]
      %v2710 = vld [vmem:[%s2706 + $0xc] sm:$0xf]
      %v2711 = vld [vmem:[%s2706 + $0x10] sm:$0xf]
      %v2712 = vld [vmem:[%s2706 + $0x14] sm:$0xf]
      %v2713 = vld [vmem:[%s2706 + $0x18] sm:$0xf]
      %v2714 = vld [vmem:[%s2706 + $0x1c] sm:$0xf]
      %v2715 = vld [vmem:[%s2706 + $0x20] sm:$0xf]
      %v2716 = vld [vmem:[%s2706 + $0x24] sm:$0xf]
      %v2717 = vld [vmem:[%s2706 + $0x28] sm:$0xf]
      %v2718 = vld [vmem:[%s2706 + $0x2c] sm:$0xf]
      %v2719 = vld [vmem:[%s2706 + $0x30] sm:$0xf]
      %v2720 = vld [vmem:[%s2706 + $0x34] sm:$0xf]
      %v2721 = vld [vmem:[%s2706 + $0x38] sm:$0xf]
      %v2722 = vld [vmem:[%s2706 + $0x3c] sm:$0xf]
      %v2723 = vld [vmem:[%s2706 + $0x40] sm:$0xf]
      %v2724 = vld [vmem:[%s2706 + $0x44] sm:$0xf]
      %v2725 = vld [vmem:[%s2706 + $0x48] sm:$0xf]
      %v2726 = vld [vmem:[%s2706 + $0x4c] sm:$0xf]
      %v2727 = vld [vmem:[%s2706 + $0x50] sm:$0xf]
      %v2728 = vld [vmem:[%s2706 + $0x54] sm:$0xf]
      %v2729 = vld [vmem:[%s2706 + $0x58] sm:$0xf]
      %v2730 = vld [vmem:[%s2706 + $0x5c] sm:$0xf]
      %v2731 = vld [vmem:[%s2706 + $0x60] sm:$0xf]
      %v2732 = vld [vmem:[%s2706 + $0x64] sm:$0xf]
      %v2733 = vld [vmem:[%s2706 + $0x68] sm:$0xf]
      %v2734 = vld [vmem:[%s2706 + $0x6c] sm:$0xf]
      %v2735 = vld [vmem:[%s2706 + $0x70] sm:$0xf]
      %v2736 = vld [vmem:[%s2706 + $0x74] sm:$0xf]
      %v2737 = vld [vmem:[%s2706 + $0x78] sm:$0xf]
      %v2738 = vld [vmem:[%s2706 + $0x7c] sm:$0xf]
      %v2771 = vunpack.c.l.b16 %v2707
      %v2772 = vunpack.c.l.b16 %v2708
      %v2773 = vunpack.c.l.b16 %v2709
      %v2774 = vunpack.c.l.b16 %v2710
      %v2775 = vunpack.c.l.b16 %v2711
      %v2776 = vunpack.c.l.b16 %v2712
      %v2777 = vunpack.c.l.b16 %v2713
      %v2778 = vunpack.c.l.b16 %v2714
      %v2779 = vunpack.c.l.b16 %v2715
      %v2780 = vunpack.c.l.b16 %v2716
      %v2781 = vunpack.c.l.b16 %v2717
      %v2782 = vunpack.c.l.b16 %v2718
      %v2783 = vunpack.c.l.b16 %v2719
      %v2784 = vunpack.c.l.b16 %v2720
      %v2785 = vunpack.c.l.b16 %v2721
      %v2786 = vunpack.c.l.b16 %v2722
      %v2787 = vunpack.c.l.b16 %v2723
      %v2788 = vunpack.c.l.b16 %v2724
      %v2789 = vunpack.c.l.b16 %v2725
      %v2790 = vunpack.c.l.b16 %v2726
      %v2791 = vunpack.c.l.b16 %v2727
      %v2792 = vunpack.c.l.b16 %v2728
      %v2793 = vunpack.c.l.b16 %v2729
      %v2794 = vunpack.c.l.b16 %v2730
      %v2795 = vunpack.c.l.b16 %v2731
      %v2796 = vunpack.c.l.b16 %v2732
      %v2797 = vunpack.c.l.b16 %v2733
      %v2798 = vunpack.c.l.b16 %v2734
      %v2799 = vunpack.c.l.b16 %v2735
      %v2800 = vunpack.c.l.b16 %v2736
      %v2801 = vunpack.c.l.b16 %v2737
      %v2802 = vunpack.c.l.b16 %v2738
      %v2803 = vpack.c.b16 %v2772, %v2771
      %v2804 = vpack.c.b16 %v2774, %v2773
      %v2805 = vpack.c.b16 %v2776, %v2775
      %v2806 = vpack.c.b16 %v2778, %v2777
      %v2807 = vpack.c.b16 %v2780, %v2779
      %v2808 = vpack.c.b16 %v2782, %v2781
      %v2809 = vpack.c.b16 %v2784, %v2783
      %v2810 = vpack.c.b16 %v2786, %v2785
      %v2811 = vpack.c.b16 %v2788, %v2787
      %v2812 = vpack.c.b16 %v2790, %v2789
      %v2813 = vpack.c.b16 %v2792, %v2791
      %v2814 = vpack.c.b16 %v2794, %v2793
      %v2815 = vpack.c.b16 %v2796, %v2795
      %v2816 = vpack.c.b16 %v2798, %v2797
      %v2817 = vpack.c.b16 %v2800, %v2799
      %v2818 = vpack.c.b16 %v2802, %v2801
      %2835 = vmatprep.subr.bf16.mxu0 0
      %2836 = vmatpush1.bf16.msra.mxu0 %v2803
      %2837 = vmatprep.subr.bf16.mxu0 0
      %2838 = vmatpush1.bf16.msra.mxu0 %v2804
      %2839 = vmatprep.subr.bf16.mxu0 0
      %2840 = vmatpush1.bf16.msra.mxu0 %v2805
      %2841 = vmatprep.subr.bf16.mxu0 0
      %2842 = vmatpush1.bf16.msra.mxu0 %v2806
      %2843 = vmatprep.subr.bf16.mxu0 0
      %2844 = vmatpush1.bf16.msra.mxu0 %v2807
      %2845 = vmatprep.subr.bf16.mxu0 0
      %2846 = vmatpush1.bf16.msra.mxu0 %v2808
      %2847 = vmatprep.subr.bf16.mxu0 0
      %2848 = vmatpush1.bf16.msra.mxu0 %v2809
      %2849 = vmatprep.subr.bf16.mxu0 0
      %2850 = vmatpush1.bf16.msra.mxu0 %v2810
      %2851 = vmatprep.subr.bf16.mxu0 0
      %2852 = vmatpush1.bf16.msra.mxu0 %v2811
      %2853 = vmatprep.subr.bf16.mxu0 0
      %2854 = vmatpush1.bf16.msra.mxu0 %v2812
      %2855 = vmatprep.subr.bf16.mxu0 0
      %2856 = vmatpush1.bf16.msra.mxu0 %v2813
      %2857 = vmatprep.subr.bf16.mxu0 0
      %2858 = vmatpush1.bf16.msra.mxu0 %v2814
      %2859 = vmatprep.subr.bf16.mxu0 0
      %2860 = vmatpush1.bf16.msra.mxu0 %v2815
      %2861 = vmatprep.subr.bf16.mxu0 0
      %2862 = vmatpush1.bf16.msra.mxu0 %v2816
      %2863 = vmatprep.subr.bf16.mxu0 0
      %2864 = vmatpush1.bf16.msra.mxu0 %v2817
      %2865 = vmatprep.subr.bf16.mxu0 0
      %2866 = vmatpush1.bf16.msra.mxu0 %v2818
      %2867 = vmatprep.mubr.bf16.mxu0 %v1679
      %2868 = vmatmul.mubr.bf16.gmra.mrb[0].mxu0 %v1678
      %v2869 = vpop.f32.mrb[0].mxu0
      %v2870 = vadd.f32 0.0, %v2869
      %v2871 = vpop.f32.mrb[0].mxu0
      %v2872 = vpop.f32.mrb[0].mxu0
      %v2873 = vadd.f32 0.0, %v2872
      %v2874 = vpop.f32.mrb[0].mxu0
      %2875 = vmatprep.mubr.bf16.mxu0 %v1681
      %2876 = vmatmul.mubr.bf16.gmra.mrb[0].mxu0 %v1680
      %v2877 = vpop.f32.mrb[0].mxu0
      %v2878 = vadd.f32 0.0, %v2877
      %v2879 = vpop.f32.mrb[0].mxu0
      %v2880 = vpop.f32.mrb[0].mxu0
      %v2881 = vadd.f32 0.0, %v2880
      %v2882 = vpop.f32.mrb[0].mxu0
      %2883 = vmatprep.mubr.bf16.mxu0 %v1683
      %2884 = vmatmul.mubr.bf16.gmra.mrb[0].mxu0 %v1682
      %v2885 = vpop.f32.mrb[0].mxu0
      %v2886 = vadd.f32 0.0, %v2885
      %v2887 = vpop.f32.mrb[0].mxu0
      %v2888 = vpop.f32.mrb[0].mxu0
      %v2889 = vadd.f32 0.0, %v2888
      %v2890 = vpop.f32.mrb[0].mxu0
      %2891 = vmatprep.mubr.bf16.mxu0 %v1685
      %2892 = vmatmul.mubr.bf16.gmra.mrb[0].mxu0 %v1684
      %v2893 = vpop.f32.mrb[0].mxu0
      %v2894 = vadd.f32 0.0, %v2893
      %v2895 = vpop.f32.mrb[0].mxu0
      %v2896 = vpop.f32.mrb[0].mxu0
      %v2897 = vadd.f32 0.0, %v2896
      %v2898 = vpop.f32.mrb[0].mxu0
      %2899 = vmatprep.mubr.bf16.mxu0 %v1687
      %2900 = vmatmul.mubr.bf16.gmra.mrb[0].mxu0 %v1686
      %v2901 = vpop.f32.mrb[0].mxu0
      %v2902 = vadd.f32 0.0, %v2901
      %v2903 = vpop.f32.mrb[0].mxu0
      %v2904 = vpop.f32.mrb[0].mxu0
      %v2905 = vadd.f32 0.0, %v2904
      %v2906 = vpop.f32.mrb[0].mxu0
      %2907 = vmatprep.mubr.bf16.mxu0 %v1689
      %2908 = vmatmul.mubr.bf16.gmra.mrb[0].mxu0 %v1688
      %v2909 = vpop.f32.mrb[0].mxu0
      %v2910 = vadd.f32 0.0, %v2909
      %v2911 = vpop.f32.mrb[0].mxu0
      %v2912 = vpop.f32.mrb[0].mxu0
      %v2913 = vadd.f32 0.0, %v2912
      %v2914 = vpop.f32.mrb[0].mxu0
      %2915 = vmatprep.mubr.bf16.mxu0 %v1691
      %2916 = vmatmul.mubr.bf16.gmra.mrb[0].mxu0 %v1690
      %v2917 = vpop.f32.mrb[0].mxu0
      %v2918 = vadd.f32 0.0, %v2917
      %v2919 = vpop.f32.mrb[0].mxu0
      %v2920 = vpop.f32.mrb[0].mxu0
      %v2921 = vadd.f32 0.0, %v2920
      %v2922 = vpop.f32.mrb[0].mxu0
      %2923 = vmatprep.mubr.bf16.mxu0 %v1693
      %2924 = vmatmul.mubr.bf16.gmra.mrb[0].mxu0 %v1692
      %v2925 = vpop.f32.mrb[0].mxu0
      %v2926 = vadd.f32 0.0, %v2925
      %v2927 = vpop.f32.mrb[0].mxu0
      %v2928 = vpop.f32.mrb[0].mxu0
      %v2929 = vadd.f32 0.0, %v2928
      %v2930 = vpop.f32.mrb[0].mxu0
      %2931 = vdwg.mxu0
      %v2932 = vadd.f32 %v2690, %v2870
      %v2933 = vadd.f32 %v2691, %v2873
      %v2934 = vadd.f32 %v2692, %v2878
      %v2935 = vadd.f32 %v2693, %v2881
      %v2936 = vadd.f32 %v2694, %v2886
      %v2937 = vadd.f32 %v2695, %v2889
      %v2938 = vadd.f32 %v2696, %v2894
      %v2939 = vadd.f32 %v2697, %v2897
      %v2940 = vadd.f32 %v2698, %v2902
      %v2941 = vadd.f32 %v2699, %v2905
      %v2942 = vadd.f32 %v2700, %v2910
      %v2943 = vadd.f32 %v2701, %v2913
      %v2944 = vadd.f32 %v2702, %v2918
      %v2945 = vadd.f32 %v2703, %v2921
      %v2946 = vadd.f32 %v2704, %v2926
      %v2947 = vadd.f32 %v2705, %v2929
      %s2948 = scalar_lea.vmem %s291, %s312
      %v2949 = vld [vmem:[%s2948] sm:$0xff]
      %v2950 = vld [vmem:[%s2948 + $0x8] sm:$0xff]
      %v2951 = vld [vmem:[%s2948 + $0x10] sm:$0xff]
      %v2952 = vld [vmem:[%s2948 + $0x18] sm:$0xff]
      %v2953 = vld [vmem:[%s2948 + $0x20] sm:$0xff]
      %v2954 = vld [vmem:[%s2948 + $0x28] sm:$0xff]
      %v2955 = vld [vmem:[%s2948 + $0x30] sm:$0xff]
      %v2956 = vld [vmem:[%s2948 + $0x38] sm:$0xff]
      %v2957 = vld [vmem:[%s2948 + $0x40] sm:$0xff]
      %v2958 = vld [vmem:[%s2948 + $0x48] sm:$0xff]
      %v2959 = vld [vmem:[%s2948 + $0x50] sm:$0xff]
      %v2960 = vld [vmem:[%s2948 + $0x58] sm:$0xff]
      %v2961 = vld [vmem:[%s2948 + $0x60] sm:$0xff]
      %v2962 = vld [vmem:[%s2948 + $0x68] sm:$0xff]
      %v2963 = vld [vmem:[%s2948 + $0x70] sm:$0xff]
      %v2964 = vld [vmem:[%s2948 + $0x78] sm:$0xff]
      %v2965 = vld [vmem:[%s2948 + $0x80] sm:$0xff]
      %v2983 = vrot.slane %v2949, 1
      %v2984 = vrot.slane %v2950, 1
      %v2985 = vsel %vm877, %v2983, %v2984
      %v2986 = vrot.slane %v2951, 1
      %v2987 = vsel %vm877, %v2984, %v2986
      %v2988 = vrot.slane %v2952, 1
      %v2989 = vsel %vm877, %v2986, %v2988
      %v2990 = vrot.slane %v2953, 1
      %v2991 = vsel %vm877, %v2988, %v2990
      %v2992 = vrot.slane %v2954, 1
      %v2993 = vsel %vm877, %v2990, %v2992
      %v2994 = vrot.slane %v2955, 1
      %v2995 = vsel %vm877, %v2992, %v2994
      %v2996 = vrot.slane %v2956, 1
      %v2997 = vsel %vm877, %v2994, %v2996
      %v2998 = vrot.slane %v2957, 1
      %v2999 = vsel %vm877, %v2996, %v2998
      %v3000 = vrot.slane %v2958, 1
      %v3001 = vsel %vm877, %v2998, %v3000
      %v3002 = vrot.slane %v2959, 1
      %v3003 = vsel %vm877, %v3000, %v3002
      %v3004 = vrot.slane %v2960, 1
      %v3005 = vsel %vm877, %v3002, %v3004
      %v3006 = vrot.slane %v2961, 1
      %v3007 = vsel %vm877, %v3004, %v3006
      %v3008 = vrot.slane %v2962, 1
      %v3009 = vsel %vm877, %v3006, %v3008
      %v3010 = vrot.slane %v2963, 1
      %v3011 = vsel %vm877, %v3008, %v3010
      %v3012 = vrot.slane %v2964, 1
      %v3013 = vsel %vm877, %v3010, %v3012
      %v3014 = vrot.slane %v2965, 1
      %v3015 = vsel %vm877, %v3012, %v3014
      %v3032 = vmax.f32 %v2949, %v2985
      %v3033 = vmax.f32 %v2950, %v2987
      %v3034 = vmax.f32 %v2951, %v2989
      %v3035 = vmax.f32 %v2952, %v2991
      %v3036 = vmax.f32 %v2953, %v2993
      %v3037 = vmax.f32 %v2954, %v2995
      %v3038 = vmax.f32 %v2955, %v2997
      %v3039 = vmax.f32 %v2956, %v2999
      %v3040 = vmax.f32 %v2957, %v3001
      %v3041 = vmax.f32 %v2958, %v3003
      %v3042 = vmax.f32 %v2959, %v3005
      %v3043 = vmax.f32 %v2960, %v3007
      %v3044 = vmax.f32 %v2961, %v3009
      %v3045 = vmax.f32 %v2962, %v3011
      %v3046 = vmax.f32 %v2963, %v3013
      %v3047 = vmax.f32 %v2964, %v3015
      %v3048 = vrot.slane %v2949, 2
      %v3049 = vrot.slane %v2950, 2
      %v3050 = vsel %vm979, %v3048, %v3049
      %v3051 = vrot.slane %v2951, 2
      %v3052 = vsel %vm979, %v3049, %v3051
      %v3053 = vrot.slane %v2952, 2
      %v3054 = vsel %vm979, %v3051, %v3053
      %v3055 = vrot.slane %v2953, 2
      %v3056 = vsel %vm979, %v3053, %v3055
      %v3057 = vrot.slane %v2954, 2
      %v3058 = vsel %vm979, %v3055, %v3057
      %v3059 = vrot.slane %v2955, 2
      %v3060 = vsel %vm979, %v3057, %v3059
      %v3061 = vrot.slane %v2956, 2
      %v3062 = vsel %vm979, %v3059, %v3061
      %v3063 = vrot.slane %v2957, 2
      %v3064 = vsel %vm979, %v3061, %v3063
      %v3065 = vrot.slane %v2958, 2
      %v3066 = vsel %vm979, %v3063, %v3065
      %v3067 = vrot.slane %v2959, 2
      %v3068 = vsel %vm979, %v3065, %v3067
      %v3069 = vrot.slane %v2960, 2
      %v3070 = vsel %vm979, %v3067, %v3069
      %v3071 = vrot.slane %v2961, 2
      %v3072 = vsel %vm979, %v3069, %v3071
      %v3073 = vrot.slane %v2962, 2
      %v3074 = vsel %vm979, %v3071, %v3073
      %v3075 = vrot.slane %v2963, 2
      %v3076 = vsel %vm979, %v3073, %v3075
      %v3077 = vrot.slane %v2964, 2
      %v3078 = vsel %vm979, %v3075, %v3077
      %v3079 = vrot.slane %v2965, 2
      %v3080 = vsel %vm979, %v3077, %v3079
      %v3097 = vmax.f32 %v3032, %v3050
      %v3098 = vmax.f32 %v3033, %v3052
      %v3099 = vmax.f32 %v3034, %v3054
      %v3100 = vmax.f32 %v3035, %v3056
      %v3101 = vmax.f32 %v3036, %v3058
      %v3102 = vmax.f32 %v3037, %v3060
      %v3103 = vmax.f32 %v3038, %v3062
      %v3104 = vmax.f32 %v3039, %v3064
      %v3105 = vmax.f32 %v3040, %v3066
      %v3106 = vmax.f32 %v3041, %v3068
      %v3107 = vmax.f32 %v3042, %v3070
      %v3108 = vmax.f32 %v3043, %v3072
      %v3109 = vmax.f32 %v3044, %v3074
      %v3110 = vmax.f32 %v3045, %v3076
      %v3111 = vmax.f32 %v3046, %v3078
      %v3112 = vmax.f32 %v3047, %v3080
      %v3113 = vld [vmem:[%s4] sm:$0xf]
      %3115 = vset.pattern.permute.xlu0 0
      %3116 = vperm.xlu0 %3115, %v3097
      %v3117 = vpop.permute.xlu0 %3116
      %3120 = vset.pattern.permute.xlu0 0
      %3121 = vperm.xlu0 %3120, %v3098
      %v3122 = vpop.permute.xlu0 %3121
      %3125 = vset.pattern.permute.xlu0 0
      %3126 = vperm.xlu0 %3125, %v3099
      %v3127 = vpop.permute.xlu0 %3126
      %3130 = vset.pattern.permute.xlu0 0
      %3131 = vperm.xlu0 %3130, %v3100
      %v3132 = vpop.permute.xlu0 %3131
      %3135 = vset.pattern.permute.xlu0 0
      %3136 = vperm.xlu0 %3135, %v3101
      %v3137 = vpop.permute.xlu0 %3136
      %3140 = vset.pattern.permute.xlu0 0
      %3141 = vperm.xlu0 %3140, %v3102
      %v3142 = vpop.permute.xlu0 %3141
      %3145 = vset.pattern.permute.xlu0 0
      %3146 = vperm.xlu0 %3145, %v3103
      %v3147 = vpop.permute.xlu0 %3146
      %3150 = vset.pattern.permute.xlu0 0
      %3151 = vperm.xlu0 %3150, %v3104
      %v3152 = vpop.permute.xlu0 %3151
      %3155 = vset.pattern.permute.xlu0 0
      %3156 = vperm.xlu0 %3155, %v3105
      %v3157 = vpop.permute.xlu0 %3156
      %3160 = vset.pattern.permute.xlu0 0
      %3161 = vperm.xlu0 %3160, %v3106
      %v3162 = vpop.permute.xlu0 %3161
      %3165 = vset.pattern.permute.xlu0 0
      %3166 = vperm.xlu0 %3165, %v3107
      %v3167 = vpop.permute.xlu0 %3166
      %3170 = vset.pattern.permute.xlu0 0
      %3171 = vperm.xlu0 %3170, %v3108
      %v3172 = vpop.permute.xlu0 %3171
      %3175 = vset.pattern.permute.xlu0 0
      %3176 = vperm.xlu0 %3175, %v3109
      %v3177 = vpop.permute.xlu0 %3176
      %3180 = vset.pattern.permute.xlu0 0
      %3181 = vperm.xlu0 %3180, %v3110
      %v3182 = vpop.permute.xlu0 %3181
      %3185 = vset.pattern.permute.xlu0 0
      %3186 = vperm.xlu0 %3185, %v3111
      %v3187 = vpop.permute.xlu0 %3186
      %3190 = vset.pattern.permute.xlu0 0
      %3191 = vperm.xlu0 %3190, %v3112
      %v3192 = vpop.permute.xlu0 %3191
      %v3194 = vlaneseq
      %v3195 = vshrl.u32 %v3194, 7
      %v3196 = vsub.s32 0, %v3195
      %v3197 = vrot.slane %v3113, %v3196
      %v3198 = vmul.f32 %v3117, %v3197
      %v3199 = vmul.f32 %v3122, %v3197
      %v3200 = vmul.f32 %v3127, %v3197
      %v3201 = vmul.f32 %v3132, %v3197
      %v3202 = vmul.f32 %v3137, %v3197
      %v3203 = vmul.f32 %v3142, %v3197
      %v3204 = vmul.f32 %v3147, %v3197
      %v3205 = vmul.f32 %v3152, %v3197
      %v3206 = vmul.f32 %v3157, %v3197
      %v3207 = vmul.f32 %v3162, %v3197
      %v3208 = vmul.f32 %v3167, %v3197
      %v3209 = vmul.f32 %v3172, %v3197
      %v3210 = vmul.f32 %v3177, %v3197
      %v3211 = vmul.f32 %v3182, %v3197
      %v3212 = vmul.f32 %v3187, %v3197
      %v3213 = vmul.f32 %v3192, %v3197
      %3214 = vset.pattern.permute.xlu0 1
      %3215 = vperm.xlu0 %3214, %v3097
      %v3216 = vpop.permute.xlu0 %3215
      %3218 = vset.pattern.permute.xlu0 1
      %3219 = vperm.xlu0 %3218, %v3098
      %v3220 = vpop.permute.xlu0 %3219
      %3222 = vset.pattern.permute.xlu0 1
      %3223 = vperm.xlu0 %3222, %v3099
      %v3224 = vpop.permute.xlu0 %3223
      %3226 = vset.pattern.permute.xlu0 1
      %3227 = vperm.xlu0 %3226, %v3100
      %v3228 = vpop.permute.xlu0 %3227
      %3230 = vset.pattern.permute.xlu0 1
      %3231 = vperm.xlu0 %3230, %v3101
      %v3232 = vpop.permute.xlu0 %3231
      %3234 = vset.pattern.permute.xlu0 1
      %3235 = vperm.xlu0 %3234, %v3102
      %v3236 = vpop.permute.xlu0 %3235
      %3238 = vset.pattern.permute.xlu0 1
      %3239 = vperm.xlu0 %3238, %v3103
      %v3240 = vpop.permute.xlu0 %3239
      %3242 = vset.pattern.permute.xlu0 1
      %3243 = vperm.xlu0 %3242, %v3104
      %v3244 = vpop.permute.xlu0 %3243
      %3246 = vset.pattern.permute.xlu0 1
      %3247 = vperm.xlu0 %3246, %v3105
      %v3248 = vpop.permute.xlu0 %3247
      %3250 = vset.pattern.permute.xlu0 1
      %3251 = vperm.xlu0 %3250, %v3106
      %v3252 = vpop.permute.xlu0 %3251
      %3254 = vset.pattern.permute.xlu0 1
      %3255 = vperm.xlu0 %3254, %v3107
      %v3256 = vpop.permute.xlu0 %3255
      %3258 = vset.pattern.permute.xlu0 1
      %3259 = vperm.xlu0 %3258, %v3108
      %v3260 = vpop.permute.xlu0 %3259
      %3262 = vset.pattern.permute.xlu0 1
      %3263 = vperm.xlu0 %3262, %v3109
      %v3264 = vpop.permute.xlu0 %3263
      %3266 = vset.pattern.permute.xlu0 1
      %3267 = vperm.xlu0 %3266, %v3110
      %v3268 = vpop.permute.xlu0 %3267
      %3270 = vset.pattern.permute.xlu0 1
      %3271 = vperm.xlu0 %3270, %v3111
      %v3272 = vpop.permute.xlu0 %3271
      %3274 = vset.pattern.permute.xlu0 1
      %3275 = vperm.xlu0 %3274, %v3112
      %v3276 = vpop.permute.xlu0 %3275
      %v3278 = vlaneseq
      %v3279 = vshrl.u32 %v3278, 7
      %v3280 = vsub.s32 1, %v3279
      %v3281 = vrot.slane %v3113, %v3280
      %v3282 = vmul.f32 %v3216, %v3281
      %v3283 = vmul.f32 %v3220, %v3281
      %v3284 = vmul.f32 %v3224, %v3281
      %v3285 = vmul.f32 %v3228, %v3281
      %v3286 = vmul.f32 %v3232, %v3281
      %v3287 = vmul.f32 %v3236, %v3281
      %v3288 = vmul.f32 %v3240, %v3281
      %v3289 = vmul.f32 %v3244, %v3281
      %v3290 = vmul.f32 %v3248, %v3281
      %v3291 = vmul.f32 %v3252, %v3281
      %v3292 = vmul.f32 %v3256, %v3281
      %v3293 = vmul.f32 %v3260, %v3281
      %v3294 = vmul.f32 %v3264, %v3281
      %v3295 = vmul.f32 %v3268, %v3281
      %v3296 = vmul.f32 %v3272, %v3281
      %v3297 = vmul.f32 %v3276, %v3281
      %v3298 = vadd.f32 %v3198, %v3282
      %v3299 = vadd.f32 %v3199, %v3283
      %v3300 = vadd.f32 %v3200, %v3284
      %v3301 = vadd.f32 %v3201, %v3285
      %v3302 = vadd.f32 %v3202, %v3286
      %v3303 = vadd.f32 %v3203, %v3287
      %v3304 = vadd.f32 %v3204, %v3288
      %v3305 = vadd.f32 %v3205, %v3289
      %v3306 = vadd.f32 %v3206, %v3290
      %v3307 = vadd.f32 %v3207, %v3291
      %v3308 = vadd.f32 %v3208, %v3292
      %v3309 = vadd.f32 %v3209, %v3293
      %v3310 = vadd.f32 %v3210, %v3294
      %v3311 = vadd.f32 %v3211, %v3295
      %v3312 = vadd.f32 %v3212, %v3296
      %v3313 = vadd.f32 %v3213, %v3297
      %3314 = vset.pattern.permute.xlu0 2
      %3315 = vperm.xlu0 %3314, %v3097
      %v3316 = vpop.permute.xlu0 %3315
      %3318 = vset.pattern.permute.xlu0 2
      %3319 = vperm.xlu0 %3318, %v3098
      %v3320 = vpop.permute.xlu0 %3319
      %3322 = vset.pattern.permute.xlu0 2
      %3323 = vperm.xlu0 %3322, %v3099
      %v3324 = vpop.permute.xlu0 %3323
      %3326 = vset.pattern.permute.xlu0 2
      %3327 = vperm.xlu0 %3326, %v3100
      %v3328 = vpop.permute.xlu0 %3327
      %3330 = vset.pattern.permute.xlu0 2
      %3331 = vperm.xlu0 %3330, %v3101
      %v3332 = vpop.permute.xlu0 %3331
      %3334 = vset.pattern.permute.xlu0 2
      %3335 = vperm.xlu0 %3334, %v3102
      %v3336 = vpop.permute.xlu0 %3335
      %3338 = vset.pattern.permute.xlu0 2
      %3339 = vperm.xlu0 %3338, %v3103
      %v3340 = vpop.permute.xlu0 %3339
      %3342 = vset.pattern.permute.xlu0 2
      %3343 = vperm.xlu0 %3342, %v3104
      %v3344 = vpop.permute.xlu0 %3343
      %3346 = vset.pattern.permute.xlu0 2
      %3347 = vperm.xlu0 %3346, %v3105
      %v3348 = vpop.permute.xlu0 %3347
      %3350 = vset.pattern.permute.xlu0 2
      %3351 = vperm.xlu0 %3350, %v3106
      %v3352 = vpop.permute.xlu0 %3351
      %3354 = vset.pattern.permute.xlu0 2
      %3355 = vperm.xlu0 %3354, %v3107
      %v3356 = vpop.permute.xlu0 %3355
      %3358 = vset.pattern.permute.xlu0 2
      %3359 = vperm.xlu0 %3358, %v3108
      %v3360 = vpop.permute.xlu0 %3359
      %3362 = vset.pattern.permute.xlu0 2
      %3363 = vperm.xlu0 %3362, %v3109
      %v3364 = vpop.permute.xlu0 %3363
      %3366 = vset.pattern.permute.xlu0 2
      %3367 = vperm.xlu0 %3366, %v3110
      %v3368 = vpop.permute.xlu0 %3367
      %3370 = vset.pattern.permute.xlu0 2
      %3371 = vperm.xlu0 %3370, %v3111
      %v3372 = vpop.permute.xlu0 %3371
      %3374 = vset.pattern.permute.xlu0 2
      %3375 = vperm.xlu0 %3374, %v3112
      %v3376 = vpop.permute.xlu0 %3375
      %v3378 = vlaneseq
      %v3379 = vshrl.u32 %v3378, 7
      %v3380 = vsub.s32 2, %v3379
      %v3381 = vrot.slane %v3113, %v3380
      %v3382 = vmul.f32 %v3316, %v3381
      %v3383 = vmul.f32 %v3320, %v3381
      %v3384 = vmul.f32 %v3324, %v3381
      %v3385 = vmul.f32 %v3328, %v3381
      %v3386 = vmul.f32 %v3332, %v3381
      %v3387 = vmul.f32 %v3336, %v3381
      %v3388 = vmul.f32 %v3340, %v3381
      %v3389 = vmul.f32 %v3344, %v3381
      %v3390 = vmul.f32 %v3348, %v3381
      %v3391 = vmul.f32 %v3352, %v3381
      %v3392 = vmul.f32 %v3356, %v3381
      %v3393 = vmul.f32 %v3360, %v3381
      %v3394 = vmul.f32 %v3364, %v3381
      %v3395 = vmul.f32 %v3368, %v3381
      %v3396 = vmul.f32 %v3372, %v3381
      %v3397 = vmul.f32 %v3376, %v3381
      %v3398 = vadd.f32 %v3298, %v3382
      %v3399 = vadd.f32 %v3299, %v3383
      %v3400 = vadd.f32 %v3300, %v3384
      %v3401 = vadd.f32 %v3301, %v3385
      %v3402 = vadd.f32 %v3302, %v3386
      %v3403 = vadd.f32 %v3303, %v3387
      %v3404 = vadd.f32 %v3304, %v3388
      %v3405 = vadd.f32 %v3305, %v3389
      %v3406 = vadd.f32 %v3306, %v3390
      %v3407 = vadd.f32 %v3307, %v3391
      %v3408 = vadd.f32 %v3308, %v3392
      %v3409 = vadd.f32 %v3309, %v3393
      %v3410 = vadd.f32 %v3310, %v3394
      %v3411 = vadd.f32 %v3311, %v3395
      %v3412 = vadd.f32 %v3312, %v3396
      %v3413 = vadd.f32 %v3313, %v3397
      %3414 = vset.pattern.permute.xlu0 3
      %3415 = vperm.xlu0 %3414, %v3097
      %v3416 = vpop.permute.xlu0 %3415
      %3418 = vset.pattern.permute.xlu0 3
      %3419 = vperm.xlu0 %3418, %v3098
      %v3420 = vpop.permute.xlu0 %3419
      %3422 = vset.pattern.permute.xlu0 3
      %3423 = vperm.xlu0 %3422, %v3099
      %v3424 = vpop.permute.xlu0 %3423
      %3426 = vset.pattern.permute.xlu0 3
      %3427 = vperm.xlu0 %3426, %v3100
      %v3428 = vpop.permute.xlu0 %3427
      %3430 = vset.pattern.permute.xlu0 3
      %3431 = vperm.xlu0 %3430, %v3101
      %v3432 = vpop.permute.xlu0 %3431
      %3434 = vset.pattern.permute.xlu0 3
      %3435 = vperm.xlu0 %3434, %v3102
      %v3436 = vpop.permute.xlu0 %3435
      %3438 = vset.pattern.permute.xlu0 3
      %3439 = vperm.xlu0 %3438, %v3103
      %v3440 = vpop.permute.xlu0 %3439
      %3442 = vset.pattern.permute.xlu0 3
      %3443 = vperm.xlu0 %3442, %v3104
      %v3444 = vpop.permute.xlu0 %3443
      %3446 = vset.pattern.permute.xlu0 3
      %3447 = vperm.xlu0 %3446, %v3105
      %v3448 = vpop.permute.xlu0 %3447
      %3450 = vset.pattern.permute.xlu0 3
      %3451 = vperm.xlu0 %3450, %v3106
      %v3452 = vpop.permute.xlu0 %3451
      %3454 = vset.pattern.permute.xlu0 3
      %3455 = vperm.xlu0 %3454, %v3107
      %v3456 = vpop.permute.xlu0 %3455
      %3458 = vset.pattern.permute.xlu0 3
      %3459 = vperm.xlu0 %3458, %v3108
      %v3460 = vpop.permute.xlu0 %3459
      %3462 = vset.pattern.permute.xlu0 3
      %3463 = vperm.xlu0 %3462, %v3109
      %v3464 = vpop.permute.xlu0 %3463
      %3466 = vset.pattern.permute.xlu0 3
      %3467 = vperm.xlu0 %3466, %v3110
      %v3468 = vpop.permute.xlu0 %3467
      %3470 = vset.pattern.permute.xlu0 3
      %3471 = vperm.xlu0 %3470, %v3111
      %v3472 = vpop.permute.xlu0 %3471
      %3474 = vset.pattern.permute.xlu0 3
      %3475 = vperm.xlu0 %3474, %v3112
      %v3476 = vpop.permute.xlu0 %3475
      %v3478 = vlaneseq
      %v3479 = vshrl.u32 %v3478, 7
      %v3480 = vsub.s32 3, %v3479
      %v3481 = vrot.slane %v3113, %v3480
      %v3482 = vmul.f32 %v3416, %v3481
      %v3483 = vmul.f32 %v3420, %v3481
      %v3484 = vmul.f32 %v3424, %v3481
      %v3485 = vmul.f32 %v3428, %v3481
      %v3486 = vmul.f32 %v3432, %v3481
      %v3487 = vmul.f32 %v3436, %v3481
      %v3488 = vmul.f32 %v3440, %v3481
      %v3489 = vmul.f32 %v3444, %v3481
      %v3490 = vmul.f32 %v3448, %v3481
      %v3491 = vmul.f32 %v3452, %v3481
      %v3492 = vmul.f32 %v3456, %v3481
      %v3493 = vmul.f32 %v3460, %v3481
      %v3494 = vmul.f32 %v3464, %v3481
      %v3495 = vmul.f32 %v3468, %v3481
      %v3496 = vmul.f32 %v3472, %v3481
      %v3497 = vmul.f32 %v3476, %v3481
      %v3498 = vadd.f32 %v3398, %v3482
      %v3499 = vadd.f32 %v3399, %v3483
      %v3500 = vadd.f32 %v3400, %v3484
      %v3501 = vadd.f32 %v3401, %v3485
      %v3502 = vadd.f32 %v3402, %v3486
      %v3503 = vadd.f32 %v3403, %v3487
      %v3504 = vadd.f32 %v3404, %v3488
      %v3505 = vadd.f32 %v3405, %v3489
      %v3506 = vadd.f32 %v3406, %v3490
      %v3507 = vadd.f32 %v3407, %v3491
      %v3508 = vadd.f32 %v3408, %v3492
      %v3509 = vadd.f32 %v3409, %v3493
      %v3510 = vadd.f32 %v3410, %v3494
      %v3511 = vadd.f32 %v3411, %v3495
      %v3512 = vadd.f32 %v3412, %v3496
      %v3513 = vadd.f32 %v3413, %v3497
      %v3514 = vadd.f32 %v2932, %v3498
      %v3515 = vadd.f32 %v2933, %v3499
      %v3516 = vadd.f32 %v2934, %v3500
      %v3517 = vadd.f32 %v2935, %v3501
      %v3518 = vadd.f32 %v2936, %v3502
      %v3519 = vadd.f32 %v2937, %v3503
      %v3520 = vadd.f32 %v2938, %v3504
      %v3521 = vadd.f32 %v2939, %v3505
      %v3522 = vadd.f32 %v2940, %v3506
      %v3523 = vadd.f32 %v2941, %v3507
      %v3524 = vadd.f32 %v2942, %v3508
      %v3525 = vadd.f32 %v2943, %v3509
      %v3526 = vadd.f32 %v2944, %v3510
      %v3527 = vadd.f32 %v2945, %v3511
      %v3528 = vadd.f32 %v2946, %v3512
      %v3529 = vadd.f32 %v2947, %v3513
      %v3530 = vlaneseq
      %v3531 = vshrl.u32 %v3530, 7
      %v3532 = vadd.s32 %v3531, 8
      %v3533 = vadd.s32 %v3531, 16
      %v3534 = vadd.s32 %v3531, 24
      %v3535 = vadd.s32 %v3531, 32
      %v3536 = vadd.s32 %v3531, 40
      %v3537 = vadd.s32 %v3531, 48
      %v3538 = vadd.s32 %v3531, 56
      %v3539 = vadd.s32 %v3531, 64
      %v3540 = vadd.s32 %v3531, 72
      %v3541 = vadd.s32 %v3531, 80
      %v3542 = vadd.s32 %v3531, 88
      %v3543 = vadd.s32 %v3531, 96
      %v3544 = vadd.s32 %v3531, 104
      %v3545 = vadd.s32 %v3531, 112
      %v3546 = vadd.s32 %v3531, 120
      %v3547 = vstv %s312
      %v3548 = vadd.s32 %v3547, %v3531
      %v3549 = vadd.s32 %v3547, %v3532
      %v3550 = vadd.s32 %v3547, %v3533
      %v3551 = vadd.s32 %v3547, %v3534
      %v3552 = vadd.s32 %v3547, %v3535
      %v3553 = vadd.s32 %v3547, %v3536
      %v3554 = vadd.s32 %v3547, %v3537
      %v3555 = vadd.s32 %v3547, %v3538
      %v3556 = vadd.s32 %v3547, %v3539
      %v3557 = vadd.s32 %v3547, %v3540
      %v3558 = vadd.s32 %v3547, %v3541
      %v3559 = vadd.s32 %v3547, %v3542
      %v3560 = vadd.s32 %v3547, %v3543
      %v3561 = vadd.s32 %v3547, %v3544
      %v3562 = vadd.s32 %v3547, %v3545
      %v3563 = vadd.s32 %v3547, %v3546
      %vm3564 = vcmp.lt.s32.totalorder %v3548, 128
      %vm3565 = vcmp.lt.s32.totalorder %v3549, 128
      %vm3566 = vcmp.lt.s32.totalorder %v3550, 128
      %vm3567 = vcmp.lt.s32.totalorder %v3551, 128
      %vm3568 = vcmp.lt.s32.totalorder %v3552, 128
      %vm3569 = vcmp.lt.s32.totalorder %v3553, 128
      %vm3570 = vcmp.lt.s32.totalorder %v3554, 128
      %vm3571 = vcmp.lt.s32.totalorder %v3555, 128
      %vm3572 = vcmp.lt.s32.totalorder %v3556, 128
      %vm3573 = vcmp.lt.s32.totalorder %v3557, 128
      %vm3574 = vcmp.lt.s32.totalorder %v3558, 128
      %vm3575 = vcmp.lt.s32.totalorder %v3559, 128
      %vm3576 = vcmp.lt.s32.totalorder %v3560, 128
      %vm3577 = vcmp.lt.s32.totalorder %v3561, 128
      %vm3578 = vcmp.lt.s32.totalorder %v3562, 128
      %vm3579 = vcmp.lt.s32.totalorder %v3563, 128
      %v3580 = vsel %vm3564, 1, 0
      %v3581 = vsel %vm3565, 1, 0
      %v3582 = vsel %vm3566, 1, 0
      %v3583 = vsel %vm3567, 1, 0
      %v3584 = vsel %vm3568, 1, 0
      %v3585 = vsel %vm3569, 1, 0
      %v3586 = vsel %vm3570, 1, 0
      %v3587 = vsel %vm3571, 1, 0
      %v3588 = vsel %vm3572, 1, 0
      %v3589 = vsel %vm3573, 1, 0
      %v3590 = vsel %vm3574, 1, 0
      %v3591 = vsel %vm3575, 1, 0
      %v3592 = vsel %vm3576, 1, 0
      %v3593 = vsel %vm3577, 1, 0
      %v3594 = vsel %vm3578, 1, 0
      %v3595 = vsel %vm3579, 1, 0
      %vm3596 = vcmp.eq.s32.totalorder %v3580, 1
      %vm3597 = vcmp.eq.s32.totalorder %v3581, 1
      %vm3598 = vcmp.eq.s32.totalorder %v3582, 1
      %vm3599 = vcmp.eq.s32.totalorder %v3583, 1
      %vm3600 = vcmp.eq.s32.totalorder %v3584, 1
      %vm3601 = vcmp.eq.s32.totalorder %v3585, 1
      %vm3602 = vcmp.eq.s32.totalorder %v3586, 1
      %vm3603 = vcmp.eq.s32.totalorder %v3587, 1
      %vm3604 = vcmp.eq.s32.totalorder %v3588, 1
      %vm3605 = vcmp.eq.s32.totalorder %v3589, 1
      %vm3606 = vcmp.eq.s32.totalorder %v3590, 1
      %vm3607 = vcmp.eq.s32.totalorder %v3591, 1
      %vm3608 = vcmp.eq.s32.totalorder %v3592, 1
      %vm3609 = vcmp.eq.s32.totalorder %v3593, 1
      %vm3610 = vcmp.eq.s32.totalorder %v3594, 1
      %vm3611 = vcmp.eq.s32.totalorder %v3595, 1
      %v3612 = vsel %vm3596, %v3514, 0.0
      %v3613 = vsel %vm3597, %v3515, 0.0
      %v3614 = vsel %vm3598, %v3516, 0.0
      %v3615 = vsel %vm3599, %v3517, 0.0
      %v3616 = vsel %vm3600, %v3518, 0.0
      %v3617 = vsel %vm3601, %v3519, 0.0
      %v3618 = vsel %vm3602, %v3520, 0.0
      %v3619 = vsel %vm3603, %v3521, 0.0
      %v3620 = vsel %vm3604, %v3522, 0.0
      %v3621 = vsel %vm3605, %v3523, 0.0
      %v3622 = vsel %vm3606, %v3524, 0.0
      %v3623 = vsel %vm3607, %v3525, 0.0
      %v3624 = vsel %vm3608, %v3526, 0.0
      %v3625 = vsel %vm3609, %v3527, 0.0
      %v3626 = vsel %vm3610, %v3528, 0.0
      %v3627 = vsel %vm3611, %v3529, 0.0
      %3628 = vst [vmem:[%s300] sm:$0xff] %v3612
      %3629 = vst [vmem:[%s300 + $0x8] sm:$0xff] %v3613
      %3630 = vst [vmem:[%s300 + $0x10] sm:$0xff] %v3614
      %3631 = vst [vmem:[%s300 + $0x18] sm:$0xff] %v3615
      %3632 = vst [vmem:[%s300 + $0x20] sm:$0xff] %v3616
      %3633 = vst [vmem:[%s300 + $0x28] sm:$0xff] %v3617
      %3634 = vst [vmem:[%s300 + $0x30] sm:$0xff] %v3618
      %3635 = vst [vmem:[%s300 + $0x38] sm:$0xff] %v3619
      %3636 = vst [vmem:[%s300 + $0x40] sm:$0xff] %v3620
      %3637 = vst [vmem:[%s300 + $0x48] sm:$0xff] %v3621
      %3638 = vst [vmem:[%s300 + $0x50] sm:$0xff] %v3622
      %3639 = vst [vmem:[%s300 + $0x58] sm:$0xff] %v3623
      %3640 = vst [vmem:[%s300 + $0x60] sm:$0xff] %v3624
      %3641 = vst [vmem:[%s300 + $0x68] sm:$0xff] %v3625
      %3642 = vst [vmem:[%s300 + $0x70] sm:$0xff] %v3626
      %3643 = vst [vmem:[%s300 + $0x78] sm:$0xff] %v3627
      %v3644 = vld [vmem:[%s305] sm:$0x3]
      %v3645 = vadd.f32 %v3612, %v3613
      %v3646 = vadd.f32 %v3645, %v3614
      %v3647 = vadd.f32 %v3646, %v3615
      %v3648 = vadd.f32 %v3647, %v3616
      %v3649 = vadd.f32 %v3648, %v3617
      %v3650 = vadd.f32 %v3649, %v3618
      %v3651 = vadd.f32 %v3650, %v3619
      %v3652 = vadd.f32 %v3651, %v3620
      %v3653 = vadd.f32 %v3652, %v3621
      %v3654 = vadd.f32 %v3653, %v3622
      %v3655 = vadd.f32 %v3654, %v3623
      %v3656 = vadd.f32 %v3655, %v3624
      %v3657 = vadd.f32 %v3656, %v3625
      %v3658 = vadd.f32 %v3657, %v3626
      %v3659 = vadd.f32 %v3658, %v3627
      %v3660 = vrot.slane %v3659, 4
      %v3661 = vadd.f32 %v3659, %v3660
      %v3662 = vrot.slane %v3661, 2
      %v3663 = vadd.f32 %v3661, %v3662
      %v3664 = vrot.slane %v3663, 1
      %v3665 = vadd.f32 %v3663, %v3664
      %v3666 = vmul.f32 %v3612, %v3612
      %v3667 = vmul.f32 %v3613, %v3613
      %v3668 = vmul.f32 %v3614, %v3614
      %v3669 = vmul.f32 %v3615, %v3615
      %v3670 = vmul.f32 %v3616, %v3616
      %v3671 = vmul.f32 %v3617, %v3617
      %v3672 = vmul.f32 %v3618, %v3618
      %v3673 = vmul.f32 %v3619, %v3619
      %v3674 = vmul.f32 %v3620, %v3620
      %v3675 = vmul.f32 %v3621, %v3621
      %v3676 = vmul.f32 %v3622, %v3622
      %v3677 = vmul.f32 %v3623, %v3623
      %v3678 = vmul.f32 %v3624, %v3624
      %v3679 = vmul.f32 %v3625, %v3625
      %v3680 = vmul.f32 %v3626, %v3626
      %v3681 = vmul.f32 %v3627, %v3627
      %v3682 = vadd.f32 %v3666, %v3667
      %v3683 = vadd.f32 %v3682, %v3668
      %v3684 = vadd.f32 %v3683, %v3669
      %v3685 = vadd.f32 %v3684, %v3670
      %v3686 = vadd.f32 %v3685, %v3671
      %v3687 = vadd.f32 %v3686, %v3672
      %v3688 = vadd.f32 %v3687, %v3673
      %v3689 = vadd.f32 %v3688, %v3674
      %v3690 = vadd.f32 %v3689, %v3675
      %v3691 = vadd.f32 %v3690, %v3676
      %v3692 = vadd.f32 %v3691, %v3677
      %v3693 = vadd.f32 %v3692, %v3678
      %v3694 = vadd.f32 %v3693, %v3679
      %v3695 = vadd.f32 %v3694, %v3680
      %v3696 = vadd.f32 %v3695, %v3681
      %v3697 = vrot.slane %v3696, 4
      %v3698 = vadd.f32 %v3696, %v3697
      %v3699 = vrot.slane %v3698, 2
      %v3700 = vadd.f32 %v3698, %v3699
      %v3701 = vrot.slane %v3700, 1
      %v3702 = vadd.f32 %v3700, %v3701
      %v3703 = vsel %vm1449, %v3665, %v3702
      %v3704 = vadd.f32 %v3644, %v3703
      %3705 = vst [vmem:[%s305] sm:$0x3] %v3704
      %s3706 = smul.u32 16, %s23
      %p3707 = scmp.lt.s32.totalorder %s22, 1
      %s3708 = scalar_select %p3707, %s22, 1
      %p3709 = scmp.lt.s32.totalorder %s3706, 15
      %s3710 = scalar_select %p3709, %s3706, 15
      %s3711 = smul.addr %s3708, 16
      %s3712 = sadd.s32 %s3710, %s3711
      %s3713 = smul.addr %s3712, 8
      %s3714 = scalar_lea.vmem %s5, %s3713
      %p3715 = scmp.lt.s32.totalorder %s22, 1
      %s3716 = scalar_select %p3715, %s22, 1
      %s3717 = smul.addr %s3716, 2
      %s3718 = scalar_lea.vmem %s6, %s3717
      // Predicated region
      $region45: #{inception_forward.2} parent=39 // pred_check
        %p3719 = pneg %p165
      $region46: #{inception_forward.2} parent=39 // pred_check_branch
        %3721 = sbr.rel (%p3719) target = $region48
      $region47: #{inception_forward.2} parent=39 // pred_region
        %s3722 = smul.u32 16, %s23
      $region48: #{inception_forward.2} parent=39 // pred_fallthru
        _
      // Predicated region
      $region49: #{inception_forward.2} parent=39 // pred_check
        %p3723 = pneg %p191
      $region50: #{inception_forward.2} parent=39 // pred_check_branch
        %3725 = sbr.rel (%p3723) target = $region52
      $region51: #{inception_forward.2} parent=39 // pred_region
        _
      $region52: #{inception_forward.2} parent=39 // pred_fallthru
        _
    $region40: #{inception_forward.2} parent=5 // pred_fallthru
      _
    %p3726 = scmp.le.s32.totalorder 2, %s13
    // Predicated region
    $region53: #{inception_forward.2} parent=5 // pred_check
      %p3727 = pneg %p3726
    $region54: #{inception_forward.2} parent=5 // pred_check_branch
      %3729 = sbr.rel (%p3727) target = $region56
    $region55: #{inception_forward.2} parent=5 // pred_region
      %s3730 = ssub.s32 %s13, 2
      // Predicated region
      $region57: #{inception_forward.2} parent=55 // pred_check
        %p3731 = pneg %p171
      $region58: #{inception_forward.2} parent=55 // pred_check_branch
        %3733 = sbr.rel (%p3731) target = $region60
      $region59: #{inception_forward.2} parent=55 // pred_region
        %s3734 = smul.u32 16, %s25
        %p3735 = scmp.lt.s32.totalorder %s24, 1
        %s3736 = scalar_select %p3735, %s24, 1
        %p3737 = scmp.lt.s32.totalorder %s3734, 15
        %s3738 = scalar_select %p3737, %s3734, 15
        %s3739 = smul.addr %s3736, 16
        %s3740 = sadd.s32 %s3738, %s3739
        %s3741 = smul.addr %s3740, 8
        %s3742 = scalar_lea.vmem %s5, %s3741
      $region60: #{inception_forward.2} parent=55 // pred_fallthru
        _
      // Predicated region
      $region61: #{inception_forward.2} parent=55 // pred_check
        %p3743 = pneg %p197
      $region62: #{inception_forward.2} parent=55 // pred_check_branch
        %3745 = sbr.rel (%p3743) target = $region64
      $region63: #{inception_forward.2} parent=55 // pred_region
        %p3746 = scmp.lt.s32.totalorder %s24, 1
        %s3747 = scalar_select %p3746, %s24, 1
        %s3748 = smul.addr %s3747, 2
        %s3749 = scalar_lea.vmem %s6, %s3748
      $region64: #{inception_forward.2} parent=55 // pred_fallthru
        _
    $region56: #{inception_forward.2} parent=5 // pred_fallthru
      _
  $region6: #{inception_forward.2} parent=0 // loop_footer
    %s17 = sadd.s32 1, %s13
  $region7: #{inception_forward.2} parent=0 // loop_footer_branch
    %12 = sbr.rel target = $region3
  $region8: #{inception_forward.2} parent=0 // loop_exit
    _

// kernel: inception_forward.3
$region0: #{inception_forward.3}
  #allocation0 [shape = 'u32[]', space=smem, size = 0x4, offset = 0x4, fixed_abs, tag = 'smem constant byte address 0x4 - core index']
  #allocation1 [shape = 'u32[144,128]{1,0:T(1,128)}', space=vmem, size = 0x12000, scoped, tag = 'internal scratch']
  %s0 = inlined_call_operand.vmem [shape: f32[2,128,128], index: 0, kind: input, shape index: {}]
  %s1 = inlined_call_operand.vmem [shape: f32[1,128], index: 1, kind: input, shape index: {}]
  %s2 = inlined_call_operand.vmem [shape: f32[1,128], index: 2, kind: input, shape index: {}]
  %s3 = inlined_call_operand.hbm [shape: f32[2,128,128], index: 3, kind: output, shape index: {}]
  %s4 = sld [smem:[#allocation0]]
  $region45: #{inception_forward.3} parent=0
    _
  %s6 = ssub.s32 1, %s4
  %s7 = scalar_select 0, %s6, %s4
  $region1: #{inception_forward.3} parent=0
    #allocation2 [shape = 'u8[131072]{0}', space=vmem, size = 0x20000, scoped, tag = 'output window, operand 0']
    #allocation3 [shape = 's32[2]{0}', space=sflag, size = 0x8, scoped, tag = 'scoped memory for inception_forward.3']
    %8 = vsyncpa [#allocation3], 0
    %s9 = scalar_lea.sflag [#allocation3], 1
    %10 = vsyncpa %s9, 0
    loop: start=0, step=1, limit=4
    $region2: #{inception_forward.3} parent=1 // loop_pre_header
      _
    $region3: #{inception_forward.3} parent=1 // loop_header
      %s12 = sphi 0, %s16
      %p13 = scmp.ge.s32.totalorder %s12, 4
      %s19 = sphi 0, %s31
      %s20 = sphi 0, %s27
      %s21 = sphi 0, %s19
      %s22 = sphi 0, %s20
      %s23 = sphi 0, %s21
      %s24 = sphi 0, %s22
      %s36 = sphi 0, %s38
      %s39 = sphi 0, %s36
      %s40 = sphi 0, %s39
      %s56 = sphi 0, %s40
      %s60 = sphi 0, %s60
      %s62 = sphi 0, %s60
      %s63 = sphi 0, %s62
      %s77 = sphi 0, %s63
      %s81 = sphi 0, %s81
      %s83 = sphi 0, %s81
      %s84 = sphi 0, %s83
      %s98 = sphi 0, %s84
      %s106 = sphi 0, %s108
      %s109 = sphi 0, %s106
      %s110 = sphi 0, %s109
      %s126 = sphi 0, %s110
    $region4: #{inception_forward.3} parent=1 // loop_header_branch
      %15 = sbr.rel (%p13) target = $region8
    $region5: #{inception_forward.3} parent=1 // loop_body
      %s17 = ssub.s32 %s12, 1
      %s18 = ssub.s32 %s12, 2
      %s25 = sadd.s32 1, %s20
      %p26 = scmp.ge.s32.totalorder %s25, 1
      %s27 = scalar_select %p26, 0, %s25
      %s28 = sadd.s32 1, %s19
      %s29 = scalar_select %p26, %s28, %s19
      %p30 = scmp.ge.s32.totalorder %s29, 2
      %s31 = scalar_select %p30, 0, %s29
      %s32 = ssub.s32 %s19, %s31
      %s33 = ssub.s32 %s20, %s27
      %s34 = sor.u32 %s32, %s33
      %p35 = scmp.eq.s32.totalorder %s34, 0
      %s37 = sadd.s32 %s36, 1
      %s38 = scalar_select %p35, %s36, %s37
      %p41 = pneg %p35
      %p42 = scmp.eq.s32.totalorder %s12, 1
      %p43 = por %p41, %p42
      %p44 = scmp.ne.s32.totalorder %s36, %s39
      %p45 = scmp.eq.s32.totalorder %s12, 0
      %p46 = por %p44, %p45
      %p47 = scmp.ne.s32.totalorder %s36, %s39
      %p48 = scmp.eq.s32.totalorder %s17, 1
      %p49 = por %p47, %p48
      %p50 = scmp.ne.s32.totalorder %s39, %s40
      %p51 = scmp.eq.s32.totalorder %s17, 0
      %p52 = por %p50, %p51
      %p53 = scmp.ne.s32.totalorder %s39, %s40
      %p54 = scmp.eq.s32.totalorder %s18, 1
      %p55 = por %p53, %p54
      %p57 = scmp.ne.s32.totalorder %s40, %s56
      %p58 = scmp.eq.s32.totalorder %s18, 0
      %p59 = por %p57, %p58
      %s61 = sadd.s32 %s60, 1
      %p64 = scmp.eq.s32.totalorder %s12, 1
      %p65 = scmp.ne.s32.totalorder %s60, %s62
      %p66 = scmp.eq.s32.totalorder %s12, 0
      %p67 = por %p65, %p66
      %p68 = scmp.ne.s32.totalorder %s60, %s62
      %p69 = scmp.eq.s32.totalorder %s17, 1
      %p70 = por %p68, %p69
      %p71 = scmp.ne.s32.totalorder %s62, %s63
      %p72 = scmp.eq.s32.totalorder %s17, 0
      %p73 = por %p71, %p72
      %p74 = scmp.ne.s32.totalorder %s62, %s63
      %p75 = scmp.eq.s32.totalorder %s18, 1
      %p76 = por %p74, %p75
      %p78 = scmp.ne.s32.totalorder %s63, %s77
      %p79 = scmp.eq.s32.totalorder %s18, 0
      %p80 = por %p78, %p79
      %s82 = sadd.s32 %s81, 1
      %p85 = scmp.eq.s32.totalorder %s12, 1
      %p86 = scmp.ne.s32.totalorder %s81, %s83
      %p87 = scmp.eq.s32.totalorder %s12, 0
      %p88 = por %p86, %p87
      %p89 = scmp.ne.s32.totalorder %s81, %s83
      %p90 = scmp.eq.s32.totalorder %s17, 1
      %p91 = por %p89, %p90
      %p92 = scmp.ne.s32.totalorder %s83, %s84
      %p93 = scmp.eq.s32.totalorder %s17, 0
      %p94 = por %p92, %p93
      %p95 = scmp.ne.s32.totalorder %s83, %s84
      %p96 = scmp.eq.s32.totalorder %s18, 1
      %p97 = por %p95, %p96
      %p99 = scmp.ne.s32.totalorder %s84, %s98
      %p100 = scmp.eq.s32.totalorder %s18, 0
      %p101 = por %p99, %p100
      %s102 = ssub.s32 %s19, %s31
      %s103 = ssub.s32 %s20, %s27
      %s104 = sor.u32 %s102, %s103
      %p105 = scmp.eq.s32.totalorder %s104, 0
      %s107 = sadd.s32 %s106, 1
      %s108 = scalar_select %p105, %s106, %s107
      %p111 = pneg %p105
      %p112 = scmp.eq.s32.totalorder %s12, 1
      %p113 = por %p111, %p112
      %p114 = scmp.ne.s32.totalorder %s106, %s109
      %p115 = scmp.eq.s32.totalorder %s12, 0
      %p116 = por %p114, %p115
      %p117 = scmp.ne.s32.totalorder %s106, %s109
      %p118 = scmp.eq.s32.totalorder %s17, 1
      %p119 = por %p117, %p118
      %p120 = scmp.ne.s32.totalorder %s109, %s110
      %p121 = scmp.eq.s32.totalorder %s17, 0
      %p122 = por %p120, %p121
      %p123 = scmp.ne.s32.totalorder %s109, %s110
      %p124 = scmp.eq.s32.totalorder %s18, 1
      %p125 = por %p123, %p124
      %p127 = scmp.ne.s32.totalorder %s110, %s126
      %p128 = scmp.eq.s32.totalorder %s18, 0
      %p129 = por %p127, %p128
      %p130 = scmp.le.s32.totalorder 1, %s12
      %p131 = scmp.lt.s32.totalorder %s12, 3
      %p132 = pnand %p130, %p131
      %p133 = pneg %p132
      // Predicated region
      $region9: #{inception_forward.3} parent=5 // pred_check
        _
      $region10: #{inception_forward.3} parent=5 // pred_check_branch
        %135 = sbr.rel (%p132) target = $region12
      $region11: #{inception_forward.3} parent=5 // pred_region
        %s136 = ssub.s32 %s12, 1
        // Predicated region
        $region13: #{inception_forward.3} parent=11 // pred_check
          %p137 = pneg %p73
        $region14: #{inception_forward.3} parent=11 // pred_check_branch
          %139 = sbr.rel (%p137) target = $region16
        $region15: #{inception_forward.3} parent=11 // pred_region
          _
        $region16: #{inception_forward.3} parent=11 // pred_fallthru
          _
        // Predicated region
        $region17: #{inception_forward.3} parent=11 // pred_check
          %p140 = pneg %p94
        $region18: #{inception_forward.3} parent=11 // pred_check_branch
          %142 = sbr.rel (%p140) target = $region20
        $region19: #{inception_forward.3} parent=11 // pred_region
          _
        $region20: #{inception_forward.3} parent=11 // pred_fallthru
          _
      $region12: #{inception_forward.3} parent=5 // pred_fallthru
        _
      %p143 = scmp.lt.s32.totalorder %s12, 2
      // Predicated region
      $region21: #{inception_forward.3} parent=5 // pred_check
        %p144 = pneg %p143
      $region22: #{inception_forward.3} parent=5 // pred_check_branch
        %146 = sbr.rel (%p144) target = $region24
      $region23: #{inception_forward.3} parent=5 // pred_region
        // Predicated region
        $region25: #{inception_forward.3} parent=23 // pred_check
          %p147 = pneg %p46
        $region26: #{inception_forward.3} parent=23 // pred_check_branch
          %149 = sbr.rel (%p147) target = $region28
        $region27: #{inception_forward.3} parent=23 // pred_region
          %s150 = smul.u32 16, %s20
          %p151 = scmp.lt.s32.totalorder %s19, 1
          %s152 = scalar_select %p151, %s19, 1
          %p153 = scmp.lt.s32.totalorder %s150, 15
          %s154 = scalar_select %p153, %s150, 15
          %s155 = smul.addr %s152, 16
          %s156 = sadd.s32 %s154, %s155
          %s157 = smul.addr %s156, 8
          %s158 = scalar_lea.vmem %s0, %s157
          %s159 = smul.u32 16, %s20
        $region28: #{inception_forward.3} parent=23 // pred_fallthru
          _
      $region24: #{inception_forward.3} parent=5 // pred_fallthru
        _
      %p160 = scmp.le.s32.totalorder 1, %s12
      %p161 = scmp.lt.s32.totalorder %s12, 3
      %p162 = pnand %p160, %p161
      %p163 = pneg %p162
      // Predicated region
      $region29: #{inception_forward.3} parent=5 // pred_check
        _
      $region30: #{inception_forward.3} parent=5 // pred_check_branch
        %165 = sbr.rel (%p162) target = $region32
      $region31: #{inception_forward.3} parent=5 // pred_region
        %s166 = ssub.s32 %s12, 1
        %s167 = smul.u32 16, %s22
        %p168 = scmp.lt.s32.totalorder %s21, 1
        %s169 = scalar_select %p168, %s21, 1
        %p170 = scmp.lt.s32.totalorder %s167, 15
        %s171 = scalar_select %p170, %s167, 15
        %s172 = smul.addr %s169, 16
        %s173 = sadd.s32 %s171, %s172
        %s174 = smul.addr %s173, 8
        %s175 = scalar_lea.vmem %s0, %s174
        %p176 = pneg %p52
        %p177 = pneg %p49
        %p178 = pneg %p73
        %p179 = pneg %p70
        %p180 = pneg %p94
        %p181 = pneg %p91
        %p182 = pneg %p122
        %p183 = pneg %p119
        %s184 = sand.u32 %s109, 1
        %s185 = scalar_lea.sflag [#allocation3], %s184
        %s186 = sand.u32 %s109, 1
        %s187 = smul.addr %s186, 128
        %s188 = scalar_lea.vmem [#allocation2], %s187
        %s189 = smul.u32 16, %s22
        %p190 = scmp.lt.s32.totalorder %s21, 1
        %s191 = scalar_select %p190, %s21, 1
        %p192 = scmp.lt.s32.totalorder %s189, 15
        %s193 = scalar_select %p192, %s189, 15
        %s194 = smul.addr %s191, 16
        %s195 = sadd.s32 %s193, %s194
        %s196 = smul.addr %s195, 8
        %s197 = scalar_lea.vmem %s0, %s196
        %s198 = smul.u32 16, %s22
        %v199 = vld [vmem:[%s197] sm:$0xff]
        %v200 = vld [vmem:[%s197 + $0x8] sm:$0xff]
        %v201 = vld [vmem:[%s197 + $0x10] sm:$0xff]
        %v202 = vld [vmem:[%s197 + $0x18] sm:$0xff]
        %v203 = vld [vmem:[%s197 + $0x20] sm:$0xff]
        %v204 = vld [vmem:[%s197 + $0x28] sm:$0xff]
        %v205 = vld [vmem:[%s197 + $0x30] sm:$0xff]
        %v206 = vld [vmem:[%s197 + $0x38] sm:$0xff]
        %v207 = vld [vmem:[%s197 + $0x40] sm:$0xff]
        %v208 = vld [vmem:[%s197 + $0x48] sm:$0xff]
        %v209 = vld [vmem:[%s197 + $0x50] sm:$0xff]
        %v210 = vld [vmem:[%s197 + $0x58] sm:$0xff]
        %v211 = vld [vmem:[%s197 + $0x60] sm:$0xff]
        %v212 = vld [vmem:[%s197 + $0x68] sm:$0xff]
        %v213 = vld [vmem:[%s197 + $0x70] sm:$0xff]
        %v214 = vld [vmem:[%s197 + $0x78] sm:$0xff]
        %v215 = vld [vmem:[%s1] sm:$0x1]
        %v217 = vlaneseq
        %v218 = vshrl.u32 %v217, 7
        %v219 = vsub.s32 0, %v218
        %v220 = vrot.slane %v215, %v219
        %v222 = vmul.f32 %v199, %v220
        %v223 = vmul.f32 %v200, %v220
        %v224 = vmul.f32 %v201, %v220
        %v225 = vmul.f32 %v202, %v220
        %v226 = vmul.f32 %v203, %v220
        %v227 = vmul.f32 %v204, %v220
        %v228 = vmul.f32 %v205, %v220
        %v229 = vmul.f32 %v206, %v220
        %v230 = vmul.f32 %v207, %v220
        %v231 = vmul.f32 %v208, %v220
        %v232 = vmul.f32 %v209, %v220
        %v233 = vmul.f32 %v210, %v220
        %v234 = vmul.f32 %v211, %v220
        %v235 = vmul.f32 %v212, %v220
        %v236 = vmul.f32 %v213, %v220
        %v237 = vmul.f32 %v214, %v220
        %v238 = vld [vmem:[%s2] sm:$0x1]
        %v240 = vlaneseq
        %v241 = vshrl.u32 %v240, 7
        %v242 = vsub.s32 0, %v241
        %v243 = vrot.slane %v238, %v242
        %v245 = vadd.f32 %v222, %v243
        %v246 = vadd.f32 %v223, %v243
        %v247 = vadd.f32 %v224, %v243
        %v248 = vadd.f32 %v225, %v243
        %v249 = vadd.f32 %v226, %v243
        %v250 = vadd.f32 %v227, %v243
        %v251 = vadd.f32 %v228, %v243
        %v252 = vadd.f32 %v229, %v243
        %v253 = vadd.f32 %v230, %v243
        %v254 = vadd.f32 %v231, %v243
        %v255 = vadd.f32 %v232, %v243
        %v256 = vadd.f32 %v233, %v243
        %v257 = vadd.f32 %v234, %v243
        %v258 = vadd.f32 %v235, %v243
        %v259 = vadd.f32 %v236, %v243
        %v260 = vadd.f32 %v237, %v243
        %v261 = vmax.f32 %v245, 0.0
        %v262 = vmax.f32 %v246, 0.0
        %v263 = vmax.f32 %v247, 0.0
        %v264 = vmax.f32 %v248, 0.0
        %v265 = vmax.f32 %v249, 0.0
        %v266 = vmax.f32 %v250, 0.0
        %v267 = vmax.f32 %v251, 0.0
        %v268 = vmax.f32 %v252, 0.0
        %v269 = vmax.f32 %v253, 0.0
        %v270 = vmax.f32 %v254, 0.0
        %v271 = vmax.f32 %v255, 0.0
        %v272 = vmax.f32 %v256, 0.0
        %v273 = vmax.f32 %v257, 0.0
        %v274 = vmax.f32 %v258, 0.0
        %v275 = vmax.f32 %v259, 0.0
        %v276 = vmax.f32 %v260, 0.0
        %277 = vxpose.xlu0.b32.start [1/16] %v261, 128
        %278 = vxpose.xlu0.b32.cont [2/16] %v262, 128
        %279 = vxpose.xlu0.b32.cont [3/16] %v263, 128
        %280 = vxpose.xlu0.b32.cont [4/16] %v264, 128
        %281 = vxpose.xlu0.b32.cont [5/16] %v265, 128
        %282 = vxpose.xlu0.b32.cont [6/16] %v266, 128
        %283 = vxpose.xlu0.b32.cont [7/16] %v267, 128
        %284 = vxpose.xlu0.b32.cont [8/16] %v268, 128
        %285 = vxpose.xlu0.b32.cont [9/16] %v269, 128
        %286 = vxpose.xlu0.b32.cont [10/16] %v270, 128
        %287 = vxpose.xlu0.b32.cont [11/16] %v271, 128
        %288 = vxpose.xlu0.b32.cont [12/16] %v272, 128
        %289 = vxpose.xlu0.b32.cont [13/16] %v273, 128
        %290 = vxpose.xlu0.b32.cont [14/16] %v274, 128
        %291 = vxpose.xlu0.b32.cont [15/16] %v275, 128
        %292 = vxpose.xlu0.b32.end [16/16] %v276, 128
        %v293 = vpop.trf.xlu0
        %v294 = vpop.trf.xlu0
        %v295 = vpop.trf.xlu0
        %v296 = vpop.trf.xlu0
        %v297 = vpop.trf.xlu0
        %v298 = vpop.trf.xlu0
        %v299 = vpop.trf.xlu0
        %v300 = vpop.trf.xlu0
        %v301 = vpop.trf.xlu0
        %v302 = vpop.trf.xlu0
        %v303 = vpop.trf.xlu0
        %v304 = vpop.trf.xlu0
        %v305 = vpop.trf.xlu0
        %v306 = vpop.trf.xlu0
        %v307 = vpop.trf.xlu0
        %v308 = vpop.trf.xlu0
        %309 = vst [vmem:[%s188] sm:$0xff] %v293
        %310 = vst [vmem:[%s188 + $0x8] sm:$0xff] %v294
        %311 = vst [vmem:[%s188 + $0x10] sm:$0xff] %v295
        %312 = vst [vmem:[%s188 + $0x18] sm:$0xff] %v296
        %313 = vst [vmem:[%s188 + $0x20] sm:$0xff] %v297
        %314 = vst [vmem:[%s188 + $0x28] sm:$0xff] %v298
        %315 = vst [vmem:[%s188 + $0x30] sm:$0xff] %v299
        %316 = vst [vmem:[%s188 + $0x38] sm:$0xff] %v300
        %317 = vst [vmem:[%s188 + $0x40] sm:$0xff] %v301
        %318 = vst [vmem:[%s188 + $0x48] sm:$0xff] %v302
        %319 = vst [vmem:[%s188 + $0x50] sm:$0xff] %v303
        %320 = vst [vmem:[%s188 + $0x58] sm:$0xff] %v304
        %321 = vst [vmem:[%s188 + $0x60] sm:$0xff] %v305
        %322 = vst [vmem:[%s188 + $0x68] sm:$0xff] %v306
        %323 = vst [vmem:[%s188 + $0x70] sm:$0xff] %v307
        %324 = vst [vmem:[%s188 + $0x78] sm:$0xff] %v308
        %s325 = sand.u32 %s109, 1
        %s326 = scalar_lea.sflag [#allocation3], %s325
        %s327 = sand.u32 %s109, 1
        %s328 = smul.addr %s327, 128
        %s329 = scalar_lea.vmem [#allocation2], %s328
        // Predicated region
        $region33: #{inception_forward.3} parent=31 // pred_check
          %p330 = pneg %p119
        $region34: #{inception_forward.3} parent=31 // pred_check_branch
          %332 = sbr.rel (%p330) target = $region36
        $region35: #{inception_forward.3} parent=31 // pred_region
          %s334 = ssub.s32 2048, 2048
          %335 = vsyncadd %s326, %s334
          %s336 = smul.addr %s21, 16
          %s337 = sadd.s32 %s22, %s336
          %s338 = smul.addr %s337, 128
          %s339 = scalar_lea.hbm %s3, %s338
          %s340 = sshll.u32 %s329, 4
          %s341 = int_to_ptr.vmem [resolvable:$true] %s340
          %346 = dma.vmem_to_hbm [thread:$0]  %s341, 2048, %s339, %s326, 128, 128, 8
        $region36: #{inception_forward.3} parent=31 // pred_fallthru
          _
      $region32: #{inception_forward.3} parent=5 // pred_fallthru
        _
      %p347 = scmp.le.s32.totalorder 2, %s12
      // Predicated region
      $region37: #{inception_forward.3} parent=5 // pred_check
        %p348 = pneg %p347
      $region38: #{inception_forward.3} parent=5 // pred_check_branch
        %350 = sbr.rel (%p348) target = $region40
      $region39: #{inception_forward.3} parent=5 // pred_region
        %s351 = ssub.s32 %s12, 2
        // Predicated region
        $region41: #{inception_forward.3} parent=39 // pred_check
          %p352 = pneg %p125
        $region42: #{inception_forward.3} parent=39 // pred_check_branch
          %354 = sbr.rel (%p352) target = $region44
        $region43: #{inception_forward.3} parent=39 // pred_region
          %s355 = sand.u32 %s110, 1
          %s356 = scalar_lea.sflag [#allocation3], %s355
          %s357 = sand.u32 %s110, 1
          %s358 = smul.addr %s357, 128
          %s359 = scalar_lea.vmem [#allocation2], %s358
          %360 = dma.done %s356, 2048
        $region44: #{inception_forward.3} parent=39 // pred_fallthru
          _
      $region40: #{inception_forward.3} parent=5 // pred_fallthru
        _
    $region6: #{inception_forward.3} parent=1 // loop_footer
      %s16 = sadd.s32 1, %s12
    $region7: #{inception_forward.3} parent=1 // loop_footer_branch
      %11 = sbr.rel target = $region3
    $region8: #{inception_forward.3} parent=1 // loop_exit
      _
    %361 = vsyncpa [#allocation3], 1
    %s362 = scalar_lea.sflag [#allocation3], 1
    %363 = vsyncpa %s362, 1

</llo_original>
